<compile_context>
chip_gen: v5e
topology: v5e:2x2
jax: 0.10.0
libtpu: 0.0.40
codegen_flags: <defaults>
</compile_context>

<pallas_src>
import math

import jax
import jax.numpy as jnp
from jax.experimental import pallas as pl
from jax.experimental.pallas import tpu as pltpu

L = 30
IN_DIM = 2 * 2 * L          # 120
PAD_DIM = 128               # 120 padded to a full lane width (K of layer 1)
FEATURES = 256


def _nerf_kernel(x_ref, w1_ref, b1_ref, w2_ref, b2_ref, w3_ref, b3_ref, o_ref):
    """Transposed MLP: x_ref is [128, TN], weights are PyTorch-layout (out,in),
    output o_ref is the lane-dense [1, TN] row."""
    cdt = w2_ref.dtype  # matmul compute dtype (bf16 by default)

    # Layer 1: [256, 128] @ [128, TN] -> f32 [256, TN]; fused bias + ReLU + cast.
    h = jnp.dot(w1_ref[...], x_ref[...], preferred_element_type=jnp.float32)
    h = jnp.maximum(h + b1_ref[...], 0.0).astype(cdt)

    # Layer 2: [256, 256] @ [256, TN] -> f32 [256, TN]; fused bias + ReLU + cast.
    h = jnp.dot(w2_ref[...], h, preferred_element_type=jnp.float32)
    h = jnp.maximum(h + b2_ref[...], 0.0).astype(cdt)

    # Layer 3: [1, 256] @ [256, TN] -> [1, TN]; bias + sigmoid directly on the
    # lane-dense row (no transpose, no [TN, 1] column tail).
    y = jnp.dot(w3_ref[...], h, preferred_element_type=jnp.float32)
    o_ref[...] = jax.nn.sigmoid(y + b3_ref[...])


def _round_up(x, m):
    return -(-x // m) * m


def _pick_tile_n(n, tile_n):
    """Lane-dim tile: multiple of 128, and small enough that the grid keeps
    >= 2 steps so both v7x TensorCores get work."""
    half = _round_up(max(1, -(-n // 2)), 128)   # ceil(n/2), lane-aligned
    return _round_up(max(128, min(tile_n, half)), 128)


def nerf_forward(x, params, *, tile_n=4096, compute_dtype=jnp.bfloat16):
    """x: [N, 120] float32 -> [N] float32 (matches NeRF.forward squeeze(-1)).

    params are PyTorch-layout: w1 (256,120), b1 (256,), w2 (256,256), b2 (256,),
    w3 (1,256), b3 (1,).
    """
    w1, b1, w2, b2, w3, b3 = params
    n, d = x.shape
    assert d == IN_DIM

    tile_n = _pick_tile_n(n, tile_n)
    num_tiles = pl.cdiv(n, tile_n)
    n_pad = num_tiles * tile_n
    itemsize = jnp.dtype(compute_dtype).itemsize

    # Transposed, feature-padded (120 -> 128), cast input: [128, n_pad].
    # (Single fused XLA transpose+pad+convert pass over x.)
    xT = jnp.zeros((PAD_DIM, n_pad), compute_dtype)
    xT = xT.at[:IN_DIM, :n].set(x.T.astype(compute_dtype))

    # Weights in kernel (PyTorch) layout; w1 padded along K to 128.  Biases f32
    # as columns so they broadcast along the batch/lane dim.
    w1p = jnp.zeros((FEATURES, PAD_DIM), compute_dtype)
    w1p = w1p.at[:, :IN_DIM].set(w1.astype(compute_dtype))
    w2c = w2.astype(compute_dtype)
    w3c = w3.astype(compute_dtype)                    # (1, 256)
    b1c = b1.reshape(FEATURES, 1).astype(jnp.float32)
    b2c = b2.reshape(FEATURES, 1).astype(jnp.float32)
    b3c = b3.reshape(1, 1).astype(jnp.float32)

    full = lambda shape: pl.BlockSpec(shape, lambda i: (0, 0))  # resident block

    # VMEM budget: x tile (double-buffered) + out row (double-buffered) +
    # weights (2 bufs) + generous f32/bf16 activation temps, floored at 32 MiB
    # (>= every chip's default scoped limit) and capped at 56 MiB (< v7x's
    # 64 MiB physical VMEM).
    weight_bytes = ((PAD_DIM * FEATURES + FEATURES * FEATURES + FEATURES) * itemsize
                    + (2 * FEATURES + 1) * 4)
    vmem_budget = (2 * PAD_DIM * tile_n * itemsize
                   + 2 * tile_n * 4
                   + 2 * weight_bytes
                   + 6 * FEATURES * tile_n * 4)
    vmem_limit = max(32 << 20, min(vmem_budget + (8 << 20), 56 << 20))

    # Advisory cost estimate for the XLA scheduler.
    flops = 2 * n_pad * (PAD_DIM * FEATURES + FEATURES * FEATURES + FEATURES)
    bytes_accessed = n_pad * (PAD_DIM * itemsize + 4) + weight_bytes
    cost = pl.CostEstimate(flops=flops, transcendentals=n_pad,
                           bytes_accessed=bytes_accessed)

    out = pl.pallas_call(
        _nerf_kernel,
        out_shape=jax.ShapeDtypeStruct((1, n_pad), jnp.float32),
        grid_spec=pltpu.PrefetchScalarGridSpec(
            num_scalar_prefetch=0,
            grid=(num_tiles,),
            in_specs=[
                pl.BlockSpec((PAD_DIM, tile_n), lambda i: (0, i)),  # xT tile
                full((FEATURES, PAD_DIM)),   # w1  (256, 128)
                full((FEATURES, 1)),         # b1  (256, 1)
                full((FEATURES, FEATURES)),  # w2  (256, 256)
                full((FEATURES, 1)),         # b2  (256, 1)
                full((1, FEATURES)),         # w3  (1, 256)
                full((1, 1)),                # b3  (1, 1)
            ],
            out_specs=pl.BlockSpec((1, tile_n), lambda i: (0, i)),  # lane-dense row
        ),
        compiler_params=pltpu.CompilerParams(
            dimension_semantics=("parallel",),
            vmem_limit_bytes=int(vmem_limit)),
        cost_estimate=cost,
    )(xT, w1p, b1c, w2c, b2c, w3c, b3c)

    return out[0, :n]  # drop batch padding; equivalent to squeeze(-1)


def init_params(key):
    """Kaiming-uniform (a=0 -> bound = sqrt(6 / fan_in)) weights, zero biases,
    matching the module's kaiming_uniform_/zeros_ init.  Weights are stored in
    PyTorch Linear layout (out_features, in_features)."""
    def kaiming(k, out_f, in_f):
        bound = math.sqrt(6.0 / in_f)
        return jax.random.uniform(k, (out_f, in_f), jnp.float32, -bound, bound)

    k1, k2, k3 = jax.random.split(key, 3)
    return (kaiming(k1, FEATURES, IN_DIM), jnp.zeros((FEATURES,), jnp.float32),
            kaiming(k2, FEATURES, FEATURES), jnp.zeros((FEATURES,), jnp.float32),
            kaiming(k3, 1, FEATURES), jnp.zeros((1,), jnp.float32))


def nerf_reference(x, params, compute_dtype=jnp.float32):
    """Pure-JAX reference (standard orientation) with the same dtype treatment."""
    w1, b1, w2, b2, w3, b3 = params
    cdt = compute_dtype
    h = jnp.dot(x.astype(cdt), w1.astype(cdt).T, preferred_element_type=jnp.float32)
    h = jnp.maximum(h + b1, 0.0)
    h = jnp.dot(h.astype(cdt), w2.astype(cdt).T, preferred_element_type=jnp.float32)
    h = jnp.maximum(h + b2, 0.0)
    y = jnp.dot(h.astype(cdt), w3.astype(cdt).T, preferred_element_type=jnp.float32)
    return jax.nn.sigmoid(y + b3)[:, 0]


if __name__ == "__main__":
    key = jax.random.PRNGKey(0)
    kx, kp = jax.random.split(key)

    N = 1500  # not a tile multiple: exercises batch padding and a 2-step grid
    x = jax.random.normal(kx, (N, IN_DIM), jnp.float32)
    params = init_params(kp)

    ref_f32 = nerf_reference(x, params, compute_dtype=jnp.float32)
    ref_bf16 = nerf_reference(x, params, compute_dtype=jnp.bfloat16)

    # Default path: bf16 MXU matmuls with f32 accumulation.
    out = jax.block_until_ready(nerf_forward(x, params))
    assert out.shape == (N,)
    assert jnp.allclose(out, ref_bf16, atol=3e-3, rtol=0.0)
    assert jnp.allclose(out, ref_f32, atol=5e-2, rtol=0.0)

    # Full-f32 path with a smaller tile (3-step grid + padding), tighter check.
    out32 = jax.block_until_ready(
        nerf_forward(x, params, tile_n=512, compute_dtype=jnp.float32))
    assert out32.shape == (N,)
    assert jnp.allclose(out32, ref_f32, atol=1e-4, rtol=1e-4)

    print("KERNEL_OK")
</pallas_src>

<mosaic_0001>
module attributes {stable_mosaic.version = 11 : i64} {
  func.func @_nerf_kernel(%arg0: i32, %arg1: memref<128x768xbf16, #tpu.memory_space<vmem>>, %arg2: memref<256x128xbf16, #tpu.memory_space<vmem>>, %arg3: memref<256x1xf32, #tpu.memory_space<vmem>>, %arg4: memref<256x256xbf16, #tpu.memory_space<vmem>>, %arg5: memref<256x1xf32, #tpu.memory_space<vmem>>, %arg6: memref<1x256xbf16, #tpu.memory_space<vmem>>, %arg7: memref<1x1xf32, #tpu.memory_space<vmem>>, %arg8: memref<1x768xf32, #tpu.memory_space<vmem>>) attributes {dimension_semantics = [#tpu.dimension_semantics<parallel>], iteration_bounds = array<i64: 2>, scalar_prefetch = 0 : i64, scratch_operands = 0 : i64, tpu.core_type = #tpu.core_type<tc>, window_params = [{transform_indices = @transform_0, window_bounds = array<i64: 128, 768>}, {pipeline_mode = #tpu.pipeline_mode<synchronous>, transform_indices = @transform_1, window_bounds = array<i64: 256, 128>}, {pipeline_mode = #tpu.pipeline_mode<synchronous>, transform_indices = @transform_2, window_bounds = array<i64: 256, 1>}, {pipeline_mode = #tpu.pipeline_mode<synchronous>, transform_indices = @transform_3, window_bounds = array<i64: 256, 256>}, {pipeline_mode = #tpu.pipeline_mode<synchronous>, transform_indices = @transform_4, window_bounds = array<i64: 256, 1>}, {pipeline_mode = #tpu.pipeline_mode<synchronous>, transform_indices = @transform_5, window_bounds = array<i64: 1, 256>}, {pipeline_mode = #tpu.pipeline_mode<synchronous>, transform_indices = @transform_6, window_bounds = array<i64: 1, 1>}, {transform_indices = @transform_7, window_bounds = array<i64: 1, 768>}]} {
    %c0 = arith.constant 0 : index
    %c0_0 = arith.constant 0 : index
    %0 = vector.load %arg2[%c0, %c0_0] : memref<256x128xbf16, #tpu.memory_space<vmem>>, vector<256x128xbf16>
    %c0_1 = arith.constant 0 : index
    %c0_2 = arith.constant 0 : index
    %1 = vector.load %arg1[%c0_1, %c0_2] : memref<128x768xbf16, #tpu.memory_space<vmem>>, vector<128x768xbf16>
    %cst = arith.constant dense<0.000000e+00> : vector<256x768xf32>
    %2 = tpu.matmul %0, %1, %cst {dimension_numbers = #tpu.dot_dimension_numbers<[1], [0], [0], [1], [0, 0, 1, 1], [], []>} : vector<256x128xbf16>, vector<128x768xbf16>, vector<256x768xf32> -> vector<256x768xf32>
    %c0_3 = arith.constant 0 : index
    %c0_4 = arith.constant 0 : index
    %3 = vector.load %arg3[%c0_3, %c0_4] : memref<256x1xf32, #tpu.memory_space<vmem>>, vector<256x1xf32>
    %4 = vector.broadcast %3 : vector<256x1xf32> to vector<256x768xf32>
    %5 = arith.addf %2, %4 : vector<256x768xf32>
    %cst_5 = arith.constant 0.000000e+00 : f32
    %6 = vector.broadcast %cst_5 : f32 to vector<256x768xf32>
    %7 = arith.maximumf %5, %6 : vector<256x768xf32>
    %8 = arith.truncf %7 : vector<256x768xf32> to vector<256x768xbf16>
    %c0_6 = arith.constant 0 : index
    %c0_7 = arith.constant 0 : index
    %9 = vector.load %arg4[%c0_6, %c0_7] : memref<256x256xbf16, #tpu.memory_space<vmem>>, vector<256x256xbf16>
    %cst_8 = arith.constant dense<0.000000e+00> : vector<256x768xf32>
    %10 = tpu.matmul %9, %8, %cst_8 {dimension_numbers = #tpu.dot_dimension_numbers<[1], [0], [0], [1], [0, 0, 1, 1], [], []>} : vector<256x256xbf16>, vector<256x768xbf16>, vector<256x768xf32> -> vector<256x768xf32>
    %c0_9 = arith.constant 0 : index
    %c0_10 = arith.constant 0 : index
    %11 = vector.load %arg5[%c0_9, %c0_10] : memref<256x1xf32, #tpu.memory_space<vmem>>, vector<256x1xf32>
    %12 = vector.broadcast %11 : vector<256x1xf32> to vector<256x768xf32>
    %13 = arith.addf %10, %12 : vector<256x768xf32>
    %cst_11 = arith.constant 0.000000e+00 : f32
    %14 = vector.broadcast %cst_11 : f32 to vector<256x768xf32>
    %15 = arith.maximumf %13, %14 : vector<256x768xf32>
    %16 = arith.truncf %15 : vector<256x768xf32> to vector<256x768xbf16>
    %c0_12 = arith.constant 0 : index
    %c0_13 = arith.constant 0 : index
    %17 = vector.load %arg6[%c0_12, %c0_13] : memref<1x256xbf16, #tpu.memory_space<vmem>>, vector<1x256xbf16>
    %cst_14 = arith.constant dense<0.000000e+00> : vector<1x768xf32>
    %18 = tpu.matmul %17, %16, %cst_14 {dimension_numbers = #tpu.dot_dimension_numbers<[1], [0], [0], [1], [0, 0, 1, 1], [], []>} : vector<1x256xbf16>, vector<256x768xbf16>, vector<1x768xf32> -> vector<1x768xf32>
    %c0_15 = arith.constant 0 : index
    %c0_16 = arith.constant 0 : index
    %19 = vector.load %arg7[%c0_15, %c0_16] : memref<1x1xf32, #tpu.memory_space<vmem>>, vector<1x1xf32>
    %20 = vector.broadcast %19 : vector<1x1xf32> to vector<1x768xf32>
    %21 = arith.addf %18, %20 : vector<1x768xf32>
    %22 = arith.negf %21 : vector<1x768xf32>
    %23 = math.exp %22 : vector<1x768xf32>
    %cst_17 = arith.constant 1.000000e+00 : f32
    %24 = vector.broadcast %cst_17 : f32 to vector<1x768xf32>
    %25 = arith.addf %24, %23 : vector<1x768xf32>
    %26 = arith.divf %24, %25 : vector<1x768xf32>
    %c0_18 = arith.constant 0 : index
    %c0_19 = arith.constant 0 : index
    %27 = vector.load %arg8[%c0_18, %c0_19] : memref<1x768xf32, #tpu.memory_space<vmem>>, vector<1x768xf32>
    tpu.vector_store %arg8[%c0_18, %c0_19], %26 {strides = array<i32>} : memref<1x768xf32, #tpu.memory_space<vmem>>, vector<1x768xf32>,
    return
  }
  func.func @transform_0(%arg0: i32) -> (i32, i32) {
    %c0_i32 = arith.constant 0 : i32
    %c0_i32_0 = arith.constant 0 : i32
    return %c0_i32, %arg0 : i32, i32
  }
  func.func @transform_1(%arg0: i32) -> (i32, i32) {
    %c0_i32 = arith.constant 0 : i32
    %c0_i32_0 = arith.constant 0 : i32
    %c0_i32_1 = arith.constant 0 : i32
    return %c0_i32, %c0_i32_0 : i32, i32
  }
  func.func @transform_2(%arg0: i32) -> (i32, i32) {
    %c0_i32 = arith.constant 0 : i32
    %c0_i32_0 = arith.constant 0 : i32
    %c0_i32_1 = arith.constant 0 : i32
    return %c0_i32, %c0_i32_0 : i32, i32
  }
  func.func @transform_3(%arg0: i32) -> (i32, i32) {
    %c0_i32 = arith.constant 0 : i32
    %c0_i32_0 = arith.constant 0 : i32
    %c0_i32_1 = arith.constant 0 : i32
    return %c0_i32, %c0_i32_0 : i32, i32
  }
  func.func @transform_4(%arg0: i32) -> (i32, i32) {
    %c0_i32 = arith.constant 0 : i32
    %c0_i32_0 = arith.constant 0 : i32
    %c0_i32_1 = arith.constant 0 : i32
    return %c0_i32, %c0_i32_0 : i32, i32
  }
  func.func @transform_5(%arg0: i32) -> (i32, i32) {
    %c0_i32 = arith.constant 0 : i32
    %c0_i32_0 = arith.constant 0 : i32
    %c0_i32_1 = arith.constant 0 : i32
    return %c0_i32, %c0_i32_0 : i32, i32
  }
  func.func @transform_6(%arg0: i32) -> (i32, i32) {
    %c0_i32 = arith.constant 0 : i32
    %c0_i32_0 = arith.constant 0 : i32
    %c0_i32_1 = arith.constant 0 : i32
    return %c0_i32, %c0_i32_0 : i32, i32
  }
  func.func @transform_7(%arg0: i32) -> (i32, i32) {
    %c0_i32 = arith.constant 0 : i32
    %c0_i32_0 = arith.constant 0 : i32
    return %c0_i32, %arg0 : i32, i32
  }
}

</mosaic_0001>

<llo_original>
// kernel: tpu_custom_call.1
$region0: #{tpu_custom_call.1}
  #allocation0 [shape = 'u32[]', space=smem, size = 0x4, offset = 0x4, fixed_abs, tag = 'smem constant byte address 0x4 - core index']
  #allocation1 [shape = 'u32[72,128]{1,0:T(1,128)}', space=vmem, size = 0x9000, scoped, tag = 'internal scratch']
  #allocation2 [shape = 'f32[1,1]{1,0:T(1,128)S(1)}', space=vmem, size = 0x200, scoped, tag = 'scoped memory for tpu_custom_call.1']
  %s0 = inlined_call_operand.hbm [shape: bf16[128,1536], index: 0, kind: input, shape index: {}]
  %s1 = inlined_call_operand.vmem [shape: bf16[256,128], index: 1, kind: input, shape index: {}]
  %s2 = inlined_call_operand.vmem [shape: f32[256,1], index: 2, kind: input, shape index: {}]
  %s3 = inlined_call_operand.vmem [shape: bf16[256,256], index: 3, kind: input, shape index: {}]
  %s4 = inlined_call_operand.vmem [shape: f32[256,1], index: 4, kind: input, shape index: {}]
  %s5 = inlined_call_operand.vmem [shape: bf16[1,256], index: 5, kind: input, shape index: {}]
  %s6 = inlined_call_operand.<no memory space> [shape: f32[1,1], index: 6, kind: input, shape index: {}]
  %s7 = inlined_call_operand.hbm [shape: f32[1,1536], index: 7, kind: output, shape index: {}]
  %s8 = sld [smem:[#allocation0]]
  $region65: #{tpu_custom_call.1} parent=0
    _
  %s10 = ssub.s32 1, %s8
  %s11 = scalar_select 0, %s10, %s8
  %v12 = vstv %s6
  %13 = vst [vmem:[#allocation2] sm:$0x1] %v12
  $region1: #{tpu_custom_call.1} parent=0
    #allocation3 [shape = 'u8[393216]{0}', space=vmem, size = 0x60000, scoped, tag = 'input window, operand 0']
    #allocation4 [shape = 's32[2]{0}', space=sflag, size = 0x8, scoped, tag = 'scoped memory for tpu_custom_call.1']
    #allocation5 [shape = 's32[2]{0}', space=sflag, size = 0x8, scoped, tag = 'scoped memory for tpu_custom_call.1']
    #allocation6 [shape = 'u8[6144]{0}', space=vmem, size = 0x1800, scoped, tag = 'output window, operand 0']
    %14 = vsyncpa [#allocation4], 0
    %s15 = scalar_lea.sflag [#allocation4], 1
    %16 = vsyncpa %s15, 0
    %17 = vsyncpa [#allocation5], 0
    %s18 = scalar_lea.sflag [#allocation5], 1
    %19 = vsyncpa %s18, 0
    loop: start=0, step=1, limit=4
    $region2: #{tpu_custom_call.1} parent=1 // loop_pre_header
      _
    $region3: #{tpu_custom_call.1} parent=1 // loop_header
      %s21 = sphi 0, %s25
      %p22 = scmp.ge.s32.totalorder %s21, 4
      %s31 = sphi 0, %s33
      %s34 = sphi 0, %s31
      %s35 = sphi 0, %s34
      %s51 = sphi 0, %s35
      %s55 = sphi 0, %s55
      %s57 = sphi 0, %s55
      %s58 = sphi 0, %s57
      %s72 = sphi 0, %s58
      %s76 = sphi 0, %s76
      %s78 = sphi 0, %s76
      %s79 = sphi 0, %s78
      %s93 = sphi 0, %s79
      %s97 = sphi 0, %s97
      %s99 = sphi 0, %s97
      %s100 = sphi 0, %s99
      %s114 = sphi 0, %s100
      %s118 = sphi 0, %s118
      %s120 = sphi 0, %s118
      %s121 = sphi 0, %s120
      %s135 = sphi 0, %s121
      %s139 = sphi 0, %s139
      %s141 = sphi 0, %s139
      %s142 = sphi 0, %s141
      %s156 = sphi 0, %s142
      %s160 = sphi 0, %s160
      %s162 = sphi 0, %s160
      %s163 = sphi 0, %s162
      %s177 = sphi 0, %s163
      %s183 = sphi 0, %s185
      %s186 = sphi 0, %s183
      %s187 = sphi 0, %s186
      %s203 = sphi 0, %s187
    $region4: #{tpu_custom_call.1} parent=1 // loop_header_branch
      %24 = sbr.rel (%p22) target = $region8
    $region5: #{tpu_custom_call.1} parent=1 // loop_body
      %s26 = ssub.s32 %s21, 1
      %s27 = ssub.s32 %s21, 2
      %s28 = sadd.s32 %s21, 1
      %s29 = ssub.s32 %s21, %s28
      %p30 = scmp.eq.s32.totalorder %s29, 0
      %s32 = sadd.s32 %s31, 1
      %s33 = scalar_select %p30, %s31, %s32
      %p36 = pneg %p30
      %p37 = scmp.eq.s32.totalorder %s21, 1
      %p38 = por %p36, %p37
      %p39 = scmp.ne.s32.totalorder %s31, %s34
      %p40 = scmp.eq.s32.totalorder %s21, 0
      %p41 = por %p39, %p40
      %p42 = scmp.ne.s32.totalorder %s31, %s34
      %p43 = scmp.eq.s32.totalorder %s26, 1
      %p44 = por %p42, %p43
      %p45 = scmp.ne.s32.totalorder %s34, %s35
      %p46 = scmp.eq.s32.totalorder %s26, 0
      %p47 = por %p45, %p46
      %p48 = scmp.ne.s32.totalorder %s34, %s35
      %p49 = scmp.eq.s32.totalorder %s27, 1
      %p50 = por %p48, %p49
      %p52 = scmp.ne.s32.totalorder %s35, %s51
      %p53 = scmp.eq.s32.totalorder %s27, 0
      %p54 = por %p52, %p53
      %s56 = sadd.s32 %s55, 1
      %p59 = scmp.eq.s32.totalorder %s21, 1
      %p60 = scmp.ne.s32.totalorder %s55, %s57
      %p61 = scmp.eq.s32.totalorder %s21, 0
      %p62 = por %p60, %p61
      %p63 = scmp.ne.s32.totalorder %s55, %s57
      %p64 = scmp.eq.s32.totalorder %s26, 1
      %p65 = por %p63, %p64
      %p66 = scmp.ne.s32.totalorder %s57, %s58
      %p67 = scmp.eq.s32.totalorder %s26, 0
      %p68 = por %p66, %p67
      %p69 = scmp.ne.s32.totalorder %s57, %s58
      %p70 = scmp.eq.s32.totalorder %s27, 1
      %p71 = por %p69, %p70
      %p73 = scmp.ne.s32.totalorder %s58, %s72
      %p74 = scmp.eq.s32.totalorder %s27, 0
      %p75 = por %p73, %p74
      %s77 = sadd.s32 %s76, 1
      %p80 = scmp.eq.s32.totalorder %s21, 1
      %p81 = scmp.ne.s32.totalorder %s76, %s78
      %p82 = scmp.eq.s32.totalorder %s21, 0
      %p83 = por %p81, %p82
      %p84 = scmp.ne.s32.totalorder %s76, %s78
      %p85 = scmp.eq.s32.totalorder %s26, 1
      %p86 = por %p84, %p85
      %p87 = scmp.ne.s32.totalorder %s78, %s79
      %p88 = scmp.eq.s32.totalorder %s26, 0
      %p89 = por %p87, %p88
      %p90 = scmp.ne.s32.totalorder %s78, %s79
      %p91 = scmp.eq.s32.totalorder %s27, 1
      %p92 = por %p90, %p91
      %p94 = scmp.ne.s32.totalorder %s79, %s93
      %p95 = scmp.eq.s32.totalorder %s27, 0
      %p96 = por %p94, %p95
      %s98 = sadd.s32 %s97, 1
      %p101 = scmp.eq.s32.totalorder %s21, 1
      %p102 = scmp.ne.s32.totalorder %s97, %s99
      %p103 = scmp.eq.s32.totalorder %s21, 0
      %p104 = por %p102, %p103
      %p105 = scmp.ne.s32.totalorder %s97, %s99
      %p106 = scmp.eq.s32.totalorder %s26, 1
      %p107 = por %p105, %p106
      %p108 = scmp.ne.s32.totalorder %s99, %s100
      %p109 = scmp.eq.s32.totalorder %s26, 0
      %p110 = por %p108, %p109
      %p111 = scmp.ne.s32.totalorder %s99, %s100
      %p112 = scmp.eq.s32.totalorder %s27, 1
      %p113 = por %p111, %p112
      %p115 = scmp.ne.s32.totalorder %s100, %s114
      %p116 = scmp.eq.s32.totalorder %s27, 0
      %p117 = por %p115, %p116
      %s119 = sadd.s32 %s118, 1
      %p122 = scmp.eq.s32.totalorder %s21, 1
      %p123 = scmp.ne.s32.totalorder %s118, %s120
      %p124 = scmp.eq.s32.totalorder %s21, 0
      %p125 = por %p123, %p124
      %p126 = scmp.ne.s32.totalorder %s118, %s120
      %p127 = scmp.eq.s32.totalorder %s26, 1
      %p128 = por %p126, %p127
      %p129 = scmp.ne.s32.totalorder %s120, %s121
      %p130 = scmp.eq.s32.totalorder %s26, 0
      %p131 = por %p129, %p130
      %p132 = scmp.ne.s32.totalorder %s120, %s121
      %p133 = scmp.eq.s32.totalorder %s27, 1
      %p134 = por %p132, %p133
      %p136 = scmp.ne.s32.totalorder %s121, %s135
      %p137 = scmp.eq.s32.totalorder %s27, 0
      %p138 = por %p136, %p137
      %s140 = sadd.s32 %s139, 1
      %p143 = scmp.eq.s32.totalorder %s21, 1
      %p144 = scmp.ne.s32.totalorder %s139, %s141
      %p145 = scmp.eq.s32.totalorder %s21, 0
      %p146 = por %p144, %p145
      %p147 = scmp.ne.s32.totalorder %s139, %s141
      %p148 = scmp.eq.s32.totalorder %s26, 1
      %p149 = por %p147, %p148
      %p150 = scmp.ne.s32.totalorder %s141, %s142
      %p151 = scmp.eq.s32.totalorder %s26, 0
      %p152 = por %p150, %p151
      %p153 = scmp.ne.s32.totalorder %s141, %s142
      %p154 = scmp.eq.s32.totalorder %s27, 1
      %p155 = por %p153, %p154
      %p157 = scmp.ne.s32.totalorder %s142, %s156
      %p158 = scmp.eq.s32.totalorder %s27, 0
      %p159 = por %p157, %p158
      %s161 = sadd.s32 %s160, 1
      %p164 = scmp.eq.s32.totalorder %s21, 1
      %p165 = scmp.ne.s32.totalorder %s160, %s162
      %p166 = scmp.eq.s32.totalorder %s21, 0
      %p167 = por %p165, %p166
      %p168 = scmp.ne.s32.totalorder %s160, %s162
      %p169 = scmp.eq.s32.totalorder %s26, 1
      %p170 = por %p168, %p169
      %p171 = scmp.ne.s32.totalorder %s162, %s163
      %p172 = scmp.eq.s32.totalorder %s26, 0
      %p173 = por %p171, %p172
      %p174 = scmp.ne.s32.totalorder %s162, %s163
      %p175 = scmp.eq.s32.totalorder %s27, 1
      %p176 = por %p174, %p175
      %p178 = scmp.ne.s32.totalorder %s163, %s177
      %p179 = scmp.eq.s32.totalorder %s27, 0
      %p180 = por %p178, %p179
      %s181 = ssub.s32 %s21, %s28
      %p182 = scmp.eq.s32.totalorder %s181, 0
      %s184 = sadd.s32 %s183, 1
      %s185 = scalar_select %p182, %s183, %s184
      %p188 = pneg %p182
      %p189 = scmp.eq.s32.totalorder %s21, 1
      %p190 = por %p188, %p189
      %p191 = scmp.ne.s32.totalorder %s183, %s186
      %p192 = scmp.eq.s32.totalorder %s21, 0
      %p193 = por %p191, %p192
      %p194 = scmp.ne.s32.totalorder %s183, %s186
      %p195 = scmp.eq.s32.totalorder %s26, 1
      %p196 = por %p194, %p195
      %p197 = scmp.ne.s32.totalorder %s186, %s187
      %p198 = scmp.eq.s32.totalorder %s26, 0
      %p199 = por %p197, %p198
      %p200 = scmp.ne.s32.totalorder %s186, %s187
      %p201 = scmp.eq.s32.totalorder %s27, 1
      %p202 = por %p200, %p201
      %p204 = scmp.ne.s32.totalorder %s187, %s203
      %p205 = scmp.eq.s32.totalorder %s27, 0
      %p206 = por %p204, %p205
      %p207 = scmp.le.s32.totalorder 1, %s21
      %p208 = scmp.lt.s32.totalorder %s21, 3
      %p209 = pnand %p207, %p208
      %p210 = pneg %p209
      // Predicated region
      $region9: #{tpu_custom_call.1} parent=5 // pred_check
        _
      $region10: #{tpu_custom_call.1} parent=5 // pred_check_branch
        %212 = sbr.rel (%p209) target = $region12
      $region11: #{tpu_custom_call.1} parent=5 // pred_region
        %s213 = ssub.s32 %s21, 1
        // Predicated region
        $region13: #{tpu_custom_call.1} parent=11 // pred_check
          %p214 = pneg %p68
        $region14: #{tpu_custom_call.1} parent=11 // pred_check_branch
          %216 = sbr.rel (%p214) target = $region16
        $region15: #{tpu_custom_call.1} parent=11 // pred_region
          _
        $region16: #{tpu_custom_call.1} parent=11 // pred_fallthru
          _
        // Predicated region
        $region17: #{tpu_custom_call.1} parent=11 // pred_check
          %p217 = pneg %p89
        $region18: #{tpu_custom_call.1} parent=11 // pred_check_branch
          %219 = sbr.rel (%p217) target = $region20
        $region19: #{tpu_custom_call.1} parent=11 // pred_region
          _
        $region20: #{tpu_custom_call.1} parent=11 // pred_fallthru
          _
        // Predicated region
        $region21: #{tpu_custom_call.1} parent=11 // pred_check
          %p220 = pneg %p110
        $region22: #{tpu_custom_call.1} parent=11 // pred_check_branch
          %222 = sbr.rel (%p220) target = $region24
        $region23: #{tpu_custom_call.1} parent=11 // pred_region
          _
        $region24: #{tpu_custom_call.1} parent=11 // pred_fallthru
          _
        // Predicated region
        $region25: #{tpu_custom_call.1} parent=11 // pred_check
          %p223 = pneg %p131
        $region26: #{tpu_custom_call.1} parent=11 // pred_check_branch
          %225 = sbr.rel (%p223) target = $region28
        $region27: #{tpu_custom_call.1} parent=11 // pred_region
          _
        $region28: #{tpu_custom_call.1} parent=11 // pred_fallthru
          _
        // Predicated region
        $region29: #{tpu_custom_call.1} parent=11 // pred_check
          %p226 = pneg %p152
        $region30: #{tpu_custom_call.1} parent=11 // pred_check_branch
          %228 = sbr.rel (%p226) target = $region32
        $region31: #{tpu_custom_call.1} parent=11 // pred_region
          _
        $region32: #{tpu_custom_call.1} parent=11 // pred_fallthru
          _
        // Predicated region
        $region33: #{tpu_custom_call.1} parent=11 // pred_check
          %p229 = pneg %p173
        $region34: #{tpu_custom_call.1} parent=11 // pred_check_branch
          %231 = sbr.rel (%p229) target = $region36
        $region35: #{tpu_custom_call.1} parent=11 // pred_region
          _
        $region36: #{tpu_custom_call.1} parent=11 // pred_fallthru
          _
      $region12: #{tpu_custom_call.1} parent=5 // pred_fallthru
        _
      %p232 = scmp.lt.s32.totalorder %s21, 2
      // Predicated region
      $region37: #{tpu_custom_call.1} parent=5 // pred_check
        %p233 = pneg %p232
      $region38: #{tpu_custom_call.1} parent=5 // pred_check_branch
        %235 = sbr.rel (%p233) target = $region40
      $region39: #{tpu_custom_call.1} parent=5 // pred_region
        // Predicated region
        $region41: #{tpu_custom_call.1} parent=39 // pred_check
          %p236 = pneg %p41
        $region42: #{tpu_custom_call.1} parent=39 // pred_check_branch
          %238 = sbr.rel (%p236) target = $region44
        $region43: #{tpu_custom_call.1} parent=39 // pred_region
          %s239 = sand.u32 %s31, 1
          %s240 = scalar_lea.sflag [#allocation4], %s239
          %s241 = sand.u32 %s31, 1
          %s242 = smul.addr %s241, 384
          %s243 = scalar_lea.vmem [#allocation3], %s242
          %s244 = smul.u32 6, %s21
          %246 = vsyncadd %s240, 0
          %s247 = smul.addr %s244, 4
          %s248 = scalar_lea.hbm %s0, %s247
          %s249 = sshll.u32 %s248, 4
          %s250 = int_to_ptr.hbm [resolvable:$true] %s249
          %s251 = sshll.u32 %s243, 4
          %s252 = int_to_ptr.vmem [resolvable:$true] %s251
          %257 = dma.hbm_to_vmem [thread:$0]  %s250, 6144, %s252, %s240, 768, 384, 24
        $region44: #{tpu_custom_call.1} parent=39 // pred_fallthru
          _
      $region40: #{tpu_custom_call.1} parent=5 // pred_fallthru
        _
      %p258 = scmp.le.s32.totalorder 1, %s21
      %p259 = scmp.lt.s32.totalorder %s21, 3
      %p260 = pnand %p258, %p259
      %p261 = pneg %p260
      // Predicated region
      $region45: #{tpu_custom_call.1} parent=5 // pred_check
        _
      $region46: #{tpu_custom_call.1} parent=5 // pred_check_branch
        %263 = sbr.rel (%p260) target = $region48
      $region47: #{tpu_custom_call.1} parent=5 // pred_region
        %s264 = ssub.s32 %s21, 1
        %s265 = sand.u32 %s34, 1
        %s266 = scalar_lea.sflag [#allocation4], %s265
        %s267 = sand.u32 %s34, 1
        %s268 = smul.addr %s267, 384
        %s269 = scalar_lea.vmem [#allocation3], %s268
        // Predicated region
        $region49: #{tpu_custom_call.1} parent=47 // pred_check
          %p270 = pneg %p47
        $region50: #{tpu_custom_call.1} parent=47 // pred_check_branch
          %272 = sbr.rel (%p270) target = $region52
        $region51: #{tpu_custom_call.1} parent=47 // pred_region
          %274 = dma.done %s266, 6144
        $region52: #{tpu_custom_call.1} parent=47 // pred_fallthru
          _
        %s275 = sand.u32 %s34, 1
        %s276 = scalar_lea.sflag [#allocation4], %s275
        %s277 = sand.u32 %s34, 1
        %s278 = smul.addr %s277, 384
        %s279 = scalar_lea.vmem [#allocation3], %s278
        %p280 = pneg %p47
        %p281 = pneg %p44
        %p282 = pneg %p68
        %p283 = pneg %p65
        %p284 = pneg %p89
        %p285 = pneg %p86
        %p286 = pneg %p110
        %p287 = pneg %p107
        %p288 = pneg %p131
        %p289 = pneg %p128
        %p290 = pneg %p152
        %p291 = pneg %p149
        %p292 = pneg %p173
        %p293 = pneg %p170
        %p294 = pneg %p199
        %p295 = pneg %p196
        %s296 = sand.u32 %s186, 1
        %s297 = scalar_lea.sflag [#allocation5], %s296
        %s298 = sand.u32 %s186, 1
        %s299 = smul.addr %s298, 6
        %s300 = scalar_lea.vmem [#allocation6], %s299
        %s301 = smul.u32 6, %s26
        %s302 = smul.u32 6, %s26
        %v303 = vld [vmem:[%s1] sm:$0xf]
        %v304 = vld [vmem:[%s1 + $0x4] sm:$0xf]
        %v305 = vld [vmem:[%s1 + $0x8] sm:$0xf]
        %v306 = vld [vmem:[%s1 + $0xc] sm:$0xf]
        %v307 = vld [vmem:[%s1 + $0x10] sm:$0xf]
        %v308 = vld [vmem:[%s1 + $0x14] sm:$0xf]
        %v309 = vld [vmem:[%s1 + $0x18] sm:$0xf]
        %v310 = vld [vmem:[%s1 + $0x1c] sm:$0xf]
        %v311 = vld [vmem:[%s1 + $0x20] sm:$0xf]
        %v312 = vld [vmem:[%s1 + $0x24] sm:$0xf]
        %v313 = vld [vmem:[%s1 + $0x28] sm:$0xf]
        %v314 = vld [vmem:[%s1 + $0x2c] sm:$0xf]
        %v315 = vld [vmem:[%s1 + $0x30] sm:$0xf]
        %v316 = vld [vmem:[%s1 + $0x34] sm:$0xf]
        %v317 = vld [vmem:[%s1 + $0x38] sm:$0xf]
        %v318 = vld [vmem:[%s1 + $0x3c] sm:$0xf]
        %v319 = vld [vmem:[%s1 + $0x40] sm:$0xf]
        %v320 = vld [vmem:[%s1 + $0x44] sm:$0xf]
        %v321 = vld [vmem:[%s1 + $0x48] sm:$0xf]
        %v322 = vld [vmem:[%s1 + $0x4c] sm:$0xf]
        %v323 = vld [vmem:[%s1 + $0x50] sm:$0xf]
        %v324 = vld [vmem:[%s1 + $0x54] sm:$0xf]
        %v325 = vld [vmem:[%s1 + $0x58] sm:$0xf]
        %v326 = vld [vmem:[%s1 + $0x5c] sm:$0xf]
        %v327 = vld [vmem:[%s1 + $0x60] sm:$0xf]
        %v328 = vld [vmem:[%s1 + $0x64] sm:$0xf]
        %v329 = vld [vmem:[%s1 + $0x68] sm:$0xf]
        %v330 = vld [vmem:[%s1 + $0x6c] sm:$0xf]
        %v331 = vld [vmem:[%s1 + $0x70] sm:$0xf]
        %v332 = vld [vmem:[%s1 + $0x74] sm:$0xf]
        %v333 = vld [vmem:[%s1 + $0x78] sm:$0xf]
        %v334 = vld [vmem:[%s1 + $0x7c] sm:$0xf]
        %v335 = vld [vmem:[%s269] sm:$0xff]
        %v336 = vld [vmem:[%s269 + $0x8] sm:$0xff]
        %v337 = vld [vmem:[%s269 + $0x10] sm:$0xff]
        %v338 = vld [vmem:[%s269 + $0x18] sm:$0xff]
        %v339 = vld [vmem:[%s269 + $0x20] sm:$0xff]
        %v340 = vld [vmem:[%s269 + $0x28] sm:$0xff]
        %v341 = vld [vmem:[%s269 + $0x30] sm:$0xff]
        %v342 = vld [vmem:[%s269 + $0x38] sm:$0xff]
        %v343 = vld [vmem:[%s269 + $0x40] sm:$0xff]
        %v344 = vld [vmem:[%s269 + $0x48] sm:$0xff]
        %v345 = vld [vmem:[%s269 + $0x50] sm:$0xff]
        %v346 = vld [vmem:[%s269 + $0x58] sm:$0xff]
        %v347 = vld [vmem:[%s269 + $0x60] sm:$0xff]
        %v348 = vld [vmem:[%s269 + $0x68] sm:$0xff]
        %v349 = vld [vmem:[%s269 + $0x70] sm:$0xff]
        %v350 = vld [vmem:[%s269 + $0x78] sm:$0xff]
        %v351 = vld [vmem:[%s269 + $0x80] sm:$0xff]
        %v352 = vld [vmem:[%s269 + $0x88] sm:$0xff]
        %v353 = vld [vmem:[%s269 + $0x90] sm:$0xff]
        %v354 = vld [vmem:[%s269 + $0x98] sm:$0xff]
        %v355 = vld [vmem:[%s269 + $0xa0] sm:$0xff]
        %v356 = vld [vmem:[%s269 + $0xa8] sm:$0xff]
        %v357 = vld [vmem:[%s269 + $0xb0] sm:$0xff]
        %v358 = vld [vmem:[%s269 + $0xb8] sm:$0xff]
        %v359 = vld [vmem:[%s269 + $0xc0] sm:$0xff]
        %v360 = vld [vmem:[%s269 + $0xc8] sm:$0xff]
        %v361 = vld [vmem:[%s269 + $0xd0] sm:$0xff]
        %v362 = vld [vmem:[%s269 + $0xd8] sm:$0xff]
        %v363 = vld [vmem:[%s269 + $0xe0] sm:$0xff]
        %v364 = vld [vmem:[%s269 + $0xe8] sm:$0xff]
        %v365 = vld [vmem:[%s269 + $0xf0] sm:$0xff]
        %v366 = vld [vmem:[%s269 + $0xf8] sm:$0xff]
        %v367 = vld [vmem:[%s269 + $0x100] sm:$0xff]
        %v368 = vld [vmem:[%s269 + $0x108] sm:$0xff]
        %v369 = vld [vmem:[%s269 + $0x110] sm:$0xff]
        %v370 = vld [vmem:[%s269 + $0x118] sm:$0xff]
        %v371 = vld [vmem:[%s269 + $0x120] sm:$0xff]
        %v372 = vld [vmem:[%s269 + $0x128] sm:$0xff]
        %v373 = vld [vmem:[%s269 + $0x130] sm:$0xff]
        %v374 = vld [vmem:[%s269 + $0x138] sm:$0xff]
        %v375 = vld [vmem:[%s269 + $0x140] sm:$0xff]
        %v376 = vld [vmem:[%s269 + $0x148] sm:$0xff]
        %v377 = vld [vmem:[%s269 + $0x150] sm:$0xff]
        %v378 = vld [vmem:[%s269 + $0x158] sm:$0xff]
        %v379 = vld [vmem:[%s269 + $0x160] sm:$0xff]
        %v380 = vld [vmem:[%s269 + $0x168] sm:$0xff]
        %v381 = vld [vmem:[%s269 + $0x170] sm:$0xff]
        %v382 = vld [vmem:[%s269 + $0x178] sm:$0xff]
        %v383 = vld [vmem:[%s2] sm:$0xff]
        %v384 = vld [vmem:[%s2 + $0x8] sm:$0xff]
        %v385 = vld [vmem:[%s2 + $0x10] sm:$0xff]
        %v386 = vld [vmem:[%s2 + $0x18] sm:$0xff]
        %v387 = vld [vmem:[%s2 + $0x20] sm:$0xff]
        %v388 = vld [vmem:[%s2 + $0x28] sm:$0xff]
        %v389 = vld [vmem:[%s2 + $0x30] sm:$0xff]
        %v390 = vld [vmem:[%s2 + $0x38] sm:$0xff]
        %v391 = vld [vmem:[%s2 + $0x40] sm:$0xff]
        %v392 = vld [vmem:[%s2 + $0x48] sm:$0xff]
        %v393 = vld [vmem:[%s2 + $0x50] sm:$0xff]
        %v394 = vld [vmem:[%s2 + $0x58] sm:$0xff]
        %v395 = vld [vmem:[%s2 + $0x60] sm:$0xff]
        %v396 = vld [vmem:[%s2 + $0x68] sm:$0xff]
        %v397 = vld [vmem:[%s2 + $0x70] sm:$0xff]
        %v398 = vld [vmem:[%s2 + $0x78] sm:$0xff]
        %v399 = vld [vmem:[%s2 + $0x80] sm:$0xff]
        %v400 = vld [vmem:[%s2 + $0x88] sm:$0xff]
        %v401 = vld [vmem:[%s2 + $0x90] sm:$0xff]
        %v402 = vld [vmem:[%s2 + $0x98] sm:$0xff]
        %v403 = vld [vmem:[%s2 + $0xa0] sm:$0xff]
        %v404 = vld [vmem:[%s2 + $0xa8] sm:$0xff]
        %v405 = vld [vmem:[%s2 + $0xb0] sm:$0xff]
        %v406 = vld [vmem:[%s2 + $0xb8] sm:$0xff]
        %v407 = vld [vmem:[%s2 + $0xc0] sm:$0xff]
        %v408 = vld [vmem:[%s2 + $0xc8] sm:$0xff]
        %v409 = vld [vmem:[%s2 + $0xd0] sm:$0xff]
        %v410 = vld [vmem:[%s2 + $0xd8] sm:$0xff]
        %v411 = vld [vmem:[%s2 + $0xe0] sm:$0xff]
        %v412 = vld [vmem:[%s2 + $0xe8] sm:$0xff]
        %v413 = vld [vmem:[%s2 + $0xf0] sm:$0xff]
        %v414 = vld [vmem:[%s2 + $0xf8] sm:$0xff]
        %416 = vset.pattern.permute.xlu0 0
        %417 = vperm.xlu0 %416, %v383
        %v418 = vpop.permute.xlu0 %417
        %421 = vset.pattern.permute.xlu0 0
        %422 = vperm.xlu0 %421, %v384
        %v423 = vpop.permute.xlu0 %422
        %426 = vset.pattern.permute.xlu0 0
        %427 = vperm.xlu0 %426, %v385
        %v428 = vpop.permute.xlu0 %427
        %431 = vset.pattern.permute.xlu0 0
        %432 = vperm.xlu0 %431, %v386
        %v433 = vpop.permute.xlu0 %432
        %436 = vset.pattern.permute.xlu0 0
        %437 = vperm.xlu0 %436, %v387
        %v438 = vpop.permute.xlu0 %437
        %441 = vset.pattern.permute.xlu0 0
        %442 = vperm.xlu0 %441, %v388
        %v443 = vpop.permute.xlu0 %442
        %446 = vset.pattern.permute.xlu0 0
        %447 = vperm.xlu0 %446, %v389
        %v448 = vpop.permute.xlu0 %447
        %451 = vset.pattern.permute.xlu0 0
        %452 = vperm.xlu0 %451, %v390
        %v453 = vpop.permute.xlu0 %452
        %456 = vset.pattern.permute.xlu0 0
        %457 = vperm.xlu0 %456, %v391
        %v458 = vpop.permute.xlu0 %457
        %461 = vset.pattern.permute.xlu0 0
        %462 = vperm.xlu0 %461, %v392
        %v463 = vpop.permute.xlu0 %462
        %466 = vset.pattern.permute.xlu0 0
        %467 = vperm.xlu0 %466, %v393
        %v468 = vpop.permute.xlu0 %467
        %471 = vset.pattern.permute.xlu0 0
        %472 = vperm.xlu0 %471, %v394
        %v473 = vpop.permute.xlu0 %472
        %476 = vset.pattern.permute.xlu0 0
        %477 = vperm.xlu0 %476, %v395
        %v478 = vpop.permute.xlu0 %477
        %481 = vset.pattern.permute.xlu0 0
        %482 = vperm.xlu0 %481, %v396
        %v483 = vpop.permute.xlu0 %482
        %486 = vset.pattern.permute.xlu0 0
        %487 = vperm.xlu0 %486, %v397
        %v488 = vpop.permute.xlu0 %487
        %491 = vset.pattern.permute.xlu0 0
        %492 = vperm.xlu0 %491, %v398
        %v493 = vpop.permute.xlu0 %492
        %496 = vset.pattern.permute.xlu0 0
        %497 = vperm.xlu0 %496, %v399
        %v498 = vpop.permute.xlu0 %497
        %501 = vset.pattern.permute.xlu0 0
        %502 = vperm.xlu0 %501, %v400
        %v503 = vpop.permute.xlu0 %502
        %506 = vset.pattern.permute.xlu0 0
        %507 = vperm.xlu0 %506, %v401
        %v508 = vpop.permute.xlu0 %507
        %511 = vset.pattern.permute.xlu0 0
        %512 = vperm.xlu0 %511, %v402
        %v513 = vpop.permute.xlu0 %512
        %516 = vset.pattern.permute.xlu0 0
        %517 = vperm.xlu0 %516, %v403
        %v518 = vpop.permute.xlu0 %517
        %521 = vset.pattern.permute.xlu0 0
        %522 = vperm.xlu0 %521, %v404
        %v523 = vpop.permute.xlu0 %522
        %526 = vset.pattern.permute.xlu0 0
        %527 = vperm.xlu0 %526, %v405
        %v528 = vpop.permute.xlu0 %527
        %531 = vset.pattern.permute.xlu0 0
        %532 = vperm.xlu0 %531, %v406
        %v533 = vpop.permute.xlu0 %532
        %536 = vset.pattern.permute.xlu0 0
        %537 = vperm.xlu0 %536, %v407
        %v538 = vpop.permute.xlu0 %537
        %541 = vset.pattern.permute.xlu0 0
        %542 = vperm.xlu0 %541, %v408
        %v543 = vpop.permute.xlu0 %542
        %546 = vset.pattern.permute.xlu0 0
        %547 = vperm.xlu0 %546, %v409
        %v548 = vpop.permute.xlu0 %547
        %551 = vset.pattern.permute.xlu0 0
        %552 = vperm.xlu0 %551, %v410
        %v553 = vpop.permute.xlu0 %552
        %556 = vset.pattern.permute.xlu0 0
        %557 = vperm.xlu0 %556, %v411
        %v558 = vpop.permute.xlu0 %557
        %561 = vset.pattern.permute.xlu0 0
        %562 = vperm.xlu0 %561, %v412
        %v563 = vpop.permute.xlu0 %562
        %566 = vset.pattern.permute.xlu0 0
        %567 = vperm.xlu0 %566, %v413
        %v568 = vpop.permute.xlu0 %567
        %571 = vset.pattern.permute.xlu0 0
        %572 = vperm.xlu0 %571, %v414
        %v573 = vpop.permute.xlu0 %572
        %v607 = vunpack.c.l.b16 %v303
        %v608 = vunpack.c.l.b16 %v304
        %v609 = vunpack.c.l.b16 %v305
        %v610 = vunpack.c.l.b16 %v306
        %v611 = vunpack.c.l.b16 %v307
        %v612 = vunpack.c.l.b16 %v308
        %v613 = vunpack.c.l.b16 %v309
        %v614 = vunpack.c.l.b16 %v310
        %v615 = vunpack.c.l.b16 %v311
        %v616 = vunpack.c.l.b16 %v312
        %v617 = vunpack.c.l.b16 %v313
        %v618 = vunpack.c.l.b16 %v314
        %v619 = vunpack.c.l.b16 %v315
        %v620 = vunpack.c.l.b16 %v316
        %v621 = vunpack.c.l.b16 %v317
        %v622 = vunpack.c.l.b16 %v318
        %v623 = vunpack.c.l.b16 %v319
        %v624 = vunpack.c.l.b16 %v320
        %v625 = vunpack.c.l.b16 %v321
        %v626 = vunpack.c.l.b16 %v322
        %v627 = vunpack.c.l.b16 %v323
        %v628 = vunpack.c.l.b16 %v324
        %v629 = vunpack.c.l.b16 %v325
        %v630 = vunpack.c.l.b16 %v326
        %v631 = vunpack.c.l.b16 %v327
        %v632 = vunpack.c.l.b16 %v328
        %v633 = vunpack.c.l.b16 %v329
        %v634 = vunpack.c.l.b16 %v330
        %v635 = vunpack.c.l.b16 %v331
        %v636 = vunpack.c.l.b16 %v332
        %v637 = vunpack.c.l.b16 %v333
        %v638 = vunpack.c.l.b16 %v334
        %v639 = vpack.c.b16 %v608, %v607
        %v640 = vpack.c.b16 %v610, %v609
        %v641 = vpack.c.b16 %v612, %v611
        %v642 = vpack.c.b16 %v614, %v613
        %v643 = vpack.c.b16 %v616, %v615
        %v644 = vpack.c.b16 %v618, %v617
        %v645 = vpack.c.b16 %v620, %v619
        %v646 = vpack.c.b16 %v622, %v621
        %v647 = vpack.c.b16 %v624, %v623
        %v648 = vpack.c.b16 %v626, %v625
        %v649 = vpack.c.b16 %v628, %v627
        %v650 = vpack.c.b16 %v630, %v629
        %v651 = vpack.c.b16 %v632, %v631
        %v652 = vpack.c.b16 %v634, %v633
        %v653 = vpack.c.b16 %v636, %v635
        %v654 = vpack.c.b16 %v638, %v637
        %v719 = vunpack.c.l.b16 %v335
        %v720 = vunpack.c.h.b16 %v335
        %v721 = vunpack.c.l.b16 %v336
        %v722 = vunpack.c.h.b16 %v336
        %v723 = vunpack.c.l.b16 %v337
        %v724 = vunpack.c.h.b16 %v337
        %v725 = vunpack.c.l.b16 %v338
        %v726 = vunpack.c.h.b16 %v338
        %v727 = vunpack.c.l.b16 %v339
        %v728 = vunpack.c.h.b16 %v339
        %v729 = vunpack.c.l.b16 %v340
        %v730 = vunpack.c.h.b16 %v340
        %v731 = vunpack.c.l.b16 %v341
        %v732 = vunpack.c.h.b16 %v341
        %v733 = vunpack.c.l.b16 %v342
        %v734 = vunpack.c.h.b16 %v342
        %v735 = vunpack.c.l.b16 %v343
        %v736 = vunpack.c.h.b16 %v343
        %v737 = vunpack.c.l.b16 %v344
        %v738 = vunpack.c.h.b16 %v344
        %v739 = vunpack.c.l.b16 %v345
        %v740 = vunpack.c.h.b16 %v345
        %v741 = vunpack.c.l.b16 %v346
        %v742 = vunpack.c.h.b16 %v346
        %v743 = vunpack.c.l.b16 %v347
        %v744 = vunpack.c.h.b16 %v347
        %v745 = vunpack.c.l.b16 %v348
        %v746 = vunpack.c.h.b16 %v348
        %v747 = vunpack.c.l.b16 %v349
        %v748 = vunpack.c.h.b16 %v349
        %v749 = vunpack.c.l.b16 %v350
        %v750 = vunpack.c.h.b16 %v350
        %v751 = vunpack.c.l.b16 %v351
        %v752 = vunpack.c.h.b16 %v351
        %v753 = vunpack.c.l.b16 %v352
        %v754 = vunpack.c.h.b16 %v352
        %v755 = vunpack.c.l.b16 %v353
        %v756 = vunpack.c.h.b16 %v353
        %v757 = vunpack.c.l.b16 %v354
        %v758 = vunpack.c.h.b16 %v354
        %v759 = vunpack.c.l.b16 %v355
        %v760 = vunpack.c.h.b16 %v355
        %v761 = vunpack.c.l.b16 %v356
        %v762 = vunpack.c.h.b16 %v356
        %v763 = vunpack.c.l.b16 %v357
        %v764 = vunpack.c.h.b16 %v357
        %v765 = vunpack.c.l.b16 %v358
        %v766 = vunpack.c.h.b16 %v358
        %v767 = vunpack.c.l.b16 %v359
        %v768 = vunpack.c.h.b16 %v359
        %v769 = vunpack.c.l.b16 %v360
        %v770 = vunpack.c.h.b16 %v360
        %v771 = vunpack.c.l.b16 %v361
        %v772 = vunpack.c.h.b16 %v361
        %v773 = vunpack.c.l.b16 %v362
        %v774 = vunpack.c.h.b16 %v362
        %v775 = vunpack.c.l.b16 %v363
        %v776 = vunpack.c.h.b16 %v363
        %v777 = vunpack.c.l.b16 %v364
        %v778 = vunpack.c.h.b16 %v364
        %v779 = vunpack.c.l.b16 %v365
        %v780 = vunpack.c.h.b16 %v365
        %v781 = vunpack.c.l.b16 %v366
        %v782 = vunpack.c.h.b16 %v366
        %v783 = vunpack.c.l.b16 %v367
        %v784 = vunpack.c.h.b16 %v367
        %v785 = vunpack.c.l.b16 %v368
        %v786 = vunpack.c.h.b16 %v368
        %v787 = vunpack.c.l.b16 %v369
        %v788 = vunpack.c.h.b16 %v369
        %v789 = vunpack.c.l.b16 %v370
        %v790 = vunpack.c.h.b16 %v370
        %v791 = vunpack.c.l.b16 %v371
        %v792 = vunpack.c.h.b16 %v371
        %v793 = vunpack.c.l.b16 %v372
        %v794 = vunpack.c.h.b16 %v372
        %v795 = vunpack.c.l.b16 %v373
        %v796 = vunpack.c.h.b16 %v373
        %v797 = vunpack.c.l.b16 %v374
        %v798 = vunpack.c.h.b16 %v374
        %v799 = vunpack.c.l.b16 %v375
        %v800 = vunpack.c.h.b16 %v375
        %v801 = vunpack.c.l.b16 %v376
        %v802 = vunpack.c.h.b16 %v376
        %v803 = vunpack.c.l.b16 %v377
        %v804 = vunpack.c.h.b16 %v377
        %v805 = vunpack.c.l.b16 %v378
        %v806 = vunpack.c.h.b16 %v378
        %v807 = vunpack.c.l.b16 %v379
        %v808 = vunpack.c.h.b16 %v379
        %v809 = vunpack.c.l.b16 %v380
        %v810 = vunpack.c.h.b16 %v380
        %v811 = vunpack.c.l.b16 %v381
        %v812 = vunpack.c.h.b16 %v381
        %v813 = vunpack.c.l.b16 %v382
        %v814 = vunpack.c.h.b16 %v382
        %v815 = vpack.c.b16 %v725, %v719
        %v816 = vpack.c.b16 %v726, %v720
        %v817 = vpack.c.b16 %v727, %v721
        %v818 = vpack.c.b16 %v728, %v722
        %v819 = vpack.c.b16 %v729, %v723
        %v820 = vpack.c.b16 %v730, %v724
        %v821 = vpack.c.b16 %v737, %v731
        %v822 = vpack.c.b16 %v738, %v732
        %v823 = vpack.c.b16 %v739, %v733
        %v824 = vpack.c.b16 %v740, %v734
        %v825 = vpack.c.b16 %v741, %v735
        %v826 = vpack.c.b16 %v742, %v736
        %v827 = vpack.c.b16 %v749, %v743
        %v828 = vpack.c.b16 %v750, %v744
        %v829 = vpack.c.b16 %v751, %v745
        %v830 = vpack.c.b16 %v752, %v746
        %v831 = vpack.c.b16 %v753, %v747
        %v832 = vpack.c.b16 %v754, %v748
        %v833 = vpack.c.b16 %v761, %v755
        %v834 = vpack.c.b16 %v762, %v756
        %v835 = vpack.c.b16 %v763, %v757
        %v836 = vpack.c.b16 %v764, %v758
        %v837 = vpack.c.b16 %v765, %v759
        %v838 = vpack.c.b16 %v766, %v760
        %v839 = vpack.c.b16 %v773, %v767
        %v840 = vpack.c.b16 %v774, %v768
        %v841 = vpack.c.b16 %v775, %v769
        %v842 = vpack.c.b16 %v776, %v770
        %v843 = vpack.c.b16 %v777, %v771
        %v844 = vpack.c.b16 %v778, %v772
        %v845 = vpack.c.b16 %v785, %v779
        %v846 = vpack.c.b16 %v786, %v780
        %v847 = vpack.c.b16 %v787, %v781
        %v848 = vpack.c.b16 %v788, %v782
        %v849 = vpack.c.b16 %v789, %v783
        %v850 = vpack.c.b16 %v790, %v784
        %v851 = vpack.c.b16 %v797, %v791
        %v852 = vpack.c.b16 %v798, %v792
        %v853 = vpack.c.b16 %v799, %v793
        %v854 = vpack.c.b16 %v800, %v794
        %v855 = vpack.c.b16 %v801, %v795
        %v856 = vpack.c.b16 %v802, %v796
        %v857 = vpack.c.b16 %v809, %v803
        %v858 = vpack.c.b16 %v810, %v804
        %v859 = vpack.c.b16 %v811, %v805
        %v860 = vpack.c.b16 %v812, %v806
        %v861 = vpack.c.b16 %v813, %v807
        %v862 = vpack.c.b16 %v814, %v808
        %911 = vmatpush.bf16.msra.mxu0 %v857
        %912 = vmatpush.bf16.msra.mxu0 %v851
        %913 = vmatpush.bf16.msra.mxu0 %v845
        %914 = vmatpush.bf16.msra.mxu0 %v839
        %915 = vmatpush.bf16.msra.mxu0 %v833
        %916 = vmatpush.bf16.msra.mxu0 %v827
        %917 = vmatpush.bf16.msra.mxu0 %v821
        %918 = vmatpush.bf16.msra.mxu0 %v815
        %919 = vmatmul.bf16.gmra.mxu0 %v639
        %v920 = vpop.f32.mrf.mxu0
        %v921 = vadd.f32 %v418, %v920
        %v922 = vpop.f32.mrf.mxu0
        %v923 = vadd.f32 %v423, %v922
        %924 = vmatmul.bf16.gmra.mxu0 %v640
        %v925 = vpop.f32.mrf.mxu0
        %v926 = vadd.f32 %v428, %v925
        %v927 = vpop.f32.mrf.mxu0
        %v928 = vadd.f32 %v433, %v927
        %929 = vmatmul.bf16.gmra.mxu0 %v641
        %v930 = vpop.f32.mrf.mxu0
        %v931 = vadd.f32 %v438, %v930
        %v932 = vpop.f32.mrf.mxu0
        %v933 = vadd.f32 %v443, %v932
        %934 = vmatmul.bf16.gmra.mxu0 %v642
        %v935 = vpop.f32.mrf.mxu0
        %v936 = vadd.f32 %v448, %v935
        %v937 = vpop.f32.mrf.mxu0
        %v938 = vadd.f32 %v453, %v937
        %939 = vmatmul.bf16.gmra.mxu0 %v643
        %v940 = vpop.f32.mrf.mxu0
        %v941 = vadd.f32 %v458, %v940
        %v942 = vpop.f32.mrf.mxu0
        %v943 = vadd.f32 %v463, %v942
        %944 = vmatmul.bf16.gmra.mxu0 %v644
        %v945 = vpop.f32.mrf.mxu0
        %v946 = vadd.f32 %v468, %v945
        %v947 = vpop.f32.mrf.mxu0
        %v948 = vadd.f32 %v473, %v947
        %949 = vmatmul.bf16.gmra.mxu0 %v645
        %v950 = vpop.f32.mrf.mxu0
        %v951 = vadd.f32 %v478, %v950
        %v952 = vpop.f32.mrf.mxu0
        %v953 = vadd.f32 %v483, %v952
        %954 = vmatmul.bf16.gmra.mxu0 %v646
        %v955 = vpop.f32.mrf.mxu0
        %v956 = vadd.f32 %v488, %v955
        %v957 = vpop.f32.mrf.mxu0
        %v958 = vadd.f32 %v493, %v957
        %959 = vmatmul.bf16.gmra.mxu0 %v647
        %v960 = vpop.f32.mrf.mxu0
        %v961 = vadd.f32 %v498, %v960
        %v962 = vpop.f32.mrf.mxu0
        %v963 = vadd.f32 %v503, %v962
        %964 = vmatmul.bf16.gmra.mxu0 %v648
        %v965 = vpop.f32.mrf.mxu0
        %v966 = vadd.f32 %v508, %v965
        %v967 = vpop.f32.mrf.mxu0
        %v968 = vadd.f32 %v513, %v967
        %969 = vmatmul.bf16.gmra.mxu0 %v649
        %v970 = vpop.f32.mrf.mxu0
        %v971 = vadd.f32 %v518, %v970
        %v972 = vpop.f32.mrf.mxu0
        %v973 = vadd.f32 %v523, %v972
        %974 = vmatmul.bf16.gmra.mxu0 %v650
        %v975 = vpop.f32.mrf.mxu0
        %v976 = vadd.f32 %v528, %v975
        %v977 = vpop.f32.mrf.mxu0
        %v978 = vadd.f32 %v533, %v977
        %979 = vmatmul.bf16.gmra.mxu0 %v651
        %v980 = vpop.f32.mrf.mxu0
        %v981 = vadd.f32 %v538, %v980
        %v982 = vpop.f32.mrf.mxu0
        %v983 = vadd.f32 %v543, %v982
        %984 = vmatmul.bf16.gmra.mxu0 %v652
        %v985 = vpop.f32.mrf.mxu0
        %v986 = vadd.f32 %v548, %v985
        %v987 = vpop.f32.mrf.mxu0
        %v988 = vadd.f32 %v553, %v987
        %989 = vmatmul.bf16.gmra.mxu0 %v653
        %v990 = vpop.f32.mrf.mxu0
        %v991 = vadd.f32 %v558, %v990
        %v992 = vpop.f32.mrf.mxu0
        %v993 = vadd.f32 %v563, %v992
        %994 = vmatmul.bf16.gmra.mxu0 %v654
        %v995 = vpop.f32.mrf.mxu0
        %v996 = vadd.f32 %v568, %v995
        %v997 = vpop.f32.mrf.mxu0
        %v998 = vadd.f32 %v573, %v997
        %999 = vdwg.mxu0
        %1000 = vmatpush.bf16.msra.mxu0 %v858
        %1001 = vmatpush.bf16.msra.mxu0 %v852
        %1002 = vmatpush.bf16.msra.mxu0 %v846
        %1003 = vmatpush.bf16.msra.mxu0 %v840
        %1004 = vmatpush.bf16.msra.mxu0 %v834
        %1005 = vmatpush.bf16.msra.mxu0 %v828
        %1006 = vmatpush.bf16.msra.mxu0 %v822
        %1007 = vmatpush.bf16.msra.mxu0 %v816
        %1008 = vmatmul.bf16.gmra.mxu0 %v639
        %v1009 = vpop.f32.mrf.mxu0
        %v1010 = vadd.f32 %v418, %v1009
        %v1011 = vpop.f32.mrf.mxu0
        %v1012 = vadd.f32 %v423, %v1011
        %1013 = vmatmul.bf16.gmra.mxu0 %v640
        %v1014 = vpop.f32.mrf.mxu0
        %v1015 = vadd.f32 %v428, %v1014
        %v1016 = vpop.f32.mrf.mxu0
        %v1017 = vadd.f32 %v433, %v1016
        %1018 = vmatmul.bf16.gmra.mxu0 %v641
        %v1019 = vpop.f32.mrf.mxu0
        %v1020 = vadd.f32 %v438, %v1019
        %v1021 = vpop.f32.mrf.mxu0
        %v1022 = vadd.f32 %v443, %v1021
        %1023 = vmatmul.bf16.gmra.mxu0 %v642
        %v1024 = vpop.f32.mrf.mxu0
        %v1025 = vadd.f32 %v448, %v1024
        %v1026 = vpop.f32.mrf.mxu0
        %v1027 = vadd.f32 %v453, %v1026
        %1028 = vmatmul.bf16.gmra.mxu0 %v643
        %v1029 = vpop.f32.mrf.mxu0
        %v1030 = vadd.f32 %v458, %v1029
        %v1031 = vpop.f32.mrf.mxu0
        %v1032 = vadd.f32 %v463, %v1031
        %1033 = vmatmul.bf16.gmra.mxu0 %v644
        %v1034 = vpop.f32.mrf.mxu0
        %v1035 = vadd.f32 %v468, %v1034
        %v1036 = vpop.f32.mrf.mxu0
        %v1037 = vadd.f32 %v473, %v1036
        %1038 = vmatmul.bf16.gmra.mxu0 %v645
        %v1039 = vpop.f32.mrf.mxu0
        %v1040 = vadd.f32 %v478, %v1039
        %v1041 = vpop.f32.mrf.mxu0
        %v1042 = vadd.f32 %v483, %v1041
        %1043 = vmatmul.bf16.gmra.mxu0 %v646
        %v1044 = vpop.f32.mrf.mxu0
        %v1045 = vadd.f32 %v488, %v1044
        %v1046 = vpop.f32.mrf.mxu0
        %v1047 = vadd.f32 %v493, %v1046
        %1048 = vmatmul.bf16.gmra.mxu0 %v647
        %v1049 = vpop.f32.mrf.mxu0
        %v1050 = vadd.f32 %v498, %v1049
        %v1051 = vpop.f32.mrf.mxu0
        %v1052 = vadd.f32 %v503, %v1051
        %1053 = vmatmul.bf16.gmra.mxu0 %v648
        %v1054 = vpop.f32.mrf.mxu0
        %v1055 = vadd.f32 %v508, %v1054
        %v1056 = vpop.f32.mrf.mxu0
        %v1057 = vadd.f32 %v513, %v1056
        %1058 = vmatmul.bf16.gmra.mxu0 %v649
        %v1059 = vpop.f32.mrf.mxu0
        %v1060 = vadd.f32 %v518, %v1059
        %v1061 = vpop.f32.mrf.mxu0
        %v1062 = vadd.f32 %v523, %v1061
        %1063 = vmatmul.bf16.gmra.mxu0 %v650
        %v1064 = vpop.f32.mrf.mxu0
        %v1065 = vadd.f32 %v528, %v1064
        %v1066 = vpop.f32.mrf.mxu0
        %v1067 = vadd.f32 %v533, %v1066
        %1068 = vmatmul.bf16.gmra.mxu0 %v651
        %v1069 = vpop.f32.mrf.mxu0
        %v1070 = vadd.f32 %v538, %v1069
        %v1071 = vpop.f32.mrf.mxu0
        %v1072 = vadd.f32 %v543, %v1071
        %1073 = vmatmul.bf16.gmra.mxu0 %v652
        %v1074 = vpop.f32.mrf.mxu0
        %v1075 = vadd.f32 %v548, %v1074
        %v1076 = vpop.f32.mrf.mxu0
        %v1077 = vadd.f32 %v553, %v1076
        %1078 = vmatmul.bf16.gmra.mxu0 %v653
        %v1079 = vpop.f32.mrf.mxu0
        %v1080 = vadd.f32 %v558, %v1079
        %v1081 = vpop.f32.mrf.mxu0
        %v1082 = vadd.f32 %v563, %v1081
        %1083 = vmatmul.bf16.gmra.mxu0 %v654
        %v1084 = vpop.f32.mrf.mxu0
        %v1085 = vadd.f32 %v568, %v1084
        %v1086 = vpop.f32.mrf.mxu0
        %v1087 = vadd.f32 %v573, %v1086
        %1088 = vdwg.mxu0
        %1089 = vmatpush.bf16.msra.mxu0 %v859
        %1090 = vmatpush.bf16.msra.mxu0 %v853
        %1091 = vmatpush.bf16.msra.mxu0 %v847
        %1092 = vmatpush.bf16.msra.mxu0 %v841
        %1093 = vmatpush.bf16.msra.mxu0 %v835
        %1094 = vmatpush.bf16.msra.mxu0 %v829
        %1095 = vmatpush.bf16.msra.mxu0 %v823
        %1096 = vmatpush.bf16.msra.mxu0 %v817
        %1097 = vmatmul.bf16.gmra.mxu0 %v639
        %v1098 = vpop.f32.mrf.mxu0
        %v1099 = vadd.f32 %v418, %v1098
        %v1100 = vpop.f32.mrf.mxu0
        %v1101 = vadd.f32 %v423, %v1100
        %1102 = vmatmul.bf16.gmra.mxu0 %v640
        %v1103 = vpop.f32.mrf.mxu0
        %v1104 = vadd.f32 %v428, %v1103
        %v1105 = vpop.f32.mrf.mxu0
        %v1106 = vadd.f32 %v433, %v1105
        %1107 = vmatmul.bf16.gmra.mxu0 %v641
        %v1108 = vpop.f32.mrf.mxu0
        %v1109 = vadd.f32 %v438, %v1108
        %v1110 = vpop.f32.mrf.mxu0
        %v1111 = vadd.f32 %v443, %v1110
        %1112 = vmatmul.bf16.gmra.mxu0 %v642
        %v1113 = vpop.f32.mrf.mxu0
        %v1114 = vadd.f32 %v448, %v1113
        %v1115 = vpop.f32.mrf.mxu0
        %v1116 = vadd.f32 %v453, %v1115
        %1117 = vmatmul.bf16.gmra.mxu0 %v643
        %v1118 = vpop.f32.mrf.mxu0
        %v1119 = vadd.f32 %v458, %v1118
        %v1120 = vpop.f32.mrf.mxu0
        %v1121 = vadd.f32 %v463, %v1120
        %1122 = vmatmul.bf16.gmra.mxu0 %v644
        %v1123 = vpop.f32.mrf.mxu0
        %v1124 = vadd.f32 %v468, %v1123
        %v1125 = vpop.f32.mrf.mxu0
        %v1126 = vadd.f32 %v473, %v1125
        %1127 = vmatmul.bf16.gmra.mxu0 %v645
        %v1128 = vpop.f32.mrf.mxu0
        %v1129 = vadd.f32 %v478, %v1128
        %v1130 = vpop.f32.mrf.mxu0
        %v1131 = vadd.f32 %v483, %v1130
        %1132 = vmatmul.bf16.gmra.mxu0 %v646
        %v1133 = vpop.f32.mrf.mxu0
        %v1134 = vadd.f32 %v488, %v1133
        %v1135 = vpop.f32.mrf.mxu0
        %v1136 = vadd.f32 %v493, %v1135
        %1137 = vmatmul.bf16.gmra.mxu0 %v647
        %v1138 = vpop.f32.mrf.mxu0
        %v1139 = vadd.f32 %v498, %v1138
        %v1140 = vpop.f32.mrf.mxu0
        %v1141 = vadd.f32 %v503, %v1140
        %1142 = vmatmul.bf16.gmra.mxu0 %v648
        %v1143 = vpop.f32.mrf.mxu0
        %v1144 = vadd.f32 %v508, %v1143
        %v1145 = vpop.f32.mrf.mxu0
        %v1146 = vadd.f32 %v513, %v1145
        %1147 = vmatmul.bf16.gmra.mxu0 %v649
        %v1148 = vpop.f32.mrf.mxu0
        %v1149 = vadd.f32 %v518, %v1148
        %v1150 = vpop.f32.mrf.mxu0
        %v1151 = vadd.f32 %v523, %v1150
        %1152 = vmatmul.bf16.gmra.mxu0 %v650
        %v1153 = vpop.f32.mrf.mxu0
        %v1154 = vadd.f32 %v528, %v1153
        %v1155 = vpop.f32.mrf.mxu0
        %v1156 = vadd.f32 %v533, %v1155
        %1157 = vmatmul.bf16.gmra.mxu0 %v651
        %v1158 = vpop.f32.mrf.mxu0
        %v1159 = vadd.f32 %v538, %v1158
        %v1160 = vpop.f32.mrf.mxu0
        %v1161 = vadd.f32 %v543, %v1160
        %1162 = vmatmul.bf16.gmra.mxu0 %v652
        %v1163 = vpop.f32.mrf.mxu0
        %v1164 = vadd.f32 %v548, %v1163
        %v1165 = vpop.f32.mrf.mxu0
        %v1166 = vadd.f32 %v553, %v1165
        %1167 = vmatmul.bf16.gmra.mxu0 %v653
        %v1168 = vpop.f32.mrf.mxu0
        %v1169 = vadd.f32 %v558, %v1168
        %v1170 = vpop.f32.mrf.mxu0
        %v1171 = vadd.f32 %v563, %v1170
        %1172 = vmatmul.bf16.gmra.mxu0 %v654
        %v1173 = vpop.f32.mrf.mxu0
        %v1174 = vadd.f32 %v568, %v1173
        %v1175 = vpop.f32.mrf.mxu0
        %v1176 = vadd.f32 %v573, %v1175
        %1177 = vdwg.mxu0
        %1178 = vmatpush.bf16.msra.mxu0 %v860
        %1179 = vmatpush.bf16.msra.mxu0 %v854
        %1180 = vmatpush.bf16.msra.mxu0 %v848
        %1181 = vmatpush.bf16.msra.mxu0 %v842
        %1182 = vmatpush.bf16.msra.mxu0 %v836
        %1183 = vmatpush.bf16.msra.mxu0 %v830
        %1184 = vmatpush.bf16.msra.mxu0 %v824
        %1185 = vmatpush.bf16.msra.mxu0 %v818
        %1186 = vmatmul.bf16.gmra.mxu0 %v639
        %v1187 = vpop.f32.mrf.mxu0
        %v1188 = vadd.f32 %v418, %v1187
        %v1189 = vpop.f32.mrf.mxu0
        %v1190 = vadd.f32 %v423, %v1189
        %1191 = vmatmul.bf16.gmra.mxu0 %v640
        %v1192 = vpop.f32.mrf.mxu0
        %v1193 = vadd.f32 %v428, %v1192
        %v1194 = vpop.f32.mrf.mxu0
        %v1195 = vadd.f32 %v433, %v1194
        %1196 = vmatmul.bf16.gmra.mxu0 %v641
        %v1197 = vpop.f32.mrf.mxu0
        %v1198 = vadd.f32 %v438, %v1197
        %v1199 = vpop.f32.mrf.mxu0
        %v1200 = vadd.f32 %v443, %v1199
        %1201 = vmatmul.bf16.gmra.mxu0 %v642
        %v1202 = vpop.f32.mrf.mxu0
        %v1203 = vadd.f32 %v448, %v1202
        %v1204 = vpop.f32.mrf.mxu0
        %v1205 = vadd.f32 %v453, %v1204
        %1206 = vmatmul.bf16.gmra.mxu0 %v643
        %v1207 = vpop.f32.mrf.mxu0
        %v1208 = vadd.f32 %v458, %v1207
        %v1209 = vpop.f32.mrf.mxu0
        %v1210 = vadd.f32 %v463, %v1209
        %1211 = vmatmul.bf16.gmra.mxu0 %v644
        %v1212 = vpop.f32.mrf.mxu0
        %v1213 = vadd.f32 %v468, %v1212
        %v1214 = vpop.f32.mrf.mxu0
        %v1215 = vadd.f32 %v473, %v1214
        %1216 = vmatmul.bf16.gmra.mxu0 %v645
        %v1217 = vpop.f32.mrf.mxu0
        %v1218 = vadd.f32 %v478, %v1217
        %v1219 = vpop.f32.mrf.mxu0
        %v1220 = vadd.f32 %v483, %v1219
        %1221 = vmatmul.bf16.gmra.mxu0 %v646
        %v1222 = vpop.f32.mrf.mxu0
        %v1223 = vadd.f32 %v488, %v1222
        %v1224 = vpop.f32.mrf.mxu0
        %v1225 = vadd.f32 %v493, %v1224
        %1226 = vmatmul.bf16.gmra.mxu0 %v647
        %v1227 = vpop.f32.mrf.mxu0
        %v1228 = vadd.f32 %v498, %v1227
        %v1229 = vpop.f32.mrf.mxu0
        %v1230 = vadd.f32 %v503, %v1229
        %1231 = vmatmul.bf16.gmra.mxu0 %v648
        %v1232 = vpop.f32.mrf.mxu0
        %v1233 = vadd.f32 %v508, %v1232
        %v1234 = vpop.f32.mrf.mxu0
        %v1235 = vadd.f32 %v513, %v1234
        %1236 = vmatmul.bf16.gmra.mxu0 %v649
        %v1237 = vpop.f32.mrf.mxu0
        %v1238 = vadd.f32 %v518, %v1237
        %v1239 = vpop.f32.mrf.mxu0
        %v1240 = vadd.f32 %v523, %v1239
        %1241 = vmatmul.bf16.gmra.mxu0 %v650
        %v1242 = vpop.f32.mrf.mxu0
        %v1243 = vadd.f32 %v528, %v1242
        %v1244 = vpop.f32.mrf.mxu0
        %v1245 = vadd.f32 %v533, %v1244
        %1246 = vmatmul.bf16.gmra.mxu0 %v651
        %v1247 = vpop.f32.mrf.mxu0
        %v1248 = vadd.f32 %v538, %v1247
        %v1249 = vpop.f32.mrf.mxu0
        %v1250 = vadd.f32 %v543, %v1249
        %1251 = vmatmul.bf16.gmra.mxu0 %v652
        %v1252 = vpop.f32.mrf.mxu0
        %v1253 = vadd.f32 %v548, %v1252
        %v1254 = vpop.f32.mrf.mxu0
        %v1255 = vadd.f32 %v553, %v1254
        %1256 = vmatmul.bf16.gmra.mxu0 %v653
        %v1257 = vpop.f32.mrf.mxu0
        %v1258 = vadd.f32 %v558, %v1257
        %v1259 = vpop.f32.mrf.mxu0
        %v1260 = vadd.f32 %v563, %v1259
        %1261 = vmatmul.bf16.gmra.mxu0 %v654
        %v1262 = vpop.f32.mrf.mxu0
        %v1263 = vadd.f32 %v568, %v1262
        %v1264 = vpop.f32.mrf.mxu0
        %v1265 = vadd.f32 %v573, %v1264
        %1266 = vdwg.mxu0
        %1267 = vmatpush.bf16.msra.mxu0 %v861
        %1268 = vmatpush.bf16.msra.mxu0 %v855
        %1269 = vmatpush.bf16.msra.mxu0 %v849
        %1270 = vmatpush.bf16.msra.mxu0 %v843
        %1271 = vmatpush.bf16.msra.mxu0 %v837
        %1272 = vmatpush.bf16.msra.mxu0 %v831
        %1273 = vmatpush.bf16.msra.mxu0 %v825
        %1274 = vmatpush.bf16.msra.mxu0 %v819
        %1275 = vmatmul.bf16.gmra.mxu0 %v639
        %v1276 = vpop.f32.mrf.mxu0
        %v1277 = vadd.f32 %v418, %v1276
        %v1278 = vpop.f32.mrf.mxu0
        %v1279 = vadd.f32 %v423, %v1278
        %1280 = vmatmul.bf16.gmra.mxu0 %v640
        %v1281 = vpop.f32.mrf.mxu0
        %v1282 = vadd.f32 %v428, %v1281
        %v1283 = vpop.f32.mrf.mxu0
        %v1284 = vadd.f32 %v433, %v1283
        %1285 = vmatmul.bf16.gmra.mxu0 %v641
        %v1286 = vpop.f32.mrf.mxu0
        %v1287 = vadd.f32 %v438, %v1286
        %v1288 = vpop.f32.mrf.mxu0
        %v1289 = vadd.f32 %v443, %v1288
        %1290 = vmatmul.bf16.gmra.mxu0 %v642
        %v1291 = vpop.f32.mrf.mxu0
        %v1292 = vadd.f32 %v448, %v1291
        %v1293 = vpop.f32.mrf.mxu0
        %v1294 = vadd.f32 %v453, %v1293
        %1295 = vmatmul.bf16.gmra.mxu0 %v643
        %v1296 = vpop.f32.mrf.mxu0
        %v1297 = vadd.f32 %v458, %v1296
        %v1298 = vpop.f32.mrf.mxu0
        %v1299 = vadd.f32 %v463, %v1298
        %1300 = vmatmul.bf16.gmra.mxu0 %v644
        %v1301 = vpop.f32.mrf.mxu0
        %v1302 = vadd.f32 %v468, %v1301
        %v1303 = vpop.f32.mrf.mxu0
        %v1304 = vadd.f32 %v473, %v1303
        %1305 = vmatmul.bf16.gmra.mxu0 %v645
        %v1306 = vpop.f32.mrf.mxu0
        %v1307 = vadd.f32 %v478, %v1306
        %v1308 = vpop.f32.mrf.mxu0
        %v1309 = vadd.f32 %v483, %v1308
        %1310 = vmatmul.bf16.gmra.mxu0 %v646
        %v1311 = vpop.f32.mrf.mxu0
        %v1312 = vadd.f32 %v488, %v1311
        %v1313 = vpop.f32.mrf.mxu0
        %v1314 = vadd.f32 %v493, %v1313
        %1315 = vmatmul.bf16.gmra.mxu0 %v647
        %v1316 = vpop.f32.mrf.mxu0
        %v1317 = vadd.f32 %v498, %v1316
        %v1318 = vpop.f32.mrf.mxu0
        %v1319 = vadd.f32 %v503, %v1318
        %1320 = vmatmul.bf16.gmra.mxu0 %v648
        %v1321 = vpop.f32.mrf.mxu0
        %v1322 = vadd.f32 %v508, %v1321
        %v1323 = vpop.f32.mrf.mxu0
        %v1324 = vadd.f32 %v513, %v1323
        %1325 = vmatmul.bf16.gmra.mxu0 %v649
        %v1326 = vpop.f32.mrf.mxu0
        %v1327 = vadd.f32 %v518, %v1326
        %v1328 = vpop.f32.mrf.mxu0
        %v1329 = vadd.f32 %v523, %v1328
        %1330 = vmatmul.bf16.gmra.mxu0 %v650
        %v1331 = vpop.f32.mrf.mxu0
        %v1332 = vadd.f32 %v528, %v1331
        %v1333 = vpop.f32.mrf.mxu0
        %v1334 = vadd.f32 %v533, %v1333
        %1335 = vmatmul.bf16.gmra.mxu0 %v651
        %v1336 = vpop.f32.mrf.mxu0
        %v1337 = vadd.f32 %v538, %v1336
        %v1338 = vpop.f32.mrf.mxu0
        %v1339 = vadd.f32 %v543, %v1338
        %1340 = vmatmul.bf16.gmra.mxu0 %v652
        %v1341 = vpop.f32.mrf.mxu0
        %v1342 = vadd.f32 %v548, %v1341
        %v1343 = vpop.f32.mrf.mxu0
        %v1344 = vadd.f32 %v553, %v1343
        %1345 = vmatmul.bf16.gmra.mxu0 %v653
        %v1346 = vpop.f32.mrf.mxu0
        %v1347 = vadd.f32 %v558, %v1346
        %v1348 = vpop.f32.mrf.mxu0
        %v1349 = vadd.f32 %v563, %v1348
        %1350 = vmatmul.bf16.gmra.mxu0 %v654
        %v1351 = vpop.f32.mrf.mxu0
        %v1352 = vadd.f32 %v568, %v1351
        %v1353 = vpop.f32.mrf.mxu0
        %v1354 = vadd.f32 %v573, %v1353
        %1355 = vdwg.mxu0
        %1356 = vmatpush.bf16.msra.mxu0 %v862
        %1357 = vmatpush.bf16.msra.mxu0 %v856
        %1358 = vmatpush.bf16.msra.mxu0 %v850
        %1359 = vmatpush.bf16.msra.mxu0 %v844
        %1360 = vmatpush.bf16.msra.mxu0 %v838
        %1361 = vmatpush.bf16.msra.mxu0 %v832
        %1362 = vmatpush.bf16.msra.mxu0 %v826
        %1363 = vmatpush.bf16.msra.mxu0 %v820
        %1364 = vmatmul.bf16.gmra.mxu0 %v639
        %v1365 = vpop.f32.mrf.mxu0
        %v1366 = vadd.f32 %v418, %v1365
        %v1367 = vpop.f32.mrf.mxu0
        %v1368 = vadd.f32 %v423, %v1367
        %1369 = vmatmul.bf16.gmra.mxu0 %v640
        %v1370 = vpop.f32.mrf.mxu0
        %v1371 = vadd.f32 %v428, %v1370
        %v1372 = vpop.f32.mrf.mxu0
        %v1373 = vadd.f32 %v433, %v1372
        %1374 = vmatmul.bf16.gmra.mxu0 %v641
        %v1375 = vpop.f32.mrf.mxu0
        %v1376 = vadd.f32 %v438, %v1375
        %v1377 = vpop.f32.mrf.mxu0
        %v1378 = vadd.f32 %v443, %v1377
        %1379 = vmatmul.bf16.gmra.mxu0 %v642
        %v1380 = vpop.f32.mrf.mxu0
        %v1381 = vadd.f32 %v448, %v1380
        %v1382 = vpop.f32.mrf.mxu0
        %v1383 = vadd.f32 %v453, %v1382
        %1384 = vmatmul.bf16.gmra.mxu0 %v643
        %v1385 = vpop.f32.mrf.mxu0
        %v1386 = vadd.f32 %v458, %v1385
        %v1387 = vpop.f32.mrf.mxu0
        %v1388 = vadd.f32 %v463, %v1387
        %1389 = vmatmul.bf16.gmra.mxu0 %v644
        %v1390 = vpop.f32.mrf.mxu0
        %v1391 = vadd.f32 %v468, %v1390
        %v1392 = vpop.f32.mrf.mxu0
        %v1393 = vadd.f32 %v473, %v1392
        %1394 = vmatmul.bf16.gmra.mxu0 %v645
        %v1395 = vpop.f32.mrf.mxu0
        %v1396 = vadd.f32 %v478, %v1395
        %v1397 = vpop.f32.mrf.mxu0
        %v1398 = vadd.f32 %v483, %v1397
        %1399 = vmatmul.bf16.gmra.mxu0 %v646
        %v1400 = vpop.f32.mrf.mxu0
        %v1401 = vadd.f32 %v488, %v1400
        %v1402 = vpop.f32.mrf.mxu0
        %v1403 = vadd.f32 %v493, %v1402
        %1404 = vmatmul.bf16.gmra.mxu0 %v647
        %v1405 = vpop.f32.mrf.mxu0
        %v1406 = vadd.f32 %v498, %v1405
        %v1407 = vpop.f32.mrf.mxu0
        %v1408 = vadd.f32 %v503, %v1407
        %1409 = vmatmul.bf16.gmra.mxu0 %v648
        %v1410 = vpop.f32.mrf.mxu0
        %v1411 = vadd.f32 %v508, %v1410
        %v1412 = vpop.f32.mrf.mxu0
        %v1413 = vadd.f32 %v513, %v1412
        %1414 = vmatmul.bf16.gmra.mxu0 %v649
        %v1415 = vpop.f32.mrf.mxu0
        %v1416 = vadd.f32 %v518, %v1415
        %v1417 = vpop.f32.mrf.mxu0
        %v1418 = vadd.f32 %v523, %v1417
        %1419 = vmatmul.bf16.gmra.mxu0 %v650
        %v1420 = vpop.f32.mrf.mxu0
        %v1421 = vadd.f32 %v528, %v1420
        %v1422 = vpop.f32.mrf.mxu0
        %v1423 = vadd.f32 %v533, %v1422
        %1424 = vmatmul.bf16.gmra.mxu0 %v651
        %v1425 = vpop.f32.mrf.mxu0
        %v1426 = vadd.f32 %v538, %v1425
        %v1427 = vpop.f32.mrf.mxu0
        %v1428 = vadd.f32 %v543, %v1427
        %1429 = vmatmul.bf16.gmra.mxu0 %v652
        %v1430 = vpop.f32.mrf.mxu0
        %v1431 = vadd.f32 %v548, %v1430
        %v1432 = vpop.f32.mrf.mxu0
        %v1433 = vadd.f32 %v553, %v1432
        %1434 = vmatmul.bf16.gmra.mxu0 %v653
        %v1435 = vpop.f32.mrf.mxu0
        %v1436 = vadd.f32 %v558, %v1435
        %v1437 = vpop.f32.mrf.mxu0
        %v1438 = vadd.f32 %v563, %v1437
        %1439 = vmatmul.bf16.gmra.mxu0 %v654
        %v1440 = vpop.f32.mrf.mxu0
        %v1441 = vadd.f32 %v568, %v1440
        %v1442 = vpop.f32.mrf.mxu0
        %v1443 = vadd.f32 %v573, %v1442
        %1444 = vdwg.mxu0
        %v1445 = vmax.f32 %v921, 0.0
        %v1446 = vmax.f32 %v1010, 0.0
        %v1447 = vmax.f32 %v1099, 0.0
        %v1448 = vmax.f32 %v1188, 0.0
        %v1449 = vmax.f32 %v1277, 0.0
        %v1450 = vmax.f32 %v1366, 0.0
        %v1451 = vmax.f32 %v923, 0.0
        %v1452 = vmax.f32 %v1012, 0.0
        %v1453 = vmax.f32 %v1101, 0.0
        %v1454 = vmax.f32 %v1190, 0.0
        %v1455 = vmax.f32 %v1279, 0.0
        %v1456 = vmax.f32 %v1368, 0.0
        %v1457 = vmax.f32 %v926, 0.0
        %v1458 = vmax.f32 %v1015, 0.0
        %v1459 = vmax.f32 %v1104, 0.0
        %v1460 = vmax.f32 %v1193, 0.0
        %v1461 = vmax.f32 %v1282, 0.0
        %v1462 = vmax.f32 %v1371, 0.0
        %v1463 = vmax.f32 %v928, 0.0
        %v1464 = vmax.f32 %v1017, 0.0
        %v1465 = vmax.f32 %v1106, 0.0
        %v1466 = vmax.f32 %v1195, 0.0
        %v1467 = vmax.f32 %v1284, 0.0
        %v1468 = vmax.f32 %v1373, 0.0
        %v1469 = vmax.f32 %v931, 0.0
        %v1470 = vmax.f32 %v1020, 0.0
        %v1471 = vmax.f32 %v1109, 0.0
        %v1472 = vmax.f32 %v1198, 0.0
        %v1473 = vmax.f32 %v1287, 0.0
        %v1474 = vmax.f32 %v1376, 0.0
        %v1475 = vmax.f32 %v933, 0.0
        %v1476 = vmax.f32 %v1022, 0.0
        %v1477 = vmax.f32 %v1111, 0.0
        %v1478 = vmax.f32 %v1200, 0.0
        %v1479 = vmax.f32 %v1289, 0.0
        %v1480 = vmax.f32 %v1378, 0.0
        %v1481 = vmax.f32 %v936, 0.0
        %v1482 = vmax.f32 %v1025, 0.0
        %v1483 = vmax.f32 %v1114, 0.0
        %v1484 = vmax.f32 %v1203, 0.0
        %v1485 = vmax.f32 %v1292, 0.0
        %v1486 = vmax.f32 %v1381, 0.0
        %v1487 = vmax.f32 %v938, 0.0
        %v1488 = vmax.f32 %v1027, 0.0
        %v1489 = vmax.f32 %v1116, 0.0
        %v1490 = vmax.f32 %v1205, 0.0
        %v1491 = vmax.f32 %v1294, 0.0
        %v1492 = vmax.f32 %v1383, 0.0
        %v1493 = vmax.f32 %v941, 0.0
        %v1494 = vmax.f32 %v1030, 0.0
        %v1495 = vmax.f32 %v1119, 0.0
        %v1496 = vmax.f32 %v1208, 0.0
        %v1497 = vmax.f32 %v1297, 0.0
        %v1498 = vmax.f32 %v1386, 0.0
        %v1499 = vmax.f32 %v943, 0.0
        %v1500 = vmax.f32 %v1032, 0.0
        %v1501 = vmax.f32 %v1121, 0.0
        %v1502 = vmax.f32 %v1210, 0.0
        %v1503 = vmax.f32 %v1299, 0.0
        %v1504 = vmax.f32 %v1388, 0.0
        %v1505 = vmax.f32 %v946, 0.0
        %v1506 = vmax.f32 %v1035, 0.0
        %v1507 = vmax.f32 %v1124, 0.0
        %v1508 = vmax.f32 %v1213, 0.0
        %v1509 = vmax.f32 %v1302, 0.0
        %v1510 = vmax.f32 %v1391, 0.0
        %v1511 = vmax.f32 %v948, 0.0
        %v1512 = vmax.f32 %v1037, 0.0
        %v1513 = vmax.f32 %v1126, 0.0
        %v1514 = vmax.f32 %v1215, 0.0
        %v1515 = vmax.f32 %v1304, 0.0
        %v1516 = vmax.f32 %v1393, 0.0
        %v1517 = vmax.f32 %v951, 0.0
        %v1518 = vmax.f32 %v1040, 0.0
        %v1519 = vmax.f32 %v1129, 0.0
        %v1520 = vmax.f32 %v1218, 0.0
        %v1521 = vmax.f32 %v1307, 0.0
        %v1522 = vmax.f32 %v1396, 0.0
        %v1523 = vmax.f32 %v953, 0.0
        %v1524 = vmax.f32 %v1042, 0.0
        %v1525 = vmax.f32 %v1131, 0.0
        %v1526 = vmax.f32 %v1220, 0.0
        %v1527 = vmax.f32 %v1309, 0.0
        %v1528 = vmax.f32 %v1398, 0.0
        %v1529 = vmax.f32 %v956, 0.0
        %v1530 = vmax.f32 %v1045, 0.0
        %v1531 = vmax.f32 %v1134, 0.0
        %v1532 = vmax.f32 %v1223, 0.0
        %v1533 = vmax.f32 %v1312, 0.0
        %v1534 = vmax.f32 %v1401, 0.0
        %v1535 = vmax.f32 %v958, 0.0
        %v1536 = vmax.f32 %v1047, 0.0
        %v1537 = vmax.f32 %v1136, 0.0
        %v1538 = vmax.f32 %v1225, 0.0
        %v1539 = vmax.f32 %v1314, 0.0
        %v1540 = vmax.f32 %v1403, 0.0
        %v1541 = vmax.f32 %v961, 0.0
        %v1542 = vmax.f32 %v1050, 0.0
        %v1543 = vmax.f32 %v1139, 0.0
        %v1544 = vmax.f32 %v1228, 0.0
        %v1545 = vmax.f32 %v1317, 0.0
        %v1546 = vmax.f32 %v1406, 0.0
        %v1547 = vmax.f32 %v963, 0.0
        %v1548 = vmax.f32 %v1052, 0.0
        %v1549 = vmax.f32 %v1141, 0.0
        %v1550 = vmax.f32 %v1230, 0.0
        %v1551 = vmax.f32 %v1319, 0.0
        %v1552 = vmax.f32 %v1408, 0.0
        %v1553 = vmax.f32 %v966, 0.0
        %v1554 = vmax.f32 %v1055, 0.0
        %v1555 = vmax.f32 %v1144, 0.0
        %v1556 = vmax.f32 %v1233, 0.0
        %v1557 = vmax.f32 %v1322, 0.0
        %v1558 = vmax.f32 %v1411, 0.0
        %v1559 = vmax.f32 %v968, 0.0
        %v1560 = vmax.f32 %v1057, 0.0
        %v1561 = vmax.f32 %v1146, 0.0
        %v1562 = vmax.f32 %v1235, 0.0
        %v1563 = vmax.f32 %v1324, 0.0
        %v1564 = vmax.f32 %v1413, 0.0
        %v1565 = vmax.f32 %v971, 0.0
        %v1566 = vmax.f32 %v1060, 0.0
        %v1567 = vmax.f32 %v1149, 0.0
        %v1568 = vmax.f32 %v1238, 0.0
        %v1569 = vmax.f32 %v1327, 0.0
        %v1570 = vmax.f32 %v1416, 0.0
        %v1571 = vmax.f32 %v973, 0.0
        %v1572 = vmax.f32 %v1062, 0.0
        %v1573 = vmax.f32 %v1151, 0.0
        %v1574 = vmax.f32 %v1240, 0.0
        %v1575 = vmax.f32 %v1329, 0.0
        %v1576 = vmax.f32 %v1418, 0.0
        %v1577 = vmax.f32 %v976, 0.0
        %v1578 = vmax.f32 %v1065, 0.0
        %v1579 = vmax.f32 %v1154, 0.0
        %v1580 = vmax.f32 %v1243, 0.0
        %v1581 = vmax.f32 %v1332, 0.0
        %v1582 = vmax.f32 %v1421, 0.0
        %v1583 = vmax.f32 %v978, 0.0
        %v1584 = vmax.f32 %v1067, 0.0
        %v1585 = vmax.f32 %v1156, 0.0
        %v1586 = vmax.f32 %v1245, 0.0
        %v1587 = vmax.f32 %v1334, 0.0
        %v1588 = vmax.f32 %v1423, 0.0
        %v1589 = vmax.f32 %v981, 0.0
        %v1590 = vmax.f32 %v1070, 0.0
        %v1591 = vmax.f32 %v1159, 0.0
        %v1592 = vmax.f32 %v1248, 0.0
        %v1593 = vmax.f32 %v1337, 0.0
        %v1594 = vmax.f32 %v1426, 0.0
        %v1595 = vmax.f32 %v983, 0.0
        %v1596 = vmax.f32 %v1072, 0.0
        %v1597 = vmax.f32 %v1161, 0.0
        %v1598 = vmax.f32 %v1250, 0.0
        %v1599 = vmax.f32 %v1339, 0.0
        %v1600 = vmax.f32 %v1428, 0.0
        %v1601 = vmax.f32 %v986, 0.0
        %v1602 = vmax.f32 %v1075, 0.0
        %v1603 = vmax.f32 %v1164, 0.0
        %v1604 = vmax.f32 %v1253, 0.0
        %v1605 = vmax.f32 %v1342, 0.0
        %v1606 = vmax.f32 %v1431, 0.0
        %v1607 = vmax.f32 %v988, 0.0
        %v1608 = vmax.f32 %v1077, 0.0
        %v1609 = vmax.f32 %v1166, 0.0
        %v1610 = vmax.f32 %v1255, 0.0
        %v1611 = vmax.f32 %v1344, 0.0
        %v1612 = vmax.f32 %v1433, 0.0
        %v1613 = vmax.f32 %v991, 0.0
        %v1614 = vmax.f32 %v1080, 0.0
        %v1615 = vmax.f32 %v1169, 0.0
        %v1616 = vmax.f32 %v1258, 0.0
        %v1617 = vmax.f32 %v1347, 0.0
        %v1618 = vmax.f32 %v1436, 0.0
        %v1619 = vmax.f32 %v993, 0.0
        %v1620 = vmax.f32 %v1082, 0.0
        %v1621 = vmax.f32 %v1171, 0.0
        %v1622 = vmax.f32 %v1260, 0.0
        %v1623 = vmax.f32 %v1349, 0.0
        %v1624 = vmax.f32 %v1438, 0.0
        %v1625 = vmax.f32 %v996, 0.0
        %v1626 = vmax.f32 %v1085, 0.0
        %v1627 = vmax.f32 %v1174, 0.0
        %v1628 = vmax.f32 %v1263, 0.0
        %v1629 = vmax.f32 %v1352, 0.0
        %v1630 = vmax.f32 %v1441, 0.0
        %v1631 = vmax.f32 %v998, 0.0
        %v1632 = vmax.f32 %v1087, 0.0
        %v1633 = vmax.f32 %v1176, 0.0
        %v1634 = vmax.f32 %v1265, 0.0
        %v1635 = vmax.f32 %v1354, 0.0
        %v1636 = vmax.f32 %v1443, 0.0
        %v1637 = vpack.c.bf16 %v1451, %v1445
        %v1638 = vpack.c.bf16 %v1452, %v1446
        %v1639 = vpack.c.bf16 %v1453, %v1447
        %v1640 = vpack.c.bf16 %v1454, %v1448
        %v1641 = vpack.c.bf16 %v1455, %v1449
        %v1642 = vpack.c.bf16 %v1456, %v1450
        %v1643 = vpack.c.bf16 %v1463, %v1457
        %v1644 = vpack.c.bf16 %v1464, %v1458
        %v1645 = vpack.c.bf16 %v1465, %v1459
        %v1646 = vpack.c.bf16 %v1466, %v1460
        %v1647 = vpack.c.bf16 %v1467, %v1461
        %v1648 = vpack.c.bf16 %v1468, %v1462
        %v1649 = vpack.c.bf16 %v1475, %v1469
        %v1650 = vpack.c.bf16 %v1476, %v1470
        %v1651 = vpack.c.bf16 %v1477, %v1471
        %v1652 = vpack.c.bf16 %v1478, %v1472
        %v1653 = vpack.c.bf16 %v1479, %v1473
        %v1654 = vpack.c.bf16 %v1480, %v1474
        %v1655 = vpack.c.bf16 %v1487, %v1481
        %v1656 = vpack.c.bf16 %v1488, %v1482
        %v1657 = vpack.c.bf16 %v1489, %v1483
        %v1658 = vpack.c.bf16 %v1490, %v1484
        %v1659 = vpack.c.bf16 %v1491, %v1485
        %v1660 = vpack.c.bf16 %v1492, %v1486
        %v1661 = vpack.c.bf16 %v1499, %v1493
        %v1662 = vpack.c.bf16 %v1500, %v1494
        %v1663 = vpack.c.bf16 %v1501, %v1495
        %v1664 = vpack.c.bf16 %v1502, %v1496
        %v1665 = vpack.c.bf16 %v1503, %v1497
        %v1666 = vpack.c.bf16 %v1504, %v1498
        %v1667 = vpack.c.bf16 %v1511, %v1505
        %v1668 = vpack.c.bf16 %v1512, %v1506
        %v1669 = vpack.c.bf16 %v1513, %v1507
        %v1670 = vpack.c.bf16 %v1514, %v1508
        %v1671 = vpack.c.bf16 %v1515, %v1509
        %v1672 = vpack.c.bf16 %v1516, %v1510
        %v1673 = vpack.c.bf16 %v1523, %v1517
        %v1674 = vpack.c.bf16 %v1524, %v1518
        %v1675 = vpack.c.bf16 %v1525, %v1519
        %v1676 = vpack.c.bf16 %v1526, %v1520
        %v1677 = vpack.c.bf16 %v1527, %v1521
        %v1678 = vpack.c.bf16 %v1528, %v1522
        %v1679 = vpack.c.bf16 %v1535, %v1529
        %v1680 = vpack.c.bf16 %v1536, %v1530
        %v1681 = vpack.c.bf16 %v1537, %v1531
        %v1682 = vpack.c.bf16 %v1538, %v1532
        %v1683 = vpack.c.bf16 %v1539, %v1533
        %v1684 = vpack.c.bf16 %v1540, %v1534
        %v1685 = vpack.c.bf16 %v1547, %v1541
        %v1686 = vpack.c.bf16 %v1548, %v1542
        %v1687 = vpack.c.bf16 %v1549, %v1543
        %v1688 = vpack.c.bf16 %v1550, %v1544
        %v1689 = vpack.c.bf16 %v1551, %v1545
        %v1690 = vpack.c.bf16 %v1552, %v1546
        %v1691 = vpack.c.bf16 %v1559, %v1553
        %v1692 = vpack.c.bf16 %v1560, %v1554
        %v1693 = vpack.c.bf16 %v1561, %v1555
        %v1694 = vpack.c.bf16 %v1562, %v1556
        %v1695 = vpack.c.bf16 %v1563, %v1557
        %v1696 = vpack.c.bf16 %v1564, %v1558
        %v1697 = vpack.c.bf16 %v1571, %v1565
        %v1698 = vpack.c.bf16 %v1572, %v1566
        %v1699 = vpack.c.bf16 %v1573, %v1567
        %v1700 = vpack.c.bf16 %v1574, %v1568
        %v1701 = vpack.c.bf16 %v1575, %v1569
        %v1702 = vpack.c.bf16 %v1576, %v1570
        %v1703 = vpack.c.bf16 %v1583, %v1577
        %v1704 = vpack.c.bf16 %v1584, %v1578
        %v1705 = vpack.c.bf16 %v1585, %v1579
        %v1706 = vpack.c.bf16 %v1586, %v1580
        %v1707 = vpack.c.bf16 %v1587, %v1581
        %v1708 = vpack.c.bf16 %v1588, %v1582
        %v1709 = vpack.c.bf16 %v1595, %v1589
        %v1710 = vpack.c.bf16 %v1596, %v1590
        %v1711 = vpack.c.bf16 %v1597, %v1591
        %v1712 = vpack.c.bf16 %v1598, %v1592
        %v1713 = vpack.c.bf16 %v1599, %v1593
        %v1714 = vpack.c.bf16 %v1600, %v1594
        %v1715 = vpack.c.bf16 %v1607, %v1601
        %v1716 = vpack.c.bf16 %v1608, %v1602
        %v1717 = vpack.c.bf16 %v1609, %v1603
        %v1718 = vpack.c.bf16 %v1610, %v1604
        %v1719 = vpack.c.bf16 %v1611, %v1605
        %v1720 = vpack.c.bf16 %v1612, %v1606
        %v1721 = vpack.c.bf16 %v1619, %v1613
        %v1722 = vpack.c.bf16 %v1620, %v1614
        %v1723 = vpack.c.bf16 %v1621, %v1615
        %v1724 = vpack.c.bf16 %v1622, %v1616
        %v1725 = vpack.c.bf16 %v1623, %v1617
        %v1726 = vpack.c.bf16 %v1624, %v1618
        %v1727 = vpack.c.bf16 %v1631, %v1625
        %v1728 = vpack.c.bf16 %v1632, %v1626
        %v1729 = vpack.c.bf16 %v1633, %v1627
        %v1730 = vpack.c.bf16 %v1634, %v1628
        %v1731 = vpack.c.bf16 %v1635, %v1629
        %v1732 = vpack.c.bf16 %v1636, %v1630
        %v1733 = vld [vmem:[%s3] sm:$0xff]
        %v1734 = vld [vmem:[%s3 + $0x8] sm:$0xff]
        %v1735 = vld [vmem:[%s3 + $0x10] sm:$0xff]
        %v1736 = vld [vmem:[%s3 + $0x18] sm:$0xff]
        %v1737 = vld [vmem:[%s3 + $0x20] sm:$0xff]
        %v1738 = vld [vmem:[%s3 + $0x28] sm:$0xff]
        %v1739 = vld [vmem:[%s3 + $0x30] sm:$0xff]
        %v1740 = vld [vmem:[%s3 + $0x38] sm:$0xff]
        %v1741 = vld [vmem:[%s3 + $0x40] sm:$0xff]
        %v1742 = vld [vmem:[%s3 + $0x48] sm:$0xff]
        %v1743 = vld [vmem:[%s3 + $0x50] sm:$0xff]
        %v1744 = vld [vmem:[%s3 + $0x58] sm:$0xff]
        %v1745 = vld [vmem:[%s3 + $0x60] sm:$0xff]
        %v1746 = vld [vmem:[%s3 + $0x68] sm:$0xff]
        %v1747 = vld [vmem:[%s3 + $0x70] sm:$0xff]
        %v1748 = vld [vmem:[%s3 + $0x78] sm:$0xff]
        %v1749 = vld [vmem:[%s3 + $0x80] sm:$0xff]
        %v1750 = vld [vmem:[%s3 + $0x88] sm:$0xff]
        %v1751 = vld [vmem:[%s3 + $0x90] sm:$0xff]
        %v1752 = vld [vmem:[%s3 + $0x98] sm:$0xff]
        %v1753 = vld [vmem:[%s3 + $0xa0] sm:$0xff]
        %v1754 = vld [vmem:[%s3 + $0xa8] sm:$0xff]
        %v1755 = vld [vmem:[%s3 + $0xb0] sm:$0xff]
        %v1756 = vld [vmem:[%s3 + $0xb8] sm:$0xff]
        %v1757 = vld [vmem:[%s3 + $0xc0] sm:$0xff]
        %v1758 = vld [vmem:[%s3 + $0xc8] sm:$0xff]
        %v1759 = vld [vmem:[%s3 + $0xd0] sm:$0xff]
        %v1760 = vld [vmem:[%s3 + $0xd8] sm:$0xff]
        %v1761 = vld [vmem:[%s3 + $0xe0] sm:$0xff]
        %v1762 = vld [vmem:[%s3 + $0xe8] sm:$0xff]
        %v1763 = vld [vmem:[%s3 + $0xf0] sm:$0xff]
        %v1764 = vld [vmem:[%s3 + $0xf8] sm:$0xff]
        %v1765 = vld [vmem:[%s4] sm:$0xff]
        %v1766 = vld [vmem:[%s4 + $0x8] sm:$0xff]
        %v1767 = vld [vmem:[%s4 + $0x10] sm:$0xff]
        %v1768 = vld [vmem:[%s4 + $0x18] sm:$0xff]
        %v1769 = vld [vmem:[%s4 + $0x20] sm:$0xff]
        %v1770 = vld [vmem:[%s4 + $0x28] sm:$0xff]
        %v1771 = vld [vmem:[%s4 + $0x30] sm:$0xff]
        %v1772 = vld [vmem:[%s4 + $0x38] sm:$0xff]
        %v1773 = vld [vmem:[%s4 + $0x40] sm:$0xff]
        %v1774 = vld [vmem:[%s4 + $0x48] sm:$0xff]
        %v1775 = vld [vmem:[%s4 + $0x50] sm:$0xff]
        %v1776 = vld [vmem:[%s4 + $0x58] sm:$0xff]
        %v1777 = vld [vmem:[%s4 + $0x60] sm:$0xff]
        %v1778 = vld [vmem:[%s4 + $0x68] sm:$0xff]
        %v1779 = vld [vmem:[%s4 + $0x70] sm:$0xff]
        %v1780 = vld [vmem:[%s4 + $0x78] sm:$0xff]
        %v1781 = vld [vmem:[%s4 + $0x80] sm:$0xff]
        %v1782 = vld [vmem:[%s4 + $0x88] sm:$0xff]
        %v1783 = vld [vmem:[%s4 + $0x90] sm:$0xff]
        %v1784 = vld [vmem:[%s4 + $0x98] sm:$0xff]
        %v1785 = vld [vmem:[%s4 + $0xa0] sm:$0xff]
        %v1786 = vld [vmem:[%s4 + $0xa8] sm:$0xff]
        %v1787 = vld [vmem:[%s4 + $0xb0] sm:$0xff]
        %v1788 = vld [vmem:[%s4 + $0xb8] sm:$0xff]
        %v1789 = vld [vmem:[%s4 + $0xc0] sm:$0xff]
        %v1790 = vld [vmem:[%s4 + $0xc8] sm:$0xff]
        %v1791 = vld [vmem:[%s4 + $0xd0] sm:$0xff]
        %v1792 = vld [vmem:[%s4 + $0xd8] sm:$0xff]
        %v1793 = vld [vmem:[%s4 + $0xe0] sm:$0xff]
        %v1794 = vld [vmem:[%s4 + $0xe8] sm:$0xff]
        %v1795 = vld [vmem:[%s4 + $0xf0] sm:$0xff]
        %v1796 = vld [vmem:[%s4 + $0xf8] sm:$0xff]
        %1798 = vset.pattern.permute.xlu0 0
        %1799 = vperm.xlu0 %1798, %v1765
        %v1800 = vpop.permute.xlu0 %1799
        %1803 = vset.pattern.permute.xlu0 0
        %1804 = vperm.xlu0 %1803, %v1766
        %v1805 = vpop.permute.xlu0 %1804
        %1808 = vset.pattern.permute.xlu0 0
        %1809 = vperm.xlu0 %1808, %v1767
        %v1810 = vpop.permute.xlu0 %1809
        %1813 = vset.pattern.permute.xlu0 0
        %1814 = vperm.xlu0 %1813, %v1768
        %v1815 = vpop.permute.xlu0 %1814
        %1818 = vset.pattern.permute.xlu0 0
        %1819 = vperm.xlu0 %1818, %v1769
        %v1820 = vpop.permute.xlu0 %1819
        %1823 = vset.pattern.permute.xlu0 0
        %1824 = vperm.xlu0 %1823, %v1770
        %v1825 = vpop.permute.xlu0 %1824
        %1828 = vset.pattern.permute.xlu0 0
        %1829 = vperm.xlu0 %1828, %v1771
        %v1830 = vpop.permute.xlu0 %1829
        %1833 = vset.pattern.permute.xlu0 0
        %1834 = vperm.xlu0 %1833, %v1772
        %v1835 = vpop.permute.xlu0 %1834
        %1838 = vset.pattern.permute.xlu0 0
        %1839 = vperm.xlu0 %1838, %v1773
        %v1840 = vpop.permute.xlu0 %1839
        %1843 = vset.pattern.permute.xlu0 0
        %1844 = vperm.xlu0 %1843, %v1774
        %v1845 = vpop.permute.xlu0 %1844
        %1848 = vset.pattern.permute.xlu0 0
        %1849 = vperm.xlu0 %1848, %v1775
        %v1850 = vpop.permute.xlu0 %1849
        %1853 = vset.pattern.permute.xlu0 0
        %1854 = vperm.xlu0 %1853, %v1776
        %v1855 = vpop.permute.xlu0 %1854
        %1858 = vset.pattern.permute.xlu0 0
        %1859 = vperm.xlu0 %1858, %v1777
        %v1860 = vpop.permute.xlu0 %1859
        %1863 = vset.pattern.permute.xlu0 0
        %1864 = vperm.xlu0 %1863, %v1778
        %v1865 = vpop.permute.xlu0 %1864
        %1868 = vset.pattern.permute.xlu0 0
        %1869 = vperm.xlu0 %1868, %v1779
        %v1870 = vpop.permute.xlu0 %1869
        %1873 = vset.pattern.permute.xlu0 0
        %1874 = vperm.xlu0 %1873, %v1780
        %v1875 = vpop.permute.xlu0 %1874
        %1878 = vset.pattern.permute.xlu0 0
        %1879 = vperm.xlu0 %1878, %v1781
        %v1880 = vpop.permute.xlu0 %1879
        %1883 = vset.pattern.permute.xlu0 0
        %1884 = vperm.xlu0 %1883, %v1782
        %v1885 = vpop.permute.xlu0 %1884
        %1888 = vset.pattern.permute.xlu0 0
        %1889 = vperm.xlu0 %1888, %v1783
        %v1890 = vpop.permute.xlu0 %1889
        %1893 = vset.pattern.permute.xlu0 0
        %1894 = vperm.xlu0 %1893, %v1784
        %v1895 = vpop.permute.xlu0 %1894
        %1898 = vset.pattern.permute.xlu0 0
        %1899 = vperm.xlu0 %1898, %v1785
        %v1900 = vpop.permute.xlu0 %1899
        %1903 = vset.pattern.permute.xlu0 0
        %1904 = vperm.xlu0 %1903, %v1786
        %v1905 = vpop.permute.xlu0 %1904
        %1908 = vset.pattern.permute.xlu0 0
        %1909 = vperm.xlu0 %1908, %v1787
        %v1910 = vpop.permute.xlu0 %1909
        %1913 = vset.pattern.permute.xlu0 0
        %1914 = vperm.xlu0 %1913, %v1788
        %v1915 = vpop.permute.xlu0 %1914
        %1918 = vset.pattern.permute.xlu0 0
        %1919 = vperm.xlu0 %1918, %v1789
        %v1920 = vpop.permute.xlu0 %1919
        %1923 = vset.pattern.permute.xlu0 0
        %1924 = vperm.xlu0 %1923, %v1790
        %v1925 = vpop.permute.xlu0 %1924
        %1928 = vset.pattern.permute.xlu0 0
        %1929 = vperm.xlu0 %1928, %v1791
        %v1930 = vpop.permute.xlu0 %1929
        %1933 = vset.pattern.permute.xlu0 0
        %1934 = vperm.xlu0 %1933, %v1792
        %v1935 = vpop.permute.xlu0 %1934
        %1938 = vset.pattern.permute.xlu0 0
        %1939 = vperm.xlu0 %1938, %v1793
        %v1940 = vpop.permute.xlu0 %1939
        %1943 = vset.pattern.permute.xlu0 0
        %1944 = vperm.xlu0 %1943, %v1794
        %v1945 = vpop.permute.xlu0 %1944
        %1948 = vset.pattern.permute.xlu0 0
        %1949 = vperm.xlu0 %1948, %v1795
        %v1950 = vpop.permute.xlu0 %1949
        %1953 = vset.pattern.permute.xlu0 0
        %1954 = vperm.xlu0 %1953, %v1796
        %v1955 = vpop.permute.xlu0 %1954
        %v1989 = vunpack.c.l.b16 %v1733
        %v1990 = vunpack.c.h.b16 %v1733
        %v1991 = vunpack.c.l.b16 %v1734
        %v1992 = vunpack.c.h.b16 %v1734
        %v1993 = vunpack.c.l.b16 %v1735
        %v1994 = vunpack.c.h.b16 %v1735
        %v1995 = vunpack.c.l.b16 %v1736
        %v1996 = vunpack.c.h.b16 %v1736
        %v1997 = vunpack.c.l.b16 %v1737
        %v1998 = vunpack.c.h.b16 %v1737
        %v1999 = vunpack.c.l.b16 %v1738
        %v2000 = vunpack.c.h.b16 %v1738
        %v2001 = vunpack.c.l.b16 %v1739
        %v2002 = vunpack.c.h.b16 %v1739
        %v2003 = vunpack.c.l.b16 %v1740
        %v2004 = vunpack.c.h.b16 %v1740
        %v2005 = vunpack.c.l.b16 %v1741
        %v2006 = vunpack.c.h.b16 %v1741
        %v2007 = vunpack.c.l.b16 %v1742
        %v2008 = vunpack.c.h.b16 %v1742
        %v2009 = vunpack.c.l.b16 %v1743
        %v2010 = vunpack.c.h.b16 %v1743
        %v2011 = vunpack.c.l.b16 %v1744
        %v2012 = vunpack.c.h.b16 %v1744
        %v2013 = vunpack.c.l.b16 %v1745
        %v2014 = vunpack.c.h.b16 %v1745
        %v2015 = vunpack.c.l.b16 %v1746
        %v2016 = vunpack.c.h.b16 %v1746
        %v2017 = vunpack.c.l.b16 %v1747
        %v2018 = vunpack.c.h.b16 %v1747
        %v2019 = vunpack.c.l.b16 %v1748
        %v2020 = vunpack.c.h.b16 %v1748
        %v2021 = vunpack.c.l.b16 %v1749
        %v2022 = vunpack.c.h.b16 %v1749
        %v2023 = vunpack.c.l.b16 %v1750
        %v2024 = vunpack.c.h.b16 %v1750
        %v2025 = vunpack.c.l.b16 %v1751
        %v2026 = vunpack.c.h.b16 %v1751
        %v2027 = vunpack.c.l.b16 %v1752
        %v2028 = vunpack.c.h.b16 %v1752
        %v2029 = vunpack.c.l.b16 %v1753
        %v2030 = vunpack.c.h.b16 %v1753
        %v2031 = vunpack.c.l.b16 %v1754
        %v2032 = vunpack.c.h.b16 %v1754
        %v2033 = vunpack.c.l.b16 %v1755
        %v2034 = vunpack.c.h.b16 %v1755
        %v2035 = vunpack.c.l.b16 %v1756
        %v2036 = vunpack.c.h.b16 %v1756
        %v2037 = vunpack.c.l.b16 %v1757
        %v2038 = vunpack.c.h.b16 %v1757
        %v2039 = vunpack.c.l.b16 %v1758
        %v2040 = vunpack.c.h.b16 %v1758
        %v2041 = vunpack.c.l.b16 %v1759
        %v2042 = vunpack.c.h.b16 %v1759
        %v2043 = vunpack.c.l.b16 %v1760
        %v2044 = vunpack.c.h.b16 %v1760
        %v2045 = vunpack.c.l.b16 %v1761
        %v2046 = vunpack.c.h.b16 %v1761
        %v2047 = vunpack.c.l.b16 %v1762
        %v2048 = vunpack.c.h.b16 %v1762
        %v2049 = vunpack.c.l.b16 %v1763
        %v2050 = vunpack.c.h.b16 %v1763
        %v2051 = vunpack.c.l.b16 %v1764
        %v2052 = vunpack.c.h.b16 %v1764
        %v2053 = vpack.c.b16 %v1991, %v1989
        %v2054 = vpack.c.b16 %v1992, %v1990
        %v2055 = vpack.c.b16 %v1995, %v1993
        %v2056 = vpack.c.b16 %v1996, %v1994
        %v2057 = vpack.c.b16 %v1999, %v1997
        %v2058 = vpack.c.b16 %v2000, %v1998
        %v2059 = vpack.c.b16 %v2003, %v2001
        %v2060 = vpack.c.b16 %v2004, %v2002
        %v2061 = vpack.c.b16 %v2007, %v2005
        %v2062 = vpack.c.b16 %v2008, %v2006
        %v2063 = vpack.c.b16 %v2011, %v2009
        %v2064 = vpack.c.b16 %v2012, %v2010
        %v2065 = vpack.c.b16 %v2015, %v2013
        %v2066 = vpack.c.b16 %v2016, %v2014
        %v2067 = vpack.c.b16 %v2019, %v2017
        %v2068 = vpack.c.b16 %v2020, %v2018
        %v2069 = vpack.c.b16 %v2023, %v2021
        %v2070 = vpack.c.b16 %v2024, %v2022
        %v2071 = vpack.c.b16 %v2027, %v2025
        %v2072 = vpack.c.b16 %v2028, %v2026
        %v2073 = vpack.c.b16 %v2031, %v2029
        %v2074 = vpack.c.b16 %v2032, %v2030
        %v2075 = vpack.c.b16 %v2035, %v2033
        %v2076 = vpack.c.b16 %v2036, %v2034
        %v2077 = vpack.c.b16 %v2039, %v2037
        %v2078 = vpack.c.b16 %v2040, %v2038
        %v2079 = vpack.c.b16 %v2043, %v2041
        %v2080 = vpack.c.b16 %v2044, %v2042
        %v2081 = vpack.c.b16 %v2047, %v2045
        %v2082 = vpack.c.b16 %v2048, %v2046
        %v2083 = vpack.c.b16 %v2051, %v2049
        %v2084 = vpack.c.b16 %v2052, %v2050
        %2117 = vmatpush.bf16.msra.mxu0 %v1679
        %2118 = vmatpush.bf16.msra.mxu0 %v1673
        %2119 = vmatpush.bf16.msra.mxu0 %v1667
        %2120 = vmatpush.bf16.msra.mxu0 %v1661
        %2121 = vmatpush.bf16.msra.mxu0 %v1655
        %2122 = vmatpush.bf16.msra.mxu0 %v1649
        %2123 = vmatpush.bf16.msra.mxu0 %v1643
        %2124 = vmatpush.bf16.msra.mxu0 %v1637
        %2125 = vmatmul.bf16.gmra.mxu0 %v2053
        %v2126 = vpop.f32.mrf.mxu0
        %v2127 = vadd.f32 %v1800, %v2126
        %v2128 = vpop.f32.mrf.mxu0
        %v2129 = vadd.f32 %v1805, %v2128
        %2130 = vmatmul.bf16.gmra.mxu0 %v2055
        %v2131 = vpop.f32.mrf.mxu0
        %v2132 = vadd.f32 %v1810, %v2131
        %v2133 = vpop.f32.mrf.mxu0
        %v2134 = vadd.f32 %v1815, %v2133
        %2135 = vmatmul.bf16.gmra.mxu0 %v2057
        %v2136 = vpop.f32.mrf.mxu0
        %v2137 = vadd.f32 %v1820, %v2136
        %v2138 = vpop.f32.mrf.mxu0
        %v2139 = vadd.f32 %v1825, %v2138
        %2140 = vmatmul.bf16.gmra.mxu0 %v2059
        %v2141 = vpop.f32.mrf.mxu0
        %v2142 = vadd.f32 %v1830, %v2141
        %v2143 = vpop.f32.mrf.mxu0
        %v2144 = vadd.f32 %v1835, %v2143
        %2145 = vmatmul.bf16.gmra.mxu0 %v2061
        %v2146 = vpop.f32.mrf.mxu0
        %v2147 = vadd.f32 %v1840, %v2146
        %v2148 = vpop.f32.mrf.mxu0
        %v2149 = vadd.f32 %v1845, %v2148
        %2150 = vmatmul.bf16.gmra.mxu0 %v2063
        %v2151 = vpop.f32.mrf.mxu0
        %v2152 = vadd.f32 %v1850, %v2151
        %v2153 = vpop.f32.mrf.mxu0
        %v2154 = vadd.f32 %v1855, %v2153
        %2155 = vmatmul.bf16.gmra.mxu0 %v2065
        %v2156 = vpop.f32.mrf.mxu0
        %v2157 = vadd.f32 %v1860, %v2156
        %v2158 = vpop.f32.mrf.mxu0
        %v2159 = vadd.f32 %v1865, %v2158
        %2160 = vmatmul.bf16.gmra.mxu0 %v2067
        %v2161 = vpop.f32.mrf.mxu0
        %v2162 = vadd.f32 %v1870, %v2161
        %v2163 = vpop.f32.mrf.mxu0
        %v2164 = vadd.f32 %v1875, %v2163
        %2165 = vmatmul.bf16.gmra.mxu0 %v2069
        %v2166 = vpop.f32.mrf.mxu0
        %v2167 = vadd.f32 %v1880, %v2166
        %v2168 = vpop.f32.mrf.mxu0
        %v2169 = vadd.f32 %v1885, %v2168
        %2170 = vmatmul.bf16.gmra.mxu0 %v2071
        %v2171 = vpop.f32.mrf.mxu0
        %v2172 = vadd.f32 %v1890, %v2171
        %v2173 = vpop.f32.mrf.mxu0
        %v2174 = vadd.f32 %v1895, %v2173
        %2175 = vmatmul.bf16.gmra.mxu0 %v2073
        %v2176 = vpop.f32.mrf.mxu0
        %v2177 = vadd.f32 %v1900, %v2176
        %v2178 = vpop.f32.mrf.mxu0
        %v2179 = vadd.f32 %v1905, %v2178
        %2180 = vmatmul.bf16.gmra.mxu0 %v2075
        %v2181 = vpop.f32.mrf.mxu0
        %v2182 = vadd.f32 %v1910, %v2181
        %v2183 = vpop.f32.mrf.mxu0
        %v2184 = vadd.f32 %v1915, %v2183
        %2185 = vmatmul.bf16.gmra.mxu0 %v2077
        %v2186 = vpop.f32.mrf.mxu0
        %v2187 = vadd.f32 %v1920, %v2186
        %v2188 = vpop.f32.mrf.mxu0
        %v2189 = vadd.f32 %v1925, %v2188
        %2190 = vmatmul.bf16.gmra.mxu0 %v2079
        %v2191 = vpop.f32.mrf.mxu0
        %v2192 = vadd.f32 %v1930, %v2191
        %v2193 = vpop.f32.mrf.mxu0
        %v2194 = vadd.f32 %v1935, %v2193
        %2195 = vmatmul.bf16.gmra.mxu0 %v2081
        %v2196 = vpop.f32.mrf.mxu0
        %v2197 = vadd.f32 %v1940, %v2196
        %v2198 = vpop.f32.mrf.mxu0
        %v2199 = vadd.f32 %v1945, %v2198
        %2200 = vmatmul.bf16.gmra.mxu0 %v2083
        %v2201 = vpop.f32.mrf.mxu0
        %v2202 = vadd.f32 %v1950, %v2201
        %v2203 = vpop.f32.mrf.mxu0
        %v2204 = vadd.f32 %v1955, %v2203
        %2205 = vdwg.mxu0
        %2206 = vmatpush.bf16.msra.mxu0 %v1727
        %2207 = vmatpush.bf16.msra.mxu0 %v1721
        %2208 = vmatpush.bf16.msra.mxu0 %v1715
        %2209 = vmatpush.bf16.msra.mxu0 %v1709
        %2210 = vmatpush.bf16.msra.mxu0 %v1703
        %2211 = vmatpush.bf16.msra.mxu0 %v1697
        %2212 = vmatpush.bf16.msra.mxu0 %v1691
        %2213 = vmatpush.bf16.msra.mxu0 %v1685
        %2214 = vmatmul.bf16.gmra.mxu0 %v2054
        %v2215 = vpop.f32.mrf.mxu0
        %v2216 = vadd.f32 %v2127, %v2215
        %v2217 = vpop.f32.mrf.mxu0
        %v2218 = vadd.f32 %v2129, %v2217
        %2219 = vmatmul.bf16.gmra.mxu0 %v2056
        %v2220 = vpop.f32.mrf.mxu0
        %v2221 = vadd.f32 %v2132, %v2220
        %v2222 = vpop.f32.mrf.mxu0
        %v2223 = vadd.f32 %v2134, %v2222
        %2224 = vmatmul.bf16.gmra.mxu0 %v2058
        %v2225 = vpop.f32.mrf.mxu0
        %v2226 = vadd.f32 %v2137, %v2225
        %v2227 = vpop.f32.mrf.mxu0
        %v2228 = vadd.f32 %v2139, %v2227
        %2229 = vmatmul.bf16.gmra.mxu0 %v2060
        %v2230 = vpop.f32.mrf.mxu0
        %v2231 = vadd.f32 %v2142, %v2230
        %v2232 = vpop.f32.mrf.mxu0
        %v2233 = vadd.f32 %v2144, %v2232
        %2234 = vmatmul.bf16.gmra.mxu0 %v2062
        %v2235 = vpop.f32.mrf.mxu0
        %v2236 = vadd.f32 %v2147, %v2235
        %v2237 = vpop.f32.mrf.mxu0
        %v2238 = vadd.f32 %v2149, %v2237
        %2239 = vmatmul.bf16.gmra.mxu0 %v2064
        %v2240 = vpop.f32.mrf.mxu0
        %v2241 = vadd.f32 %v2152, %v2240
        %v2242 = vpop.f32.mrf.mxu0
        %v2243 = vadd.f32 %v2154, %v2242
        %2244 = vmatmul.bf16.gmra.mxu0 %v2066
        %v2245 = vpop.f32.mrf.mxu0
        %v2246 = vadd.f32 %v2157, %v2245
        %v2247 = vpop.f32.mrf.mxu0
        %v2248 = vadd.f32 %v2159, %v2247
        %2249 = vmatmul.bf16.gmra.mxu0 %v2068
        %v2250 = vpop.f32.mrf.mxu0
        %v2251 = vadd.f32 %v2162, %v2250
        %v2252 = vpop.f32.mrf.mxu0
        %v2253 = vadd.f32 %v2164, %v2252
        %2254 = vmatmul.bf16.gmra.mxu0 %v2070
        %v2255 = vpop.f32.mrf.mxu0
        %v2256 = vadd.f32 %v2167, %v2255
        %v2257 = vpop.f32.mrf.mxu0
        %v2258 = vadd.f32 %v2169, %v2257
        %2259 = vmatmul.bf16.gmra.mxu0 %v2072
        %v2260 = vpop.f32.mrf.mxu0
        %v2261 = vadd.f32 %v2172, %v2260
        %v2262 = vpop.f32.mrf.mxu0
        %v2263 = vadd.f32 %v2174, %v2262
        %2264 = vmatmul.bf16.gmra.mxu0 %v2074
        %v2265 = vpop.f32.mrf.mxu0
        %v2266 = vadd.f32 %v2177, %v2265
        %v2267 = vpop.f32.mrf.mxu0
        %v2268 = vadd.f32 %v2179, %v2267
        %2269 = vmatmul.bf16.gmra.mxu0 %v2076
        %v2270 = vpop.f32.mrf.mxu0
        %v2271 = vadd.f32 %v2182, %v2270
        %v2272 = vpop.f32.mrf.mxu0
        %v2273 = vadd.f32 %v2184, %v2272
        %2274 = vmatmul.bf16.gmra.mxu0 %v2078
        %v2275 = vpop.f32.mrf.mxu0
        %v2276 = vadd.f32 %v2187, %v2275
        %v2277 = vpop.f32.mrf.mxu0
        %v2278 = vadd.f32 %v2189, %v2277
        %2279 = vmatmul.bf16.gmra.mxu0 %v2080
        %v2280 = vpop.f32.mrf.mxu0
        %v2281 = vadd.f32 %v2192, %v2280
        %v2282 = vpop.f32.mrf.mxu0
        %v2283 = vadd.f32 %v2194, %v2282
        %2284 = vmatmul.bf16.gmra.mxu0 %v2082
        %v2285 = vpop.f32.mrf.mxu0
        %v2286 = vadd.f32 %v2197, %v2285
        %v2287 = vpop.f32.mrf.mxu0
        %v2288 = vadd.f32 %v2199, %v2287
        %2289 = vmatmul.bf16.gmra.mxu0 %v2084
        %v2290 = vpop.f32.mrf.mxu0
        %v2291 = vadd.f32 %v2202, %v2290
        %v2292 = vpop.f32.mrf.mxu0
        %v2293 = vadd.f32 %v2204, %v2292
        %2294 = vdwg.mxu0
        %2295 = vmatpush.bf16.msra.mxu0 %v1680
        %2296 = vmatpush.bf16.msra.mxu0 %v1674
        %2297 = vmatpush.bf16.msra.mxu0 %v1668
        %2298 = vmatpush.bf16.msra.mxu0 %v1662
        %2299 = vmatpush.bf16.msra.mxu0 %v1656
        %2300 = vmatpush.bf16.msra.mxu0 %v1650
        %2301 = vmatpush.bf16.msra.mxu0 %v1644
        %2302 = vmatpush.bf16.msra.mxu0 %v1638
        %2303 = vmatmul.bf16.gmra.mxu0 %v2053
        %v2304 = vpop.f32.mrf.mxu0
        %v2305 = vadd.f32 %v1800, %v2304
        %v2306 = vpop.f32.mrf.mxu0
        %v2307 = vadd.f32 %v1805, %v2306
        %2308 = vmatmul.bf16.gmra.mxu0 %v2055
        %v2309 = vpop.f32.mrf.mxu0
        %v2310 = vadd.f32 %v1810, %v2309
        %v2311 = vpop.f32.mrf.mxu0
        %v2312 = vadd.f32 %v1815, %v2311
        %2313 = vmatmul.bf16.gmra.mxu0 %v2057
        %v2314 = vpop.f32.mrf.mxu0
        %v2315 = vadd.f32 %v1820, %v2314
        %v2316 = vpop.f32.mrf.mxu0
        %v2317 = vadd.f32 %v1825, %v2316
        %2318 = vmatmul.bf16.gmra.mxu0 %v2059
        %v2319 = vpop.f32.mrf.mxu0
        %v2320 = vadd.f32 %v1830, %v2319
        %v2321 = vpop.f32.mrf.mxu0
        %v2322 = vadd.f32 %v1835, %v2321
        %2323 = vmatmul.bf16.gmra.mxu0 %v2061
        %v2324 = vpop.f32.mrf.mxu0
        %v2325 = vadd.f32 %v1840, %v2324
        %v2326 = vpop.f32.mrf.mxu0
        %v2327 = vadd.f32 %v1845, %v2326
        %2328 = vmatmul.bf16.gmra.mxu0 %v2063
        %v2329 = vpop.f32.mrf.mxu0
        %v2330 = vadd.f32 %v1850, %v2329
        %v2331 = vpop.f32.mrf.mxu0
        %v2332 = vadd.f32 %v1855, %v2331
        %2333 = vmatmul.bf16.gmra.mxu0 %v2065
        %v2334 = vpop.f32.mrf.mxu0
        %v2335 = vadd.f32 %v1860, %v2334
        %v2336 = vpop.f32.mrf.mxu0
        %v2337 = vadd.f32 %v1865, %v2336
        %2338 = vmatmul.bf16.gmra.mxu0 %v2067
        %v2339 = vpop.f32.mrf.mxu0
        %v2340 = vadd.f32 %v1870, %v2339
        %v2341 = vpop.f32.mrf.mxu0
        %v2342 = vadd.f32 %v1875, %v2341
        %2343 = vmatmul.bf16.gmra.mxu0 %v2069
        %v2344 = vpop.f32.mrf.mxu0
        %v2345 = vadd.f32 %v1880, %v2344
        %v2346 = vpop.f32.mrf.mxu0
        %v2347 = vadd.f32 %v1885, %v2346
        %2348 = vmatmul.bf16.gmra.mxu0 %v2071
        %v2349 = vpop.f32.mrf.mxu0
        %v2350 = vadd.f32 %v1890, %v2349
        %v2351 = vpop.f32.mrf.mxu0
        %v2352 = vadd.f32 %v1895, %v2351
        %2353 = vmatmul.bf16.gmra.mxu0 %v2073
        %v2354 = vpop.f32.mrf.mxu0
        %v2355 = vadd.f32 %v1900, %v2354
        %v2356 = vpop.f32.mrf.mxu0
        %v2357 = vadd.f32 %v1905, %v2356
        %2358 = vmatmul.bf16.gmra.mxu0 %v2075
        %v2359 = vpop.f32.mrf.mxu0
        %v2360 = vadd.f32 %v1910, %v2359
        %v2361 = vpop.f32.mrf.mxu0
        %v2362 = vadd.f32 %v1915, %v2361
        %2363 = vmatmul.bf16.gmra.mxu0 %v2077
        %v2364 = vpop.f32.mrf.mxu0
        %v2365 = vadd.f32 %v1920, %v2364
        %v2366 = vpop.f32.mrf.mxu0
        %v2367 = vadd.f32 %v1925, %v2366
        %2368 = vmatmul.bf16.gmra.mxu0 %v2079
        %v2369 = vpop.f32.mrf.mxu0
        %v2370 = vadd.f32 %v1930, %v2369
        %v2371 = vpop.f32.mrf.mxu0
        %v2372 = vadd.f32 %v1935, %v2371
        %2373 = vmatmul.bf16.gmra.mxu0 %v2081
        %v2374 = vpop.f32.mrf.mxu0
        %v2375 = vadd.f32 %v1940, %v2374
        %v2376 = vpop.f32.mrf.mxu0
        %v2377 = vadd.f32 %v1945, %v2376
        %2378 = vmatmul.bf16.gmra.mxu0 %v2083
        %v2379 = vpop.f32.mrf.mxu0
        %v2380 = vadd.f32 %v1950, %v2379
        %v2381 = vpop.f32.mrf.mxu0
        %v2382 = vadd.f32 %v1955, %v2381
        %2383 = vdwg.mxu0
        %2384 = vmatpush.bf16.msra.mxu0 %v1728
        %2385 = vmatpush.bf16.msra.mxu0 %v1722
        %2386 = vmatpush.bf16.msra.mxu0 %v1716
        %2387 = vmatpush.bf16.msra.mxu0 %v1710
        %2388 = vmatpush.bf16.msra.mxu0 %v1704
        %2389 = vmatpush.bf16.msra.mxu0 %v1698
        %2390 = vmatpush.bf16.msra.mxu0 %v1692
        %2391 = vmatpush.bf16.msra.mxu0 %v1686
        %2392 = vmatmul.bf16.gmra.mxu0 %v2054
        %v2393 = vpop.f32.mrf.mxu0
        %v2394 = vadd.f32 %v2305, %v2393
        %v2395 = vpop.f32.mrf.mxu0
        %v2396 = vadd.f32 %v2307, %v2395
        %2397 = vmatmul.bf16.gmra.mxu0 %v2056
        %v2398 = vpop.f32.mrf.mxu0
        %v2399 = vadd.f32 %v2310, %v2398
        %v2400 = vpop.f32.mrf.mxu0
        %v2401 = vadd.f32 %v2312, %v2400
        %2402 = vmatmul.bf16.gmra.mxu0 %v2058
        %v2403 = vpop.f32.mrf.mxu0
        %v2404 = vadd.f32 %v2315, %v2403
        %v2405 = vpop.f32.mrf.mxu0
        %v2406 = vadd.f32 %v2317, %v2405
        %2407 = vmatmul.bf16.gmra.mxu0 %v2060
        %v2408 = vpop.f32.mrf.mxu0
        %v2409 = vadd.f32 %v2320, %v2408
        %v2410 = vpop.f32.mrf.mxu0
        %v2411 = vadd.f32 %v2322, %v2410
        %2412 = vmatmul.bf16.gmra.mxu0 %v2062
        %v2413 = vpop.f32.mrf.mxu0
        %v2414 = vadd.f32 %v2325, %v2413
        %v2415 = vpop.f32.mrf.mxu0
        %v2416 = vadd.f32 %v2327, %v2415
        %2417 = vmatmul.bf16.gmra.mxu0 %v2064
        %v2418 = vpop.f32.mrf.mxu0
        %v2419 = vadd.f32 %v2330, %v2418
        %v2420 = vpop.f32.mrf.mxu0
        %v2421 = vadd.f32 %v2332, %v2420
        %2422 = vmatmul.bf16.gmra.mxu0 %v2066
        %v2423 = vpop.f32.mrf.mxu0
        %v2424 = vadd.f32 %v2335, %v2423
        %v2425 = vpop.f32.mrf.mxu0
        %v2426 = vadd.f32 %v2337, %v2425
        %2427 = vmatmul.bf16.gmra.mxu0 %v2068
        %v2428 = vpop.f32.mrf.mxu0
        %v2429 = vadd.f32 %v2340, %v2428
        %v2430 = vpop.f32.mrf.mxu0
        %v2431 = vadd.f32 %v2342, %v2430
        %2432 = vmatmul.bf16.gmra.mxu0 %v2070
        %v2433 = vpop.f32.mrf.mxu0
        %v2434 = vadd.f32 %v2345, %v2433
        %v2435 = vpop.f32.mrf.mxu0
        %v2436 = vadd.f32 %v2347, %v2435
        %2437 = vmatmul.bf16.gmra.mxu0 %v2072
        %v2438 = vpop.f32.mrf.mxu0
        %v2439 = vadd.f32 %v2350, %v2438
        %v2440 = vpop.f32.mrf.mxu0
        %v2441 = vadd.f32 %v2352, %v2440
        %2442 = vmatmul.bf16.gmra.mxu0 %v2074
        %v2443 = vpop.f32.mrf.mxu0
        %v2444 = vadd.f32 %v2355, %v2443
        %v2445 = vpop.f32.mrf.mxu0
        %v2446 = vadd.f32 %v2357, %v2445
        %2447 = vmatmul.bf16.gmra.mxu0 %v2076
        %v2448 = vpop.f32.mrf.mxu0
        %v2449 = vadd.f32 %v2360, %v2448
        %v2450 = vpop.f32.mrf.mxu0
        %v2451 = vadd.f32 %v2362, %v2450
        %2452 = vmatmul.bf16.gmra.mxu0 %v2078
        %v2453 = vpop.f32.mrf.mxu0
        %v2454 = vadd.f32 %v2365, %v2453
        %v2455 = vpop.f32.mrf.mxu0
        %v2456 = vadd.f32 %v2367, %v2455
        %2457 = vmatmul.bf16.gmra.mxu0 %v2080
        %v2458 = vpop.f32.mrf.mxu0
        %v2459 = vadd.f32 %v2370, %v2458
        %v2460 = vpop.f32.mrf.mxu0
        %v2461 = vadd.f32 %v2372, %v2460
        %2462 = vmatmul.bf16.gmra.mxu0 %v2082
        %v2463 = vpop.f32.mrf.mxu0
        %v2464 = vadd.f32 %v2375, %v2463
        %v2465 = vpop.f32.mrf.mxu0
        %v2466 = vadd.f32 %v2377, %v2465
        %2467 = vmatmul.bf16.gmra.mxu0 %v2084
        %v2468 = vpop.f32.mrf.mxu0
        %v2469 = vadd.f32 %v2380, %v2468
        %v2470 = vpop.f32.mrf.mxu0
        %v2471 = vadd.f32 %v2382, %v2470
        %2472 = vdwg.mxu0
        %2473 = vmatpush.bf16.msra.mxu0 %v1681
        %2474 = vmatpush.bf16.msra.mxu0 %v1675
        %2475 = vmatpush.bf16.msra.mxu0 %v1669
        %2476 = vmatpush.bf16.msra.mxu0 %v1663
        %2477 = vmatpush.bf16.msra.mxu0 %v1657
        %2478 = vmatpush.bf16.msra.mxu0 %v1651
        %2479 = vmatpush.bf16.msra.mxu0 %v1645
        %2480 = vmatpush.bf16.msra.mxu0 %v1639
        %2481 = vmatmul.bf16.gmra.mxu0 %v2053
        %v2482 = vpop.f32.mrf.mxu0
        %v2483 = vadd.f32 %v1800, %v2482
        %v2484 = vpop.f32.mrf.mxu0
        %v2485 = vadd.f32 %v1805, %v2484
        %2486 = vmatmul.bf16.gmra.mxu0 %v2055
        %v2487 = vpop.f32.mrf.mxu0
        %v2488 = vadd.f32 %v1810, %v2487
        %v2489 = vpop.f32.mrf.mxu0
        %v2490 = vadd.f32 %v1815, %v2489
        %2491 = vmatmul.bf16.gmra.mxu0 %v2057
        %v2492 = vpop.f32.mrf.mxu0
        %v2493 = vadd.f32 %v1820, %v2492
        %v2494 = vpop.f32.mrf.mxu0
        %v2495 = vadd.f32 %v1825, %v2494
        %2496 = vmatmul.bf16.gmra.mxu0 %v2059
        %v2497 = vpop.f32.mrf.mxu0
        %v2498 = vadd.f32 %v1830, %v2497
        %v2499 = vpop.f32.mrf.mxu0
        %v2500 = vadd.f32 %v1835, %v2499
        %2501 = vmatmul.bf16.gmra.mxu0 %v2061
        %v2502 = vpop.f32.mrf.mxu0
        %v2503 = vadd.f32 %v1840, %v2502
        %v2504 = vpop.f32.mrf.mxu0
        %v2505 = vadd.f32 %v1845, %v2504
        %2506 = vmatmul.bf16.gmra.mxu0 %v2063
        %v2507 = vpop.f32.mrf.mxu0
        %v2508 = vadd.f32 %v1850, %v2507
        %v2509 = vpop.f32.mrf.mxu0
        %v2510 = vadd.f32 %v1855, %v2509
        %2511 = vmatmul.bf16.gmra.mxu0 %v2065
        %v2512 = vpop.f32.mrf.mxu0
        %v2513 = vadd.f32 %v1860, %v2512
        %v2514 = vpop.f32.mrf.mxu0
        %v2515 = vadd.f32 %v1865, %v2514
        %2516 = vmatmul.bf16.gmra.mxu0 %v2067
        %v2517 = vpop.f32.mrf.mxu0
        %v2518 = vadd.f32 %v1870, %v2517
        %v2519 = vpop.f32.mrf.mxu0
        %v2520 = vadd.f32 %v1875, %v2519
        %2521 = vmatmul.bf16.gmra.mxu0 %v2069
        %v2522 = vpop.f32.mrf.mxu0
        %v2523 = vadd.f32 %v1880, %v2522
        %v2524 = vpop.f32.mrf.mxu0
        %v2525 = vadd.f32 %v1885, %v2524
        %2526 = vmatmul.bf16.gmra.mxu0 %v2071
        %v2527 = vpop.f32.mrf.mxu0
        %v2528 = vadd.f32 %v1890, %v2527
        %v2529 = vpop.f32.mrf.mxu0
        %v2530 = vadd.f32 %v1895, %v2529
        %2531 = vmatmul.bf16.gmra.mxu0 %v2073
        %v2532 = vpop.f32.mrf.mxu0
        %v2533 = vadd.f32 %v1900, %v2532
        %v2534 = vpop.f32.mrf.mxu0
        %v2535 = vadd.f32 %v1905, %v2534
        %2536 = vmatmul.bf16.gmra.mxu0 %v2075
        %v2537 = vpop.f32.mrf.mxu0
        %v2538 = vadd.f32 %v1910, %v2537
        %v2539 = vpop.f32.mrf.mxu0
        %v2540 = vadd.f32 %v1915, %v2539
        %2541 = vmatmul.bf16.gmra.mxu0 %v2077
        %v2542 = vpop.f32.mrf.mxu0
        %v2543 = vadd.f32 %v1920, %v2542
        %v2544 = vpop.f32.mrf.mxu0
        %v2545 = vadd.f32 %v1925, %v2544
        %2546 = vmatmul.bf16.gmra.mxu0 %v2079
        %v2547 = vpop.f32.mrf.mxu0
        %v2548 = vadd.f32 %v1930, %v2547
        %v2549 = vpop.f32.mrf.mxu0
        %v2550 = vadd.f32 %v1935, %v2549
        %2551 = vmatmul.bf16.gmra.mxu0 %v2081
        %v2552 = vpop.f32.mrf.mxu0
        %v2553 = vadd.f32 %v1940, %v2552
        %v2554 = vpop.f32.mrf.mxu0
        %v2555 = vadd.f32 %v1945, %v2554
        %2556 = vmatmul.bf16.gmra.mxu0 %v2083
        %v2557 = vpop.f32.mrf.mxu0
        %v2558 = vadd.f32 %v1950, %v2557
        %v2559 = vpop.f32.mrf.mxu0
        %v2560 = vadd.f32 %v1955, %v2559
        %2561 = vdwg.mxu0
        %2562 = vmatpush.bf16.msra.mxu0 %v1729
        %2563 = vmatpush.bf16.msra.mxu0 %v1723
        %2564 = vmatpush.bf16.msra.mxu0 %v1717
        %2565 = vmatpush.bf16.msra.mxu0 %v1711
        %2566 = vmatpush.bf16.msra.mxu0 %v1705
        %2567 = vmatpush.bf16.msra.mxu0 %v1699
        %2568 = vmatpush.bf16.msra.mxu0 %v1693
        %2569 = vmatpush.bf16.msra.mxu0 %v1687
        %2570 = vmatmul.bf16.gmra.mxu0 %v2054
        %v2571 = vpop.f32.mrf.mxu0
        %v2572 = vadd.f32 %v2483, %v2571
        %v2573 = vpop.f32.mrf.mxu0
        %v2574 = vadd.f32 %v2485, %v2573
        %2575 = vmatmul.bf16.gmra.mxu0 %v2056
        %v2576 = vpop.f32.mrf.mxu0
        %v2577 = vadd.f32 %v2488, %v2576
        %v2578 = vpop.f32.mrf.mxu0
        %v2579 = vadd.f32 %v2490, %v2578
        %2580 = vmatmul.bf16.gmra.mxu0 %v2058
        %v2581 = vpop.f32.mrf.mxu0
        %v2582 = vadd.f32 %v2493, %v2581
        %v2583 = vpop.f32.mrf.mxu0
        %v2584 = vadd.f32 %v2495, %v2583
        %2585 = vmatmul.bf16.gmra.mxu0 %v2060
        %v2586 = vpop.f32.mrf.mxu0
        %v2587 = vadd.f32 %v2498, %v2586
        %v2588 = vpop.f32.mrf.mxu0
        %v2589 = vadd.f32 %v2500, %v2588
        %2590 = vmatmul.bf16.gmra.mxu0 %v2062
        %v2591 = vpop.f32.mrf.mxu0
        %v2592 = vadd.f32 %v2503, %v2591
        %v2593 = vpop.f32.mrf.mxu0
        %v2594 = vadd.f32 %v2505, %v2593
        %2595 = vmatmul.bf16.gmra.mxu0 %v2064
        %v2596 = vpop.f32.mrf.mxu0
        %v2597 = vadd.f32 %v2508, %v2596
        %v2598 = vpop.f32.mrf.mxu0
        %v2599 = vadd.f32 %v2510, %v2598
        %2600 = vmatmul.bf16.gmra.mxu0 %v2066
        %v2601 = vpop.f32.mrf.mxu0
        %v2602 = vadd.f32 %v2513, %v2601
        %v2603 = vpop.f32.mrf.mxu0
        %v2604 = vadd.f32 %v2515, %v2603
        %2605 = vmatmul.bf16.gmra.mxu0 %v2068
        %v2606 = vpop.f32.mrf.mxu0
        %v2607 = vadd.f32 %v2518, %v2606
        %v2608 = vpop.f32.mrf.mxu0
        %v2609 = vadd.f32 %v2520, %v2608
        %2610 = vmatmul.bf16.gmra.mxu0 %v2070
        %v2611 = vpop.f32.mrf.mxu0
        %v2612 = vadd.f32 %v2523, %v2611
        %v2613 = vpop.f32.mrf.mxu0
        %v2614 = vadd.f32 %v2525, %v2613
        %2615 = vmatmul.bf16.gmra.mxu0 %v2072
        %v2616 = vpop.f32.mrf.mxu0
        %v2617 = vadd.f32 %v2528, %v2616
        %v2618 = vpop.f32.mrf.mxu0
        %v2619 = vadd.f32 %v2530, %v2618
        %2620 = vmatmul.bf16.gmra.mxu0 %v2074
        %v2621 = vpop.f32.mrf.mxu0
        %v2622 = vadd.f32 %v2533, %v2621
        %v2623 = vpop.f32.mrf.mxu0
        %v2624 = vadd.f32 %v2535, %v2623
        %2625 = vmatmul.bf16.gmra.mxu0 %v2076
        %v2626 = vpop.f32.mrf.mxu0
        %v2627 = vadd.f32 %v2538, %v2626
        %v2628 = vpop.f32.mrf.mxu0
        %v2629 = vadd.f32 %v2540, %v2628
        %2630 = vmatmul.bf16.gmra.mxu0 %v2078
        %v2631 = vpop.f32.mrf.mxu0
        %v2632 = vadd.f32 %v2543, %v2631
        %v2633 = vpop.f32.mrf.mxu0
        %v2634 = vadd.f32 %v2545, %v2633
        %2635 = vmatmul.bf16.gmra.mxu0 %v2080
        %v2636 = vpop.f32.mrf.mxu0
        %v2637 = vadd.f32 %v2548, %v2636
        %v2638 = vpop.f32.mrf.mxu0
        %v2639 = vadd.f32 %v2550, %v2638
        %2640 = vmatmul.bf16.gmra.mxu0 %v2082
        %v2641 = vpop.f32.mrf.mxu0
        %v2642 = vadd.f32 %v2553, %v2641
        %v2643 = vpop.f32.mrf.mxu0
        %v2644 = vadd.f32 %v2555, %v2643
        %2645 = vmatmul.bf16.gmra.mxu0 %v2084
        %v2646 = vpop.f32.mrf.mxu0
        %v2647 = vadd.f32 %v2558, %v2646
        %v2648 = vpop.f32.mrf.mxu0
        %v2649 = vadd.f32 %v2560, %v2648
        %2650 = vdwg.mxu0
        %2651 = vmatpush.bf16.msra.mxu0 %v1682
        %2652 = vmatpush.bf16.msra.mxu0 %v1676
        %2653 = vmatpush.bf16.msra.mxu0 %v1670
        %2654 = vmatpush.bf16.msra.mxu0 %v1664
        %2655 = vmatpush.bf16.msra.mxu0 %v1658
        %2656 = vmatpush.bf16.msra.mxu0 %v1652
        %2657 = vmatpush.bf16.msra.mxu0 %v1646
        %2658 = vmatpush.bf16.msra.mxu0 %v1640
        %2659 = vmatmul.bf16.gmra.mxu0 %v2053
        %v2660 = vpop.f32.mrf.mxu0
        %v2661 = vadd.f32 %v1800, %v2660
        %v2662 = vpop.f32.mrf.mxu0
        %v2663 = vadd.f32 %v1805, %v2662
        %2664 = vmatmul.bf16.gmra.mxu0 %v2055
        %v2665 = vpop.f32.mrf.mxu0
        %v2666 = vadd.f32 %v1810, %v2665
        %v2667 = vpop.f32.mrf.mxu0
        %v2668 = vadd.f32 %v1815, %v2667
        %2669 = vmatmul.bf16.gmra.mxu0 %v2057
        %v2670 = vpop.f32.mrf.mxu0
        %v2671 = vadd.f32 %v1820, %v2670
        %v2672 = vpop.f32.mrf.mxu0
        %v2673 = vadd.f32 %v1825, %v2672
        %2674 = vmatmul.bf16.gmra.mxu0 %v2059
        %v2675 = vpop.f32.mrf.mxu0
        %v2676 = vadd.f32 %v1830, %v2675
        %v2677 = vpop.f32.mrf.mxu0
        %v2678 = vadd.f32 %v1835, %v2677
        %2679 = vmatmul.bf16.gmra.mxu0 %v2061
        %v2680 = vpop.f32.mrf.mxu0
        %v2681 = vadd.f32 %v1840, %v2680
        %v2682 = vpop.f32.mrf.mxu0
        %v2683 = vadd.f32 %v1845, %v2682
        %2684 = vmatmul.bf16.gmra.mxu0 %v2063
        %v2685 = vpop.f32.mrf.mxu0
        %v2686 = vadd.f32 %v1850, %v2685
        %v2687 = vpop.f32.mrf.mxu0
        %v2688 = vadd.f32 %v1855, %v2687
        %2689 = vmatmul.bf16.gmra.mxu0 %v2065
        %v2690 = vpop.f32.mrf.mxu0
        %v2691 = vadd.f32 %v1860, %v2690
        %v2692 = vpop.f32.mrf.mxu0
        %v2693 = vadd.f32 %v1865, %v2692
        %2694 = vmatmul.bf16.gmra.mxu0 %v2067
        %v2695 = vpop.f32.mrf.mxu0
        %v2696 = vadd.f32 %v1870, %v2695
        %v2697 = vpop.f32.mrf.mxu0
        %v2698 = vadd.f32 %v1875, %v2697
        %2699 = vmatmul.bf16.gmra.mxu0 %v2069
        %v2700 = vpop.f32.mrf.mxu0
        %v2701 = vadd.f32 %v1880, %v2700
        %v2702 = vpop.f32.mrf.mxu0
        %v2703 = vadd.f32 %v1885, %v2702
        %2704 = vmatmul.bf16.gmra.mxu0 %v2071
        %v2705 = vpop.f32.mrf.mxu0
        %v2706 = vadd.f32 %v1890, %v2705
        %v2707 = vpop.f32.mrf.mxu0
        %v2708 = vadd.f32 %v1895, %v2707
        %2709 = vmatmul.bf16.gmra.mxu0 %v2073
        %v2710 = vpop.f32.mrf.mxu0
        %v2711 = vadd.f32 %v1900, %v2710
        %v2712 = vpop.f32.mrf.mxu0
        %v2713 = vadd.f32 %v1905, %v2712
        %2714 = vmatmul.bf16.gmra.mxu0 %v2075
        %v2715 = vpop.f32.mrf.mxu0
        %v2716 = vadd.f32 %v1910, %v2715
        %v2717 = vpop.f32.mrf.mxu0
        %v2718 = vadd.f32 %v1915, %v2717
        %2719 = vmatmul.bf16.gmra.mxu0 %v2077
        %v2720 = vpop.f32.mrf.mxu0
        %v2721 = vadd.f32 %v1920, %v2720
        %v2722 = vpop.f32.mrf.mxu0
        %v2723 = vadd.f32 %v1925, %v2722
        %2724 = vmatmul.bf16.gmra.mxu0 %v2079
        %v2725 = vpop.f32.mrf.mxu0
        %v2726 = vadd.f32 %v1930, %v2725
        %v2727 = vpop.f32.mrf.mxu0
        %v2728 = vadd.f32 %v1935, %v2727
        %2729 = vmatmul.bf16.gmra.mxu0 %v2081
        %v2730 = vpop.f32.mrf.mxu0
        %v2731 = vadd.f32 %v1940, %v2730
        %v2732 = vpop.f32.mrf.mxu0
        %v2733 = vadd.f32 %v1945, %v2732
        %2734 = vmatmul.bf16.gmra.mxu0 %v2083
        %v2735 = vpop.f32.mrf.mxu0
        %v2736 = vadd.f32 %v1950, %v2735
        %v2737 = vpop.f32.mrf.mxu0
        %v2738 = vadd.f32 %v1955, %v2737
        %2739 = vdwg.mxu0
        %2740 = vmatpush.bf16.msra.mxu0 %v1730
        %2741 = vmatpush.bf16.msra.mxu0 %v1724
        %2742 = vmatpush.bf16.msra.mxu0 %v1718
        %2743 = vmatpush.bf16.msra.mxu0 %v1712
        %2744 = vmatpush.bf16.msra.mxu0 %v1706
        %2745 = vmatpush.bf16.msra.mxu0 %v1700
        %2746 = vmatpush.bf16.msra.mxu0 %v1694
        %2747 = vmatpush.bf16.msra.mxu0 %v1688
        %2748 = vmatmul.bf16.gmra.mxu0 %v2054
        %v2749 = vpop.f32.mrf.mxu0
        %v2750 = vadd.f32 %v2661, %v2749
        %v2751 = vpop.f32.mrf.mxu0
        %v2752 = vadd.f32 %v2663, %v2751
        %2753 = vmatmul.bf16.gmra.mxu0 %v2056
        %v2754 = vpop.f32.mrf.mxu0
        %v2755 = vadd.f32 %v2666, %v2754
        %v2756 = vpop.f32.mrf.mxu0
        %v2757 = vadd.f32 %v2668, %v2756
        %2758 = vmatmul.bf16.gmra.mxu0 %v2058
        %v2759 = vpop.f32.mrf.mxu0
        %v2760 = vadd.f32 %v2671, %v2759
        %v2761 = vpop.f32.mrf.mxu0
        %v2762 = vadd.f32 %v2673, %v2761
        %2763 = vmatmul.bf16.gmra.mxu0 %v2060
        %v2764 = vpop.f32.mrf.mxu0
        %v2765 = vadd.f32 %v2676, %v2764
        %v2766 = vpop.f32.mrf.mxu0
        %v2767 = vadd.f32 %v2678, %v2766
        %2768 = vmatmul.bf16.gmra.mxu0 %v2062
        %v2769 = vpop.f32.mrf.mxu0
        %v2770 = vadd.f32 %v2681, %v2769
        %v2771 = vpop.f32.mrf.mxu0
        %v2772 = vadd.f32 %v2683, %v2771
        %2773 = vmatmul.bf16.gmra.mxu0 %v2064
        %v2774 = vpop.f32.mrf.mxu0
        %v2775 = vadd.f32 %v2686, %v2774
        %v2776 = vpop.f32.mrf.mxu0
        %v2777 = vadd.f32 %v2688, %v2776
        %2778 = vmatmul.bf16.gmra.mxu0 %v2066
        %v2779 = vpop.f32.mrf.mxu0
        %v2780 = vadd.f32 %v2691, %v2779
        %v2781 = vpop.f32.mrf.mxu0
        %v2782 = vadd.f32 %v2693, %v2781
        %2783 = vmatmul.bf16.gmra.mxu0 %v2068
        %v2784 = vpop.f32.mrf.mxu0
        %v2785 = vadd.f32 %v2696, %v2784
        %v2786 = vpop.f32.mrf.mxu0
        %v2787 = vadd.f32 %v2698, %v2786
        %2788 = vmatmul.bf16.gmra.mxu0 %v2070
        %v2789 = vpop.f32.mrf.mxu0
        %v2790 = vadd.f32 %v2701, %v2789
        %v2791 = vpop.f32.mrf.mxu0
        %v2792 = vadd.f32 %v2703, %v2791
        %2793 = vmatmul.bf16.gmra.mxu0 %v2072
        %v2794 = vpop.f32.mrf.mxu0
        %v2795 = vadd.f32 %v2706, %v2794
        %v2796 = vpop.f32.mrf.mxu0
        %v2797 = vadd.f32 %v2708, %v2796
        %2798 = vmatmul.bf16.gmra.mxu0 %v2074
        %v2799 = vpop.f32.mrf.mxu0
        %v2800 = vadd.f32 %v2711, %v2799
        %v2801 = vpop.f32.mrf.mxu0
        %v2802 = vadd.f32 %v2713, %v2801
        %2803 = vmatmul.bf16.gmra.mxu0 %v2076
        %v2804 = vpop.f32.mrf.mxu0
        %v2805 = vadd.f32 %v2716, %v2804
        %v2806 = vpop.f32.mrf.mxu0
        %v2807 = vadd.f32 %v2718, %v2806
        %2808 = vmatmul.bf16.gmra.mxu0 %v2078
        %v2809 = vpop.f32.mrf.mxu0
        %v2810 = vadd.f32 %v2721, %v2809
        %v2811 = vpop.f32.mrf.mxu0
        %v2812 = vadd.f32 %v2723, %v2811
        %2813 = vmatmul.bf16.gmra.mxu0 %v2080
        %v2814 = vpop.f32.mrf.mxu0
        %v2815 = vadd.f32 %v2726, %v2814
        %v2816 = vpop.f32.mrf.mxu0
        %v2817 = vadd.f32 %v2728, %v2816
        %2818 = vmatmul.bf16.gmra.mxu0 %v2082
        %v2819 = vpop.f32.mrf.mxu0
        %v2820 = vadd.f32 %v2731, %v2819
        %v2821 = vpop.f32.mrf.mxu0
        %v2822 = vadd.f32 %v2733, %v2821
        %2823 = vmatmul.bf16.gmra.mxu0 %v2084
        %v2824 = vpop.f32.mrf.mxu0
        %v2825 = vadd.f32 %v2736, %v2824
        %v2826 = vpop.f32.mrf.mxu0
        %v2827 = vadd.f32 %v2738, %v2826
        %2828 = vdwg.mxu0
        %2829 = vmatpush.bf16.msra.mxu0 %v1683
        %2830 = vmatpush.bf16.msra.mxu0 %v1677
        %2831 = vmatpush.bf16.msra.mxu0 %v1671
        %2832 = vmatpush.bf16.msra.mxu0 %v1665
        %2833 = vmatpush.bf16.msra.mxu0 %v1659
        %2834 = vmatpush.bf16.msra.mxu0 %v1653
        %2835 = vmatpush.bf16.msra.mxu0 %v1647
        %2836 = vmatpush.bf16.msra.mxu0 %v1641
        %2837 = vmatmul.bf16.gmra.mxu0 %v2053
        %v2838 = vpop.f32.mrf.mxu0
        %v2839 = vadd.f32 %v1800, %v2838
        %v2840 = vpop.f32.mrf.mxu0
        %v2841 = vadd.f32 %v1805, %v2840
        %2842 = vmatmul.bf16.gmra.mxu0 %v2055
        %v2843 = vpop.f32.mrf.mxu0
        %v2844 = vadd.f32 %v1810, %v2843
        %v2845 = vpop.f32.mrf.mxu0
        %v2846 = vadd.f32 %v1815, %v2845
        %2847 = vmatmul.bf16.gmra.mxu0 %v2057
        %v2848 = vpop.f32.mrf.mxu0
        %v2849 = vadd.f32 %v1820, %v2848
        %v2850 = vpop.f32.mrf.mxu0
        %v2851 = vadd.f32 %v1825, %v2850
        %2852 = vmatmul.bf16.gmra.mxu0 %v2059
        %v2853 = vpop.f32.mrf.mxu0
        %v2854 = vadd.f32 %v1830, %v2853
        %v2855 = vpop.f32.mrf.mxu0
        %v2856 = vadd.f32 %v1835, %v2855
        %2857 = vmatmul.bf16.gmra.mxu0 %v2061
        %v2858 = vpop.f32.mrf.mxu0
        %v2859 = vadd.f32 %v1840, %v2858
        %v2860 = vpop.f32.mrf.mxu0
        %v2861 = vadd.f32 %v1845, %v2860
        %2862 = vmatmul.bf16.gmra.mxu0 %v2063
        %v2863 = vpop.f32.mrf.mxu0
        %v2864 = vadd.f32 %v1850, %v2863
        %v2865 = vpop.f32.mrf.mxu0
        %v2866 = vadd.f32 %v1855, %v2865
        %2867 = vmatmul.bf16.gmra.mxu0 %v2065
        %v2868 = vpop.f32.mrf.mxu0
        %v2869 = vadd.f32 %v1860, %v2868
        %v2870 = vpop.f32.mrf.mxu0
        %v2871 = vadd.f32 %v1865, %v2870
        %2872 = vmatmul.bf16.gmra.mxu0 %v2067
        %v2873 = vpop.f32.mrf.mxu0
        %v2874 = vadd.f32 %v1870, %v2873
        %v2875 = vpop.f32.mrf.mxu0
        %v2876 = vadd.f32 %v1875, %v2875
        %2877 = vmatmul.bf16.gmra.mxu0 %v2069
        %v2878 = vpop.f32.mrf.mxu0
        %v2879 = vadd.f32 %v1880, %v2878
        %v2880 = vpop.f32.mrf.mxu0
        %v2881 = vadd.f32 %v1885, %v2880
        %2882 = vmatmul.bf16.gmra.mxu0 %v2071
        %v2883 = vpop.f32.mrf.mxu0
        %v2884 = vadd.f32 %v1890, %v2883
        %v2885 = vpop.f32.mrf.mxu0
        %v2886 = vadd.f32 %v1895, %v2885
        %2887 = vmatmul.bf16.gmra.mxu0 %v2073
        %v2888 = vpop.f32.mrf.mxu0
        %v2889 = vadd.f32 %v1900, %v2888
        %v2890 = vpop.f32.mrf.mxu0
        %v2891 = vadd.f32 %v1905, %v2890
        %2892 = vmatmul.bf16.gmra.mxu0 %v2075
        %v2893 = vpop.f32.mrf.mxu0
        %v2894 = vadd.f32 %v1910, %v2893
        %v2895 = vpop.f32.mrf.mxu0
        %v2896 = vadd.f32 %v1915, %v2895
        %2897 = vmatmul.bf16.gmra.mxu0 %v2077
        %v2898 = vpop.f32.mrf.mxu0
        %v2899 = vadd.f32 %v1920, %v2898
        %v2900 = vpop.f32.mrf.mxu0
        %v2901 = vadd.f32 %v1925, %v2900
        %2902 = vmatmul.bf16.gmra.mxu0 %v2079
        %v2903 = vpop.f32.mrf.mxu0
        %v2904 = vadd.f32 %v1930, %v2903
        %v2905 = vpop.f32.mrf.mxu0
        %v2906 = vadd.f32 %v1935, %v2905
        %2907 = vmatmul.bf16.gmra.mxu0 %v2081
        %v2908 = vpop.f32.mrf.mxu0
        %v2909 = vadd.f32 %v1940, %v2908
        %v2910 = vpop.f32.mrf.mxu0
        %v2911 = vadd.f32 %v1945, %v2910
        %2912 = vmatmul.bf16.gmra.mxu0 %v2083
        %v2913 = vpop.f32.mrf.mxu0
        %v2914 = vadd.f32 %v1950, %v2913
        %v2915 = vpop.f32.mrf.mxu0
        %v2916 = vadd.f32 %v1955, %v2915
        %2917 = vdwg.mxu0
        %2918 = vmatpush.bf16.msra.mxu0 %v1731
        %2919 = vmatpush.bf16.msra.mxu0 %v1725
        %2920 = vmatpush.bf16.msra.mxu0 %v1719
        %2921 = vmatpush.bf16.msra.mxu0 %v1713
        %2922 = vmatpush.bf16.msra.mxu0 %v1707
        %2923 = vmatpush.bf16.msra.mxu0 %v1701
        %2924 = vmatpush.bf16.msra.mxu0 %v1695
        %2925 = vmatpush.bf16.msra.mxu0 %v1689
        %2926 = vmatmul.bf16.gmra.mxu0 %v2054
        %v2927 = vpop.f32.mrf.mxu0
        %v2928 = vadd.f32 %v2839, %v2927
        %v2929 = vpop.f32.mrf.mxu0
        %v2930 = vadd.f32 %v2841, %v2929
        %2931 = vmatmul.bf16.gmra.mxu0 %v2056
        %v2932 = vpop.f32.mrf.mxu0
        %v2933 = vadd.f32 %v2844, %v2932
        %v2934 = vpop.f32.mrf.mxu0
        %v2935 = vadd.f32 %v2846, %v2934
        %2936 = vmatmul.bf16.gmra.mxu0 %v2058
        %v2937 = vpop.f32.mrf.mxu0
        %v2938 = vadd.f32 %v2849, %v2937
        %v2939 = vpop.f32.mrf.mxu0
        %v2940 = vadd.f32 %v2851, %v2939
        %2941 = vmatmul.bf16.gmra.mxu0 %v2060
        %v2942 = vpop.f32.mrf.mxu0
        %v2943 = vadd.f32 %v2854, %v2942
        %v2944 = vpop.f32.mrf.mxu0
        %v2945 = vadd.f32 %v2856, %v2944
        %2946 = vmatmul.bf16.gmra.mxu0 %v2062
        %v2947 = vpop.f32.mrf.mxu0
        %v2948 = vadd.f32 %v2859, %v2947
        %v2949 = vpop.f32.mrf.mxu0
        %v2950 = vadd.f32 %v2861, %v2949
        %2951 = vmatmul.bf16.gmra.mxu0 %v2064
        %v2952 = vpop.f32.mrf.mxu0
        %v2953 = vadd.f32 %v2864, %v2952
        %v2954 = vpop.f32.mrf.mxu0
        %v2955 = vadd.f32 %v2866, %v2954
        %2956 = vmatmul.bf16.gmra.mxu0 %v2066
        %v2957 = vpop.f32.mrf.mxu0
        %v2958 = vadd.f32 %v2869, %v2957
        %v2959 = vpop.f32.mrf.mxu0
        %v2960 = vadd.f32 %v2871, %v2959
        %2961 = vmatmul.bf16.gmra.mxu0 %v2068
        %v2962 = vpop.f32.mrf.mxu0
        %v2963 = vadd.f32 %v2874, %v2962
        %v2964 = vpop.f32.mrf.mxu0
        %v2965 = vadd.f32 %v2876, %v2964
        %2966 = vmatmul.bf16.gmra.mxu0 %v2070
        %v2967 = vpop.f32.mrf.mxu0
        %v2968 = vadd.f32 %v2879, %v2967
        %v2969 = vpop.f32.mrf.mxu0
        %v2970 = vadd.f32 %v2881, %v2969
        %2971 = vmatmul.bf16.gmra.mxu0 %v2072
        %v2972 = vpop.f32.mrf.mxu0
        %v2973 = vadd.f32 %v2884, %v2972
        %v2974 = vpop.f32.mrf.mxu0
        %v2975 = vadd.f32 %v2886, %v2974
        %2976 = vmatmul.bf16.gmra.mxu0 %v2074
        %v2977 = vpop.f32.mrf.mxu0
        %v2978 = vadd.f32 %v2889, %v2977
        %v2979 = vpop.f32.mrf.mxu0
        %v2980 = vadd.f32 %v2891, %v2979
        %2981 = vmatmul.bf16.gmra.mxu0 %v2076
        %v2982 = vpop.f32.mrf.mxu0
        %v2983 = vadd.f32 %v2894, %v2982
        %v2984 = vpop.f32.mrf.mxu0
        %v2985 = vadd.f32 %v2896, %v2984
        %2986 = vmatmul.bf16.gmra.mxu0 %v2078
        %v2987 = vpop.f32.mrf.mxu0
        %v2988 = vadd.f32 %v2899, %v2987
        %v2989 = vpop.f32.mrf.mxu0
        %v2990 = vadd.f32 %v2901, %v2989
        %2991 = vmatmul.bf16.gmra.mxu0 %v2080
        %v2992 = vpop.f32.mrf.mxu0
        %v2993 = vadd.f32 %v2904, %v2992
        %v2994 = vpop.f32.mrf.mxu0
        %v2995 = vadd.f32 %v2906, %v2994
        %2996 = vmatmul.bf16.gmra.mxu0 %v2082
        %v2997 = vpop.f32.mrf.mxu0
        %v2998 = vadd.f32 %v2909, %v2997
        %v2999 = vpop.f32.mrf.mxu0
        %v3000 = vadd.f32 %v2911, %v2999
        %3001 = vmatmul.bf16.gmra.mxu0 %v2084
        %v3002 = vpop.f32.mrf.mxu0
        %v3003 = vadd.f32 %v2914, %v3002
        %v3004 = vpop.f32.mrf.mxu0
        %v3005 = vadd.f32 %v2916, %v3004
        %3006 = vdwg.mxu0
        %3007 = vmatpush.bf16.msra.mxu0 %v1684
        %3008 = vmatpush.bf16.msra.mxu0 %v1678
        %3009 = vmatpush.bf16.msra.mxu0 %v1672
        %3010 = vmatpush.bf16.msra.mxu0 %v1666
        %3011 = vmatpush.bf16.msra.mxu0 %v1660
        %3012 = vmatpush.bf16.msra.mxu0 %v1654
        %3013 = vmatpush.bf16.msra.mxu0 %v1648
        %3014 = vmatpush.bf16.msra.mxu0 %v1642
        %3015 = vmatmul.bf16.gmra.mxu0 %v2053
        %v3016 = vpop.f32.mrf.mxu0
        %v3017 = vadd.f32 %v1800, %v3016
        %v3018 = vpop.f32.mrf.mxu0
        %v3019 = vadd.f32 %v1805, %v3018
        %3020 = vmatmul.bf16.gmra.mxu0 %v2055
        %v3021 = vpop.f32.mrf.mxu0
        %v3022 = vadd.f32 %v1810, %v3021
        %v3023 = vpop.f32.mrf.mxu0
        %v3024 = vadd.f32 %v1815, %v3023
        %3025 = vmatmul.bf16.gmra.mxu0 %v2057
        %v3026 = vpop.f32.mrf.mxu0
        %v3027 = vadd.f32 %v1820, %v3026
        %v3028 = vpop.f32.mrf.mxu0
        %v3029 = vadd.f32 %v1825, %v3028
        %3030 = vmatmul.bf16.gmra.mxu0 %v2059
        %v3031 = vpop.f32.mrf.mxu0
        %v3032 = vadd.f32 %v1830, %v3031
        %v3033 = vpop.f32.mrf.mxu0
        %v3034 = vadd.f32 %v1835, %v3033
        %3035 = vmatmul.bf16.gmra.mxu0 %v2061
        %v3036 = vpop.f32.mrf.mxu0
        %v3037 = vadd.f32 %v1840, %v3036
        %v3038 = vpop.f32.mrf.mxu0
        %v3039 = vadd.f32 %v1845, %v3038
        %3040 = vmatmul.bf16.gmra.mxu0 %v2063
        %v3041 = vpop.f32.mrf.mxu0
        %v3042 = vadd.f32 %v1850, %v3041
        %v3043 = vpop.f32.mrf.mxu0
        %v3044 = vadd.f32 %v1855, %v3043
        %3045 = vmatmul.bf16.gmra.mxu0 %v2065
        %v3046 = vpop.f32.mrf.mxu0
        %v3047 = vadd.f32 %v1860, %v3046
        %v3048 = vpop.f32.mrf.mxu0
        %v3049 = vadd.f32 %v1865, %v3048
        %3050 = vmatmul.bf16.gmra.mxu0 %v2067
        %v3051 = vpop.f32.mrf.mxu0
        %v3052 = vadd.f32 %v1870, %v3051
        %v3053 = vpop.f32.mrf.mxu0
        %v3054 = vadd.f32 %v1875, %v3053
        %3055 = vmatmul.bf16.gmra.mxu0 %v2069
        %v3056 = vpop.f32.mrf.mxu0
        %v3057 = vadd.f32 %v1880, %v3056
        %v3058 = vpop.f32.mrf.mxu0
        %v3059 = vadd.f32 %v1885, %v3058
        %3060 = vmatmul.bf16.gmra.mxu0 %v2071
        %v3061 = vpop.f32.mrf.mxu0
        %v3062 = vadd.f32 %v1890, %v3061
        %v3063 = vpop.f32.mrf.mxu0
        %v3064 = vadd.f32 %v1895, %v3063
        %3065 = vmatmul.bf16.gmra.mxu0 %v2073
        %v3066 = vpop.f32.mrf.mxu0
        %v3067 = vadd.f32 %v1900, %v3066
        %v3068 = vpop.f32.mrf.mxu0
        %v3069 = vadd.f32 %v1905, %v3068
        %3070 = vmatmul.bf16.gmra.mxu0 %v2075
        %v3071 = vpop.f32.mrf.mxu0
        %v3072 = vadd.f32 %v1910, %v3071
        %v3073 = vpop.f32.mrf.mxu0
        %v3074 = vadd.f32 %v1915, %v3073
        %3075 = vmatmul.bf16.gmra.mxu0 %v2077
        %v3076 = vpop.f32.mrf.mxu0
        %v3077 = vadd.f32 %v1920, %v3076
        %v3078 = vpop.f32.mrf.mxu0
        %v3079 = vadd.f32 %v1925, %v3078
        %3080 = vmatmul.bf16.gmra.mxu0 %v2079
        %v3081 = vpop.f32.mrf.mxu0
        %v3082 = vadd.f32 %v1930, %v3081
        %v3083 = vpop.f32.mrf.mxu0
        %v3084 = vadd.f32 %v1935, %v3083
        %3085 = vmatmul.bf16.gmra.mxu0 %v2081
        %v3086 = vpop.f32.mrf.mxu0
        %v3087 = vadd.f32 %v1940, %v3086
        %v3088 = vpop.f32.mrf.mxu0
        %v3089 = vadd.f32 %v1945, %v3088
        %3090 = vmatmul.bf16.gmra.mxu0 %v2083
        %v3091 = vpop.f32.mrf.mxu0
        %v3092 = vadd.f32 %v1950, %v3091
        %v3093 = vpop.f32.mrf.mxu0
        %v3094 = vadd.f32 %v1955, %v3093
        %3095 = vdwg.mxu0
        %3096 = vmatpush.bf16.msra.mxu0 %v1732
        %3097 = vmatpush.bf16.msra.mxu0 %v1726
        %3098 = vmatpush.bf16.msra.mxu0 %v1720
        %3099 = vmatpush.bf16.msra.mxu0 %v1714
        %3100 = vmatpush.bf16.msra.mxu0 %v1708
        %3101 = vmatpush.bf16.msra.mxu0 %v1702
        %3102 = vmatpush.bf16.msra.mxu0 %v1696
        %3103 = vmatpush.bf16.msra.mxu0 %v1690
        %3104 = vmatmul.bf16.gmra.mxu0 %v2054
        %v3105 = vpop.f32.mrf.mxu0
        %v3106 = vadd.f32 %v3017, %v3105
        %v3107 = vpop.f32.mrf.mxu0
        %v3108 = vadd.f32 %v3019, %v3107
        %3109 = vmatmul.bf16.gmra.mxu0 %v2056
        %v3110 = vpop.f32.mrf.mxu0
        %v3111 = vadd.f32 %v3022, %v3110
        %v3112 = vpop.f32.mrf.mxu0
        %v3113 = vadd.f32 %v3024, %v3112
        %3114 = vmatmul.bf16.gmra.mxu0 %v2058
        %v3115 = vpop.f32.mrf.mxu0
        %v3116 = vadd.f32 %v3027, %v3115
        %v3117 = vpop.f32.mrf.mxu0
        %v3118 = vadd.f32 %v3029, %v3117
        %3119 = vmatmul.bf16.gmra.mxu0 %v2060
        %v3120 = vpop.f32.mrf.mxu0
        %v3121 = vadd.f32 %v3032, %v3120
        %v3122 = vpop.f32.mrf.mxu0
        %v3123 = vadd.f32 %v3034, %v3122
        %3124 = vmatmul.bf16.gmra.mxu0 %v2062
        %v3125 = vpop.f32.mrf.mxu0
        %v3126 = vadd.f32 %v3037, %v3125
        %v3127 = vpop.f32.mrf.mxu0
        %v3128 = vadd.f32 %v3039, %v3127
        %3129 = vmatmul.bf16.gmra.mxu0 %v2064
        %v3130 = vpop.f32.mrf.mxu0
        %v3131 = vadd.f32 %v3042, %v3130
        %v3132 = vpop.f32.mrf.mxu0
        %v3133 = vadd.f32 %v3044, %v3132
        %3134 = vmatmul.bf16.gmra.mxu0 %v2066
        %v3135 = vpop.f32.mrf.mxu0
        %v3136 = vadd.f32 %v3047, %v3135
        %v3137 = vpop.f32.mrf.mxu0
        %v3138 = vadd.f32 %v3049, %v3137
        %3139 = vmatmul.bf16.gmra.mxu0 %v2068
        %v3140 = vpop.f32.mrf.mxu0
        %v3141 = vadd.f32 %v3052, %v3140
        %v3142 = vpop.f32.mrf.mxu0
        %v3143 = vadd.f32 %v3054, %v3142
        %3144 = vmatmul.bf16.gmra.mxu0 %v2070
        %v3145 = vpop.f32.mrf.mxu0
        %v3146 = vadd.f32 %v3057, %v3145
        %v3147 = vpop.f32.mrf.mxu0
        %v3148 = vadd.f32 %v3059, %v3147
        %3149 = vmatmul.bf16.gmra.mxu0 %v2072
        %v3150 = vpop.f32.mrf.mxu0
        %v3151 = vadd.f32 %v3062, %v3150
        %v3152 = vpop.f32.mrf.mxu0
        %v3153 = vadd.f32 %v3064, %v3152
        %3154 = vmatmul.bf16.gmra.mxu0 %v2074
        %v3155 = vpop.f32.mrf.mxu0
        %v3156 = vadd.f32 %v3067, %v3155
        %v3157 = vpop.f32.mrf.mxu0
        %v3158 = vadd.f32 %v3069, %v3157
        %3159 = vmatmul.bf16.gmra.mxu0 %v2076
        %v3160 = vpop.f32.mrf.mxu0
        %v3161 = vadd.f32 %v3072, %v3160
        %v3162 = vpop.f32.mrf.mxu0
        %v3163 = vadd.f32 %v3074, %v3162
        %3164 = vmatmul.bf16.gmra.mxu0 %v2078
        %v3165 = vpop.f32.mrf.mxu0
        %v3166 = vadd.f32 %v3077, %v3165
        %v3167 = vpop.f32.mrf.mxu0
        %v3168 = vadd.f32 %v3079, %v3167
        %3169 = vmatmul.bf16.gmra.mxu0 %v2080
        %v3170 = vpop.f32.mrf.mxu0
        %v3171 = vadd.f32 %v3082, %v3170
        %v3172 = vpop.f32.mrf.mxu0
        %v3173 = vadd.f32 %v3084, %v3172
        %3174 = vmatmul.bf16.gmra.mxu0 %v2082
        %v3175 = vpop.f32.mrf.mxu0
        %v3176 = vadd.f32 %v3087, %v3175
        %v3177 = vpop.f32.mrf.mxu0
        %v3178 = vadd.f32 %v3089, %v3177
        %3179 = vmatmul.bf16.gmra.mxu0 %v2084
        %v3180 = vpop.f32.mrf.mxu0
        %v3181 = vadd.f32 %v3092, %v3180
        %v3182 = vpop.f32.mrf.mxu0
        %v3183 = vadd.f32 %v3094, %v3182
        %3184 = vdwg.mxu0
        %v3185 = vmax.f32 %v2216, 0.0
        %v3186 = vmax.f32 %v2394, 0.0
        %v3187 = vmax.f32 %v2572, 0.0
        %v3188 = vmax.f32 %v2750, 0.0
        %v3189 = vmax.f32 %v2928, 0.0
        %v3190 = vmax.f32 %v3106, 0.0
        %v3191 = vmax.f32 %v2218, 0.0
        %v3192 = vmax.f32 %v2396, 0.0
        %v3193 = vmax.f32 %v2574, 0.0
        %v3194 = vmax.f32 %v2752, 0.0
        %v3195 = vmax.f32 %v2930, 0.0
        %v3196 = vmax.f32 %v3108, 0.0
        %v3197 = vmax.f32 %v2221, 0.0
        %v3198 = vmax.f32 %v2399, 0.0
        %v3199 = vmax.f32 %v2577, 0.0
        %v3200 = vmax.f32 %v2755, 0.0
        %v3201 = vmax.f32 %v2933, 0.0
        %v3202 = vmax.f32 %v3111, 0.0
        %v3203 = vmax.f32 %v2223, 0.0
        %v3204 = vmax.f32 %v2401, 0.0
        %v3205 = vmax.f32 %v2579, 0.0
        %v3206 = vmax.f32 %v2757, 0.0
        %v3207 = vmax.f32 %v2935, 0.0
        %v3208 = vmax.f32 %v3113, 0.0
        %v3209 = vmax.f32 %v2226, 0.0
        %v3210 = vmax.f32 %v2404, 0.0
        %v3211 = vmax.f32 %v2582, 0.0
        %v3212 = vmax.f32 %v2760, 0.0
        %v3213 = vmax.f32 %v2938, 0.0
        %v3214 = vmax.f32 %v3116, 0.0
        %v3215 = vmax.f32 %v2228, 0.0
        %v3216 = vmax.f32 %v2406, 0.0
        %v3217 = vmax.f32 %v2584, 0.0
        %v3218 = vmax.f32 %v2762, 0.0
        %v3219 = vmax.f32 %v2940, 0.0
        %v3220 = vmax.f32 %v3118, 0.0
        %v3221 = vmax.f32 %v2231, 0.0
        %v3222 = vmax.f32 %v2409, 0.0
        %v3223 = vmax.f32 %v2587, 0.0
        %v3224 = vmax.f32 %v2765, 0.0
        %v3225 = vmax.f32 %v2943, 0.0
        %v3226 = vmax.f32 %v3121, 0.0
        %v3227 = vmax.f32 %v2233, 0.0
        %v3228 = vmax.f32 %v2411, 0.0
        %v3229 = vmax.f32 %v2589, 0.0
        %v3230 = vmax.f32 %v2767, 0.0
        %v3231 = vmax.f32 %v2945, 0.0
        %v3232 = vmax.f32 %v3123, 0.0
        %v3233 = vmax.f32 %v2236, 0.0
        %v3234 = vmax.f32 %v2414, 0.0
        %v3235 = vmax.f32 %v2592, 0.0
        %v3236 = vmax.f32 %v2770, 0.0
        %v3237 = vmax.f32 %v2948, 0.0
        %v3238 = vmax.f32 %v3126, 0.0
        %v3239 = vmax.f32 %v2238, 0.0
        %v3240 = vmax.f32 %v2416, 0.0
        %v3241 = vmax.f32 %v2594, 0.0
        %v3242 = vmax.f32 %v2772, 0.0
        %v3243 = vmax.f32 %v2950, 0.0
        %v3244 = vmax.f32 %v3128, 0.0
        %v3245 = vmax.f32 %v2241, 0.0
        %v3246 = vmax.f32 %v2419, 0.0
        %v3247 = vmax.f32 %v2597, 0.0
        %v3248 = vmax.f32 %v2775, 0.0
        %v3249 = vmax.f32 %v2953, 0.0
        %v3250 = vmax.f32 %v3131, 0.0
        %v3251 = vmax.f32 %v2243, 0.0
        %v3252 = vmax.f32 %v2421, 0.0
        %v3253 = vmax.f32 %v2599, 0.0
        %v3254 = vmax.f32 %v2777, 0.0
        %v3255 = vmax.f32 %v2955, 0.0
        %v3256 = vmax.f32 %v3133, 0.0
        %v3257 = vmax.f32 %v2246, 0.0
        %v3258 = vmax.f32 %v2424, 0.0
        %v3259 = vmax.f32 %v2602, 0.0
        %v3260 = vmax.f32 %v2780, 0.0
        %v3261 = vmax.f32 %v2958, 0.0
        %v3262 = vmax.f32 %v3136, 0.0
        %v3263 = vmax.f32 %v2248, 0.0
        %v3264 = vmax.f32 %v2426, 0.0
        %v3265 = vmax.f32 %v2604, 0.0
        %v3266 = vmax.f32 %v2782, 0.0
        %v3267 = vmax.f32 %v2960, 0.0
        %v3268 = vmax.f32 %v3138, 0.0
        %v3269 = vmax.f32 %v2251, 0.0
        %v3270 = vmax.f32 %v2429, 0.0
        %v3271 = vmax.f32 %v2607, 0.0
        %v3272 = vmax.f32 %v2785, 0.0
        %v3273 = vmax.f32 %v2963, 0.0
        %v3274 = vmax.f32 %v3141, 0.0
        %v3275 = vmax.f32 %v2253, 0.0
        %v3276 = vmax.f32 %v2431, 0.0
        %v3277 = vmax.f32 %v2609, 0.0
        %v3278 = vmax.f32 %v2787, 0.0
        %v3279 = vmax.f32 %v2965, 0.0
        %v3280 = vmax.f32 %v3143, 0.0
        %v3281 = vmax.f32 %v2256, 0.0
        %v3282 = vmax.f32 %v2434, 0.0
        %v3283 = vmax.f32 %v2612, 0.0
        %v3284 = vmax.f32 %v2790, 0.0
        %v3285 = vmax.f32 %v2968, 0.0
        %v3286 = vmax.f32 %v3146, 0.0
        %v3287 = vmax.f32 %v2258, 0.0
        %v3288 = vmax.f32 %v2436, 0.0
        %v3289 = vmax.f32 %v2614, 0.0
        %v3290 = vmax.f32 %v2792, 0.0
        %v3291 = vmax.f32 %v2970, 0.0
        %v3292 = vmax.f32 %v3148, 0.0
        %v3293 = vmax.f32 %v2261, 0.0
        %v3294 = vmax.f32 %v2439, 0.0
        %v3295 = vmax.f32 %v2617, 0.0
        %v3296 = vmax.f32 %v2795, 0.0
        %v3297 = vmax.f32 %v2973, 0.0
        %v3298 = vmax.f32 %v3151, 0.0
        %v3299 = vmax.f32 %v2263, 0.0
        %v3300 = vmax.f32 %v2441, 0.0
        %v3301 = vmax.f32 %v2619, 0.0
        %v3302 = vmax.f32 %v2797, 0.0
        %v3303 = vmax.f32 %v2975, 0.0
        %v3304 = vmax.f32 %v3153, 0.0
        %v3305 = vmax.f32 %v2266, 0.0
        %v3306 = vmax.f32 %v2444, 0.0
        %v3307 = vmax.f32 %v2622, 0.0
        %v3308 = vmax.f32 %v2800, 0.0
        %v3309 = vmax.f32 %v2978, 0.0
        %v3310 = vmax.f32 %v3156, 0.0
        %v3311 = vmax.f32 %v2268, 0.0
        %v3312 = vmax.f32 %v2446, 0.0
        %v3313 = vmax.f32 %v2624, 0.0
        %v3314 = vmax.f32 %v2802, 0.0
        %v3315 = vmax.f32 %v2980, 0.0
        %v3316 = vmax.f32 %v3158, 0.0
        %v3317 = vmax.f32 %v2271, 0.0
        %v3318 = vmax.f32 %v2449, 0.0
        %v3319 = vmax.f32 %v2627, 0.0
        %v3320 = vmax.f32 %v2805, 0.0
        %v3321 = vmax.f32 %v2983, 0.0
        %v3322 = vmax.f32 %v3161, 0.0
        %v3323 = vmax.f32 %v2273, 0.0
        %v3324 = vmax.f32 %v2451, 0.0
        %v3325 = vmax.f32 %v2629, 0.0
        %v3326 = vmax.f32 %v2807, 0.0
        %v3327 = vmax.f32 %v2985, 0.0
        %v3328 = vmax.f32 %v3163, 0.0
        %v3329 = vmax.f32 %v2276, 0.0
        %v3330 = vmax.f32 %v2454, 0.0
        %v3331 = vmax.f32 %v2632, 0.0
        %v3332 = vmax.f32 %v2810, 0.0
        %v3333 = vmax.f32 %v2988, 0.0
        %v3334 = vmax.f32 %v3166, 0.0
        %v3335 = vmax.f32 %v2278, 0.0
        %v3336 = vmax.f32 %v2456, 0.0
        %v3337 = vmax.f32 %v2634, 0.0
        %v3338 = vmax.f32 %v2812, 0.0
        %v3339 = vmax.f32 %v2990, 0.0
        %v3340 = vmax.f32 %v3168, 0.0
        %v3341 = vmax.f32 %v2281, 0.0
        %v3342 = vmax.f32 %v2459, 0.0
        %v3343 = vmax.f32 %v2637, 0.0
        %v3344 = vmax.f32 %v2815, 0.0
        %v3345 = vmax.f32 %v2993, 0.0
        %v3346 = vmax.f32 %v3171, 0.0
        %v3347 = vmax.f32 %v2283, 0.0
        %v3348 = vmax.f32 %v2461, 0.0
        %v3349 = vmax.f32 %v2639, 0.0
        %v3350 = vmax.f32 %v2817, 0.0
        %v3351 = vmax.f32 %v2995, 0.0
        %v3352 = vmax.f32 %v3173, 0.0
        %v3353 = vmax.f32 %v2286, 0.0
        %v3354 = vmax.f32 %v2464, 0.0
        %v3355 = vmax.f32 %v2642, 0.0
        %v3356 = vmax.f32 %v2820, 0.0
        %v3357 = vmax.f32 %v2998, 0.0
        %v3358 = vmax.f32 %v3176, 0.0
        %v3359 = vmax.f32 %v2288, 0.0
        %v3360 = vmax.f32 %v2466, 0.0
        %v3361 = vmax.f32 %v2644, 0.0
        %v3362 = vmax.f32 %v2822, 0.0
        %v3363 = vmax.f32 %v3000, 0.0
        %v3364 = vmax.f32 %v3178, 0.0
        %v3365 = vmax.f32 %v2291, 0.0
        %v3366 = vmax.f32 %v2469, 0.0
        %v3367 = vmax.f32 %v2647, 0.0
        %v3368 = vmax.f32 %v2825, 0.0
        %v3369 = vmax.f32 %v3003, 0.0
        %v3370 = vmax.f32 %v3181, 0.0
        %v3371 = vmax.f32 %v2293, 0.0
        %v3372 = vmax.f32 %v2471, 0.0
        %v3373 = vmax.f32 %v2649, 0.0
        %v3374 = vmax.f32 %v2827, 0.0
        %v3375 = vmax.f32 %v3005, 0.0
        %v3376 = vmax.f32 %v3183, 0.0
        %v3377 = vpack.c.bf16 %v3191, %v3185
        %v3378 = vpack.c.bf16 %v3192, %v3186
        %v3379 = vpack.c.bf16 %v3193, %v3187
        %v3380 = vpack.c.bf16 %v3194, %v3188
        %v3381 = vpack.c.bf16 %v3195, %v3189
        %v3382 = vpack.c.bf16 %v3196, %v3190
        %v3383 = vpack.c.bf16 %v3203, %v3197
        %v3384 = vpack.c.bf16 %v3204, %v3198
        %v3385 = vpack.c.bf16 %v3205, %v3199
        %v3386 = vpack.c.bf16 %v3206, %v3200
        %v3387 = vpack.c.bf16 %v3207, %v3201
        %v3388 = vpack.c.bf16 %v3208, %v3202
        %v3389 = vpack.c.bf16 %v3215, %v3209
        %v3390 = vpack.c.bf16 %v3216, %v3210
        %v3391 = vpack.c.bf16 %v3217, %v3211
        %v3392 = vpack.c.bf16 %v3218, %v3212
        %v3393 = vpack.c.bf16 %v3219, %v3213
        %v3394 = vpack.c.bf16 %v3220, %v3214
        %v3395 = vpack.c.bf16 %v3227, %v3221
        %v3396 = vpack.c.bf16 %v3228, %v3222
        %v3397 = vpack.c.bf16 %v3229, %v3223
        %v3398 = vpack.c.bf16 %v3230, %v3224
        %v3399 = vpack.c.bf16 %v3231, %v3225
        %v3400 = vpack.c.bf16 %v3232, %v3226
        %v3401 = vpack.c.bf16 %v3239, %v3233
        %v3402 = vpack.c.bf16 %v3240, %v3234
        %v3403 = vpack.c.bf16 %v3241, %v3235
        %v3404 = vpack.c.bf16 %v3242, %v3236
        %v3405 = vpack.c.bf16 %v3243, %v3237
        %v3406 = vpack.c.bf16 %v3244, %v3238
        %v3407 = vpack.c.bf16 %v3251, %v3245
        %v3408 = vpack.c.bf16 %v3252, %v3246
        %v3409 = vpack.c.bf16 %v3253, %v3247
        %v3410 = vpack.c.bf16 %v3254, %v3248
        %v3411 = vpack.c.bf16 %v3255, %v3249
        %v3412 = vpack.c.bf16 %v3256, %v3250
        %v3413 = vpack.c.bf16 %v3263, %v3257
        %v3414 = vpack.c.bf16 %v3264, %v3258
        %v3415 = vpack.c.bf16 %v3265, %v3259
        %v3416 = vpack.c.bf16 %v3266, %v3260
        %v3417 = vpack.c.bf16 %v3267, %v3261
        %v3418 = vpack.c.bf16 %v3268, %v3262
        %v3419 = vpack.c.bf16 %v3275, %v3269
        %v3420 = vpack.c.bf16 %v3276, %v3270
        %v3421 = vpack.c.bf16 %v3277, %v3271
        %v3422 = vpack.c.bf16 %v3278, %v3272
        %v3423 = vpack.c.bf16 %v3279, %v3273
        %v3424 = vpack.c.bf16 %v3280, %v3274
        %v3425 = vpack.c.bf16 %v3287, %v3281
        %v3426 = vpack.c.bf16 %v3288, %v3282
        %v3427 = vpack.c.bf16 %v3289, %v3283
        %v3428 = vpack.c.bf16 %v3290, %v3284
        %v3429 = vpack.c.bf16 %v3291, %v3285
        %v3430 = vpack.c.bf16 %v3292, %v3286
        %v3431 = vpack.c.bf16 %v3299, %v3293
        %v3432 = vpack.c.bf16 %v3300, %v3294
        %v3433 = vpack.c.bf16 %v3301, %v3295
        %v3434 = vpack.c.bf16 %v3302, %v3296
        %v3435 = vpack.c.bf16 %v3303, %v3297
        %v3436 = vpack.c.bf16 %v3304, %v3298
        %v3437 = vpack.c.bf16 %v3311, %v3305
        %v3438 = vpack.c.bf16 %v3312, %v3306
        %v3439 = vpack.c.bf16 %v3313, %v3307
        %v3440 = vpack.c.bf16 %v3314, %v3308
        %v3441 = vpack.c.bf16 %v3315, %v3309
        %v3442 = vpack.c.bf16 %v3316, %v3310
        %v3443 = vpack.c.bf16 %v3323, %v3317
        %v3444 = vpack.c.bf16 %v3324, %v3318
        %v3445 = vpack.c.bf16 %v3325, %v3319
        %v3446 = vpack.c.bf16 %v3326, %v3320
        %v3447 = vpack.c.bf16 %v3327, %v3321
        %v3448 = vpack.c.bf16 %v3328, %v3322
        %v3449 = vpack.c.bf16 %v3335, %v3329
        %v3450 = vpack.c.bf16 %v3336, %v3330
        %v3451 = vpack.c.bf16 %v3337, %v3331
        %v3452 = vpack.c.bf16 %v3338, %v3332
        %v3453 = vpack.c.bf16 %v3339, %v3333
        %v3454 = vpack.c.bf16 %v3340, %v3334
        %v3455 = vpack.c.bf16 %v3347, %v3341
        %v3456 = vpack.c.bf16 %v3348, %v3342
        %v3457 = vpack.c.bf16 %v3349, %v3343
        %v3458 = vpack.c.bf16 %v3350, %v3344
        %v3459 = vpack.c.bf16 %v3351, %v3345
        %v3460 = vpack.c.bf16 %v3352, %v3346
        %v3461 = vpack.c.bf16 %v3359, %v3353
        %v3462 = vpack.c.bf16 %v3360, %v3354
        %v3463 = vpack.c.bf16 %v3361, %v3355
        %v3464 = vpack.c.bf16 %v3362, %v3356
        %v3465 = vpack.c.bf16 %v3363, %v3357
        %v3466 = vpack.c.bf16 %v3364, %v3358
        %v3467 = vpack.c.bf16 %v3371, %v3365
        %v3468 = vpack.c.bf16 %v3372, %v3366
        %v3469 = vpack.c.bf16 %v3373, %v3367
        %v3470 = vpack.c.bf16 %v3374, %v3368
        %v3471 = vpack.c.bf16 %v3375, %v3369
        %v3472 = vpack.c.bf16 %v3376, %v3370
        %v3473 = vld [vmem:[%s5] sm:$0x3]
        %v3474 = vld [vmem:[#allocation2] sm:$0x1]
        %3476 = vset.pattern.permute.xlu0 0
        %3477 = vperm.xlu0 %3476, %v3474
        %v3478 = vpop.permute.xlu0 %3477
        %v3480 = vperm.slane %v3478, 0
        %3482 = vst [vmem:[#allocation1] ss:$9 sm:$0xff] %v3473
        %v3483 = vld [vmem:[#allocation1] sm:$0xff]
        %v3484 = vld [vmem:[#allocation1 + $0x9] sm:$0xff]
        %3487 = vmatpush.bf16.msra.mxu0 %v3419
        %3488 = vmatpush.bf16.msra.mxu0 %v3413
        %3489 = vmatpush.bf16.msra.mxu0 %v3407
        %3490 = vmatpush.bf16.msra.mxu0 %v3401
        %3491 = vmatpush.bf16.msra.mxu0 %v3395
        %3492 = vmatpush.bf16.msra.mxu0 %v3389
        %3493 = vmatpush.bf16.msra.mxu0 %v3383
        %3494 = vmatpush.bf16.msra.mxu0 %v3377
        %3495 = vmatmul.bf16.gmra.mxu0 %v3483
        %v3496 = vpop.f32.mrf.mxu0
        %v3497 = vadd.f32 %v3480, %v3496
        %v3498 = vpop.f32.mrf.mxu0
        %3499 = vdwg.mxu0
        %3500 = vmatpush.bf16.msra.mxu0 %v3467
        %3501 = vmatpush.bf16.msra.mxu0 %v3461
        %3502 = vmatpush.bf16.msra.mxu0 %v3455
        %3503 = vmatpush.bf16.msra.mxu0 %v3449
        %3504 = vmatpush.bf16.msra.mxu0 %v3443
        %3505 = vmatpush.bf16.msra.mxu0 %v3437
        %3506 = vmatpush.bf16.msra.mxu0 %v3431
        %3507 = vmatpush.bf16.msra.mxu0 %v3425
        %3508 = vmatmul.bf16.gmra.mxu0 %v3484
        %v3509 = vpop.f32.mrf.mxu0
        %v3510 = vadd.f32 %v3497, %v3509
        %v3511 = vpop.f32.mrf.mxu0
        %3512 = vdwg.mxu0
        %3513 = vmatpush.bf16.msra.mxu0 %v3420
        %3514 = vmatpush.bf16.msra.mxu0 %v3414
        %3515 = vmatpush.bf16.msra.mxu0 %v3408
        %3516 = vmatpush.bf16.msra.mxu0 %v3402
        %3517 = vmatpush.bf16.msra.mxu0 %v3396
        %3518 = vmatpush.bf16.msra.mxu0 %v3390
        %3519 = vmatpush.bf16.msra.mxu0 %v3384
        %3520 = vmatpush.bf16.msra.mxu0 %v3378
        %3521 = vmatmul.bf16.gmra.mxu0 %v3483
        %v3522 = vpop.f32.mrf.mxu0
        %v3523 = vadd.f32 %v3480, %v3522
        %v3524 = vpop.f32.mrf.mxu0
        %3525 = vdwg.mxu0
        %3526 = vmatpush.bf16.msra.mxu0 %v3468
        %3527 = vmatpush.bf16.msra.mxu0 %v3462
        %3528 = vmatpush.bf16.msra.mxu0 %v3456
        %3529 = vmatpush.bf16.msra.mxu0 %v3450
        %3530 = vmatpush.bf16.msra.mxu0 %v3444
        %3531 = vmatpush.bf16.msra.mxu0 %v3438
        %3532 = vmatpush.bf16.msra.mxu0 %v3432
        %3533 = vmatpush.bf16.msra.mxu0 %v3426
        %3534 = vmatmul.bf16.gmra.mxu0 %v3484
        %v3535 = vpop.f32.mrf.mxu0
        %v3536 = vadd.f32 %v3523, %v3535
        %v3537 = vpop.f32.mrf.mxu0
        %3538 = vdwg.mxu0
        %3539 = vmatpush.bf16.msra.mxu0 %v3421
        %3540 = vmatpush.bf16.msra.mxu0 %v3415
        %3541 = vmatpush.bf16.msra.mxu0 %v3409
        %3542 = vmatpush.bf16.msra.mxu0 %v3403
        %3543 = vmatpush.bf16.msra.mxu0 %v3397
        %3544 = vmatpush.bf16.msra.mxu0 %v3391
        %3545 = vmatpush.bf16.msra.mxu0 %v3385
        %3546 = vmatpush.bf16.msra.mxu0 %v3379
        %3547 = vmatmul.bf16.gmra.mxu0 %v3483
        %v3548 = vpop.f32.mrf.mxu0
        %v3549 = vadd.f32 %v3480, %v3548
        %v3550 = vpop.f32.mrf.mxu0
        %3551 = vdwg.mxu0
        %3552 = vmatpush.bf16.msra.mxu0 %v3469
        %3553 = vmatpush.bf16.msra.mxu0 %v3463
        %3554 = vmatpush.bf16.msra.mxu0 %v3457
        %3555 = vmatpush.bf16.msra.mxu0 %v3451
        %3556 = vmatpush.bf16.msra.mxu0 %v3445
        %3557 = vmatpush.bf16.msra.mxu0 %v3439
        %3558 = vmatpush.bf16.msra.mxu0 %v3433
        %3559 = vmatpush.bf16.msra.mxu0 %v3427
        %3560 = vmatmul.bf16.gmra.mxu0 %v3484
        %v3561 = vpop.f32.mrf.mxu0
        %v3562 = vadd.f32 %v3549, %v3561
        %v3563 = vpop.f32.mrf.mxu0
        %3564 = vdwg.mxu0
        %3565 = vmatpush.bf16.msra.mxu0 %v3422
        %3566 = vmatpush.bf16.msra.mxu0 %v3416
        %3567 = vmatpush.bf16.msra.mxu0 %v3410
        %3568 = vmatpush.bf16.msra.mxu0 %v3404
        %3569 = vmatpush.bf16.msra.mxu0 %v3398
        %3570 = vmatpush.bf16.msra.mxu0 %v3392
        %3571 = vmatpush.bf16.msra.mxu0 %v3386
        %3572 = vmatpush.bf16.msra.mxu0 %v3380
        %3573 = vmatmul.bf16.gmra.mxu0 %v3483
        %v3574 = vpop.f32.mrf.mxu0
        %v3575 = vadd.f32 %v3480, %v3574
        %v3576 = vpop.f32.mrf.mxu0
        %3577 = vdwg.mxu0
        %3578 = vmatpush.bf16.msra.mxu0 %v3470
        %3579 = vmatpush.bf16.msra.mxu0 %v3464
        %3580 = vmatpush.bf16.msra.mxu0 %v3458
        %3581 = vmatpush.bf16.msra.mxu0 %v3452
        %3582 = vmatpush.bf16.msra.mxu0 %v3446
        %3583 = vmatpush.bf16.msra.mxu0 %v3440
        %3584 = vmatpush.bf16.msra.mxu0 %v3434
        %3585 = vmatpush.bf16.msra.mxu0 %v3428
        %3586 = vmatmul.bf16.gmra.mxu0 %v3484
        %v3587 = vpop.f32.mrf.mxu0
        %v3588 = vadd.f32 %v3575, %v3587
        %v3589 = vpop.f32.mrf.mxu0
        %3590 = vdwg.mxu0
        %3591 = vmatpush.bf16.msra.mxu0 %v3423
        %3592 = vmatpush.bf16.msra.mxu0 %v3417
        %3593 = vmatpush.bf16.msra.mxu0 %v3411
        %3594 = vmatpush.bf16.msra.mxu0 %v3405
        %3595 = vmatpush.bf16.msra.mxu0 %v3399
        %3596 = vmatpush.bf16.msra.mxu0 %v3393
        %3597 = vmatpush.bf16.msra.mxu0 %v3387
        %3598 = vmatpush.bf16.msra.mxu0 %v3381
        %3599 = vmatmul.bf16.gmra.mxu0 %v3483
        %v3600 = vpop.f32.mrf.mxu0
        %v3601 = vadd.f32 %v3480, %v3600
        %v3602 = vpop.f32.mrf.mxu0
        %3603 = vdwg.mxu0
        %3604 = vmatpush.bf16.msra.mxu0 %v3471
        %3605 = vmatpush.bf16.msra.mxu0 %v3465
        %3606 = vmatpush.bf16.msra.mxu0 %v3459
        %3607 = vmatpush.bf16.msra.mxu0 %v3453
        %3608 = vmatpush.bf16.msra.mxu0 %v3447
        %3609 = vmatpush.bf16.msra.mxu0 %v3441
        %3610 = vmatpush.bf16.msra.mxu0 %v3435
        %3611 = vmatpush.bf16.msra.mxu0 %v3429
        %3612 = vmatmul.bf16.gmra.mxu0 %v3484
        %v3613 = vpop.f32.mrf.mxu0
        %v3614 = vadd.f32 %v3601, %v3613
        %v3615 = vpop.f32.mrf.mxu0
        %3616 = vdwg.mxu0
        %3617 = vmatpush.bf16.msra.mxu0 %v3424
        %3618 = vmatpush.bf16.msra.mxu0 %v3418
        %3619 = vmatpush.bf16.msra.mxu0 %v3412
        %3620 = vmatpush.bf16.msra.mxu0 %v3406
        %3621 = vmatpush.bf16.msra.mxu0 %v3400
        %3622 = vmatpush.bf16.msra.mxu0 %v3394
        %3623 = vmatpush.bf16.msra.mxu0 %v3388
        %3624 = vmatpush.bf16.msra.mxu0 %v3382
        %3625 = vmatmul.bf16.gmra.mxu0 %v3483
        %v3626 = vpop.f32.mrf.mxu0
        %v3627 = vadd.f32 %v3480, %v3626
        %v3628 = vpop.f32.mrf.mxu0
        %3629 = vdwg.mxu0
        %3630 = vmatpush.bf16.msra.mxu0 %v3472
        %3631 = vmatpush.bf16.msra.mxu0 %v3466
        %3632 = vmatpush.bf16.msra.mxu0 %v3460
        %3633 = vmatpush.bf16.msra.mxu0 %v3454
        %3634 = vmatpush.bf16.msra.mxu0 %v3448
        %3635 = vmatpush.bf16.msra.mxu0 %v3442
        %3636 = vmatpush.bf16.msra.mxu0 %v3436
        %3637 = vmatpush.bf16.msra.mxu0 %v3430
        %3638 = vmatmul.bf16.gmra.mxu0 %v3484
        %v3639 = vpop.f32.mrf.mxu0
        %v3640 = vadd.f32 %v3627, %v3639
        %v3641 = vpop.f32.mrf.mxu0
        %3642 = vdwg.mxu0
        %v3643 = vxor.u32 %v3510, 2147483648
        %v3644 = vxor.u32 %v3536, 2147483648
        %v3645 = vxor.u32 %v3562, 2147483648
        %v3646 = vxor.u32 %v3588, 2147483648
        %v3647 = vxor.u32 %v3614, 2147483648
        %v3648 = vxor.u32 %v3640, 2147483648
        %v3649 = vmul.f32 %v3643, 1.442695
        %v3650 = vpow.pop %v3649
        %v3651 = vmul.f32 %v3644, 1.442695
        %v3652 = vpow.pop %v3651
        %v3653 = vmul.f32 %v3645, 1.442695
        %v3654 = vpow.pop %v3653
        %v3655 = vmul.f32 %v3646, 1.442695
        %v3656 = vpow.pop %v3655
        %v3657 = vmul.f32 %v3647, 1.442695
        %v3658 = vpow.pop %v3657
        %v3659 = vmul.f32 %v3648, 1.442695
        %v3660 = vpow.pop %v3659
        %v3661 = vadd.f32 %v3650, 1.0
        %v3662 = vadd.f32 %v3652, 1.0
        %v3663 = vadd.f32 %v3654, 1.0
        %v3664 = vadd.f32 %v3656, 1.0
        %v3665 = vadd.f32 %v3658, 1.0
        %v3666 = vadd.f32 %v3660, 1.0
        %v3667 = vrcp.pop %v3661
        %v3668 = vmul.f32 %v3661, %v3667
        %v3669 = vsub.f32 1.0, %v3668
        %v3670 = vmul.f32 %v3667, %v3669
        %v3671 = vadd.f32 %v3667, %v3670
        %vm3672 = vweird.f32 %v3661
        %vm3673 = vweird.f32 %v3667
        %vm3674 = vmor %vm3672, %vm3673
        %v3675 = vsel %vm3674, %v3667, %v3671
        %v3676 = vand.u32 2147483647, %v3661
        %vm3677 = vcmp.eq.f32.partialorder %v3676, 8.507059e+37
        %v3678 = vand.u32 %v3661, 2147483648
        %v3679 = vor.u32 1.1754944e-38, %v3678
        %v3680 = vsel %vm3677, %v3679, %v3675
        %v3681 = vmul.f32 1.0, %v3680
        %v3682 = vrcp.pop %v3662
        %v3683 = vmul.f32 %v3662, %v3682
        %v3684 = vsub.f32 1.0, %v3683
        %v3685 = vmul.f32 %v3682, %v3684
        %v3686 = vadd.f32 %v3682, %v3685
        %vm3687 = vweird.f32 %v3662
        %vm3688 = vweird.f32 %v3682
        %vm3689 = vmor %vm3687, %vm3688
        %v3690 = vsel %vm3689, %v3682, %v3686
        %v3691 = vand.u32 2147483647, %v3662
        %vm3692 = vcmp.eq.f32.partialorder %v3691, 8.507059e+37
        %v3693 = vand.u32 %v3662, 2147483648
        %v3694 = vor.u32 1.1754944e-38, %v3693
        %v3695 = vsel %vm3692, %v3694, %v3690
        %v3696 = vmul.f32 1.0, %v3695
        %v3697 = vrcp.pop %v3663
        %v3698 = vmul.f32 %v3663, %v3697
        %v3699 = vsub.f32 1.0, %v3698
        %v3700 = vmul.f32 %v3697, %v3699
        %v3701 = vadd.f32 %v3697, %v3700
        %vm3702 = vweird.f32 %v3663
        %vm3703 = vweird.f32 %v3697
        %vm3704 = vmor %vm3702, %vm3703
        %v3705 = vsel %vm3704, %v3697, %v3701
        %v3706 = vand.u32 2147483647, %v3663
        %vm3707 = vcmp.eq.f32.partialorder %v3706, 8.507059e+37
        %v3708 = vand.u32 %v3663, 2147483648
        %v3709 = vor.u32 1.1754944e-38, %v3708
        %v3710 = vsel %vm3707, %v3709, %v3705
        %v3711 = vmul.f32 1.0, %v3710
        %v3712 = vrcp.pop %v3664
        %v3713 = vmul.f32 %v3664, %v3712
        %v3714 = vsub.f32 1.0, %v3713
        %v3715 = vmul.f32 %v3712, %v3714
        %v3716 = vadd.f32 %v3712, %v3715
        %vm3717 = vweird.f32 %v3664
        %vm3718 = vweird.f32 %v3712
        %vm3719 = vmor %vm3717, %vm3718
        %v3720 = vsel %vm3719, %v3712, %v3716
        %v3721 = vand.u32 2147483647, %v3664
        %vm3722 = vcmp.eq.f32.partialorder %v3721, 8.507059e+37
        %v3723 = vand.u32 %v3664, 2147483648
        %v3724 = vor.u32 1.1754944e-38, %v3723
        %v3725 = vsel %vm3722, %v3724, %v3720
        %v3726 = vmul.f32 1.0, %v3725
        %v3727 = vrcp.pop %v3665
        %v3728 = vmul.f32 %v3665, %v3727
        %v3729 = vsub.f32 1.0, %v3728
        %v3730 = vmul.f32 %v3727, %v3729
        %v3731 = vadd.f32 %v3727, %v3730
        %vm3732 = vweird.f32 %v3665
        %vm3733 = vweird.f32 %v3727
        %vm3734 = vmor %vm3732, %vm3733
        %v3735 = vsel %vm3734, %v3727, %v3731
        %v3736 = vand.u32 2147483647, %v3665
        %vm3737 = vcmp.eq.f32.partialorder %v3736, 8.507059e+37
        %v3738 = vand.u32 %v3665, 2147483648
        %v3739 = vor.u32 1.1754944e-38, %v3738
        %v3740 = vsel %vm3737, %v3739, %v3735
        %v3741 = vmul.f32 1.0, %v3740
        %v3742 = vrcp.pop %v3666
        %v3743 = vmul.f32 %v3666, %v3742
        %v3744 = vsub.f32 1.0, %v3743
        %v3745 = vmul.f32 %v3742, %v3744
        %v3746 = vadd.f32 %v3742, %v3745
        %vm3747 = vweird.f32 %v3666
        %vm3748 = vweird.f32 %v3742
        %vm3749 = vmor %vm3747, %vm3748
        %v3750 = vsel %vm3749, %v3742, %v3746
        %v3751 = vand.u32 2147483647, %v3666
        %vm3752 = vcmp.eq.f32.partialorder %v3751, 8.507059e+37
        %v3753 = vand.u32 %v3666, 2147483648
        %v3754 = vor.u32 1.1754944e-38, %v3753
        %v3755 = vsel %vm3752, %v3754, %v3750
        %v3756 = vmul.f32 1.0, %v3755
        %v3763 = vrot.slane %v3696, 7
        %v3764 = vrot.slane %v3711, 6
        %v3765 = vrot.slane %v3726, 5
        %v3766 = vrot.slane %v3741, 4
        %v3767 = vrot.slane %v3756, 3
        %vm3768 = vcmask 1040384
        %v3769 = vsel %vm3768, %v3681, %v3763
        %vm3770 = vcmask 1041408
        %v3771 = vsel %vm3770, %v3769, %v3764
        %vm3772 = vcmask 1043459
        %v3773 = vsel %vm3772, %v3765, %v3766
        %vm3774 = vcmask 1044483
        %v3775 = vsel %vm3774, %v3773, %v3767
        %vm3776 = vcmask 1042432
        %v3777 = vsel %vm3776, %v3771, %v3775
        %v3779 = vlaneseq
        %vm3780 = vcmp.ge.s32.totalorder %v3779, 0
        %vm3781 = vcmp.lt.s32.totalorder %v3779, 768
        %vm3782 = vmand %vm3780, %vm3781
        %3783 = vst.msk [vmem:[%s300] sm:$0x3f] %vm3782, %v3777
        %s3784 = sand.u32 %s186, 1
        %s3785 = scalar_lea.sflag [#allocation5], %s3784
        %s3786 = sand.u32 %s186, 1
        %s3787 = smul.addr %s3786, 6
        %s3788 = scalar_lea.vmem [#allocation6], %s3787
        // Predicated region
        $region53: #{tpu_custom_call.1} parent=47 // pred_check
          %p3789 = pneg %p196
        $region54: #{tpu_custom_call.1} parent=47 // pred_check_branch
          %3791 = sbr.rel (%p3789) target = $region56
        $region55: #{tpu_custom_call.1} parent=47 // pred_region
          %s3792 = smul.u32 6, %s26
          %3794 = vsyncadd %s3785, 0
          %s3795 = scalar_lea.hbm %s7, %s3792
          %s3797 = sshll.u32 %s3788, 4
          %s3798 = int_to_ptr.vmem [resolvable:$true] %s3797
          %s3799 = sshll.u32 %s3795, 4
          %s3800 = int_to_ptr.hbm [resolvable:$true] %s3799
          %3802 = dma.vmem_to_hbm [thread:$0]  %s3798, 96, %s3800, %s3785
        $region56: #{tpu_custom_call.1} parent=47 // pred_fallthru
          _
      $region48: #{tpu_custom_call.1} parent=5 // pred_fallthru
        _
      %p3803 = scmp.le.s32.totalorder 2, %s21
      // Predicated region
      $region57: #{tpu_custom_call.1} parent=5 // pred_check
        %p3804 = pneg %p3803
      $region58: #{tpu_custom_call.1} parent=5 // pred_check_branch
        %3806 = sbr.rel (%p3804) target = $region60
      $region59: #{tpu_custom_call.1} parent=5 // pred_region
        %s3807 = ssub.s32 %s21, 2
        // Predicated region
        $region61: #{tpu_custom_call.1} parent=59 // pred_check
          %p3808 = pneg %p202
        $region62: #{tpu_custom_call.1} parent=59 // pred_check_branch
          %3810 = sbr.rel (%p3808) target = $region64
        $region63: #{tpu_custom_call.1} parent=59 // pred_region
          %s3811 = sand.u32 %s187, 1
          %s3812 = scalar_lea.sflag [#allocation5], %s3811
          %s3813 = sand.u32 %s187, 1
          %s3814 = smul.addr %s3813, 6
          %s3815 = scalar_lea.vmem [#allocation6], %s3814
          %3817 = dma.done %s3812, 96
        $region64: #{tpu_custom_call.1} parent=59 // pred_fallthru
          _
      $region60: #{tpu_custom_call.1} parent=5 // pred_fallthru
        _
    $region6: #{tpu_custom_call.1} parent=1 // loop_footer
      %s25 = sadd.s32 1, %s21
    $region7: #{tpu_custom_call.1} parent=1 // loop_footer_branch
      %20 = sbr.rel target = $region3
    $region8: #{tpu_custom_call.1} parent=1 // loop_exit
      _
    %3818 = vsyncpa [#allocation4], 1
    %s3819 = scalar_lea.sflag [#allocation4], 1
    %3820 = vsyncpa %s3819, 1
    %3821 = vsyncpa [#allocation5], 1
    %s3822 = scalar_lea.sflag [#allocation5], 1
    %3823 = vsyncpa %s3822, 1

</llo_original>
